<compile_context>
chip_gen: v7x
topology: tpu7x:2x2x1
jax: 0.10.0
libtpu: 0.0.40
codegen_flags: <defaults>
</compile_context>

<pallas_src>
import jax
import jax.numpy as jnp
import numpy as np
from jax import lax
from jax.experimental import pallas as pl
from jax.experimental.pallas import tpu as pltpu

# ----------------------- small, module-consistent config --------------------
B = 2
NUM_STOCKS = 8            # T (frames / stocks)
FEAT_H, FEAT_W = 4, 8     # feature_size == patch_size
T_PATCH = 1
IN_CHANS = 1
EMBED_DIM = 32
DEPTH = 2
NUM_HEADS = 4
DEC_DIM = 16
DEC_DEPTH = 1
DEC_HEADS = 4
MLP_RATIO = 4.0
MASK_RATIO = 0.55
LN_EPS = 1e-6

T_GRID = NUM_STOCKS // T_PATCH            # 8
H_GRID = FEAT_H // FEAT_H                 # 1
W_GRID = FEAT_W // FEAT_W                 # 1
NUM_PATCHES = T_GRID * H_GRID * W_GRID    # 8
PATCH_DIM = T_PATCH * FEAT_H * FEAT_W * IN_CHANS          # 32
T_PRED_PATCH = T_PATCH * NUM_STOCKS // NUM_STOCKS          # 1
PRED_DIM = T_PRED_PATCH * FEAT_H * FEAT_W * IN_CHANS       # 32

LEN_KEEP = int(NUM_PATCHES * (1.0 - MASK_RATIO))   # 3
NE = LEN_KEEP + 1                                  # encoder tokens / batch (4)
ND = NUM_PATCHES + 1                               # decoder tokens / batch (9)
ND_PAD = 12                                        # padded decoder tokens / batch
BNE = B * NE                                       # 8
NDT = B * ND_PAD                                   # 24
NEG_BIG = -1e30

FP = 128                                           # padded feature width (lanes)
HD_E = EMBED_DIM // NUM_HEADS                      # 8
HD_D = DEC_DIM // DEC_HEADS                        # 4
MLP_E = int(EMBED_DIM * MLP_RATIO)                 # 128
MLP_D = int(DEC_DIM * MLP_RATIO)                   # 64

# ----------------------------- slab row offsets ------------------------------
# weight-matrix slab (width 128)
W_PATCH = 0
W_EBLK = FP                                # per enc block: [Wo; W1; W2]
W_DEC_EMB = W_EBLK + DEPTH * 3 * FP
W_DBLK = W_DEC_EMB + FP                    # per dec block: [Wo; W1; W2]
W_PRED1 = W_DBLK + DEC_DEPTH * 3 * FP
W_PRED2 = W_PRED1 + FP
WMAT_ROWS = W_PRED2 + FP

# row-vector slab (width 128)
V_EBLK = 0                                 # 10 rows / enc block
V_ENORM = V_EBLK + DEPTH * 10
V_DEC_EMB_B = V_ENORM + 2
V_DBLK = V_DEC_EMB_B + 1                   # 10 rows / dec block
V_DNORM = V_DBLK + DEC_DEPTH * 10
V_PRED_B = V_DNORM + 2
V_CMASK_E = V_PRED_B + 2
V_CMASK_D = V_CMASK_E + 1
VEC_ROWS = ((V_CMASK_D + 1 + 7) // 8) * 8

# per-forward data slab (width 128)
R_ENC_IN = 0
R_ENC_ADD = R_ENC_IN + BNE
R_EBIAS = R_ENC_ADD + BNE
R_EMASK = R_EBIAS + NUM_HEADS * BNE
R_ECOLL = R_EMASK + NUM_HEADS * BNE
R_SEL = R_ECOLL + BNE
R_DADD = R_SEL + NDT
R_DBIAS = R_DADD + NDT
R_DMASK = R_DBIAS + DEC_HEADS * NDT
R_DCOLL = R_DMASK + DEC_HEADS * NDT
R_TGT = R_DCOLL + NDT
R_LW = R_TGT + NDT
DATA_ROWS = R_LW + NDT


# --------------------------- static attention constants ----------------------
def _head_mask(n_heads, n_tok, head_dim):
    r = np.arange(n_heads * n_tok)[:, None] // n_tok
    c = np.arange(FP)[None, :]
    return ((c >= r * head_dim) & (c < (r + 1) * head_dim)).astype(np.float32)


def _collapse(n_heads, n_tok):
    i = np.arange(n_tok)[:, None]
    j = np.arange(n_heads * n_tok)[None, :]
    return ((j % n_tok) == i).astype(np.float32)


def _attn_bias(n_heads, groups):
    g = np.asarray(groups)
    b = np.where(g[:, None] == g[None, :], 0.0, NEG_BIG).astype(np.float32)
    return np.tile(b, (n_heads, 1))


ENC_GROUPS = np.repeat(np.arange(B), NE)
DEC_GROUPS = np.concatenate(
    [np.concatenate([np.full(ND, b), np.full(ND_PAD - ND, B + b)]) for b in range(B)])

ENC_ATTN_BIAS = _attn_bias(NUM_HEADS, ENC_GROUPS)     # (H*BNE, BNE)
ENC_HEAD_MASK = _head_mask(NUM_HEADS, BNE, HD_E)      # (H*BNE, 128)
ENC_COLLAPSE = _collapse(NUM_HEADS, BNE)              # (BNE, H*BNE)
DEC_ATTN_BIAS = _attn_bias(DEC_HEADS, DEC_GROUPS)     # (H*NDT, NDT)
DEC_HEAD_MASK = _head_mask(DEC_HEADS, NDT, HD_D)      # (H*NDT, 128)
DEC_COLLAPSE = _collapse(DEC_HEADS, NDT)              # (NDT, H*NDT)


# ----------------------------- kernel helpers --------------------------------
def _vmem_spec():
    return pl.BlockSpec(memory_space=pltpu.MemorySpace.VMEM)


def _gelu(x):
    # exact (erf-based) GELU, matching torch.nn.GELU default
    return 0.5 * x * (1.0 + lax.erf(x * 0.7071067811865476))


def _layernorm(x, w, b, cmask, inv_c):
    # feature dims are zero-padded to 128; divide by the real width and keep
    # padded columns exactly zero via cmask / zero-padded w, b.
    mu = jnp.sum(x, axis=-1, keepdims=True) * inv_c
    xc = (x - mu) * cmask
    var = jnp.sum(xc * xc, axis=-1, keepdims=True) * inv_c
    return xc * lax.rsqrt(var + LN_EPS) * w + b


def _block(x2, n_heads, inv_c, cmask, wqkv, wo, w1, w2, vb,
           attn_bias, head_mask, collapse):
    """Pre-norm transformer block on (N, 128) zero-padded tokens.

    Multi-head attention via q-row-expansion: q is replicated per head and
    masked to the head's columns so every op is a plain 2D matmul and the
    softmax is a standard full-row softmax; per-batch (and pad-row) isolation
    comes from the additive score bias.
    """
    ln1w, ln1b, bq, bk, bv, bo, ln2w, ln2b, b1, b2 = vb

    xn = _layernorm(x2, ln1w, ln1b, cmask, inv_c)
    qkv = jnp.dot(xn, wqkv, preferred_element_type=jnp.float32)        # (N, 3*128)
    q = qkv[:, 0:FP] + bq                                              # scale folded in
    k = qkv[:, FP:2 * FP] + bk
    v = qkv[:, 2 * FP:3 * FP] + bv

    q_exp = jnp.concatenate([q] * n_heads, axis=0) * head_mask         # (H*N, 128)
    s = lax.dot_general(q_exp, k, (((1,), (1,)), ((), ())),
                        preferred_element_type=jnp.float32) + attn_bias  # (H*N, N)
    s = s - jnp.max(s, axis=-1, keepdims=True)
    p = jnp.exp(s)
    p = p / jnp.sum(p, axis=-1, keepdims=True)                         # exact softmax

    o = jnp.dot(p, v, preferred_element_type=jnp.float32)              # (H*N, 128)
    attn = jnp.dot(collapse, o * head_mask,
                   preferred_element_type=jnp.float32)                 # (N, 128)
    x2 = x2 + jnp.dot(attn, wo, preferred_element_type=jnp.float32) + bo

    xn2 = _layernorm(x2, ln2w, ln2b, cmask, inv_c)
    hid = _gelu(jnp.dot(xn2, w1, preferred_element_type=jnp.float32) + b1)
    return x2 + jnp.dot(hid, w2, preferred_element_type=jnp.float32) + b2


# ------------------------------ the fused kernel ------------------------------
def mae_fused_kernel(wqkv_ref, wmat_ref, vec_ref, data_ref, loss_ref, pred_ref):
    def vrow(i):
        return vec_ref[i:i + 1, :]

    cmask_e = vrow(V_CMASK_E)
    cmask_d = vrow(V_CMASK_D)

    # ---------------- encoder: patch embed + precomputed cls/pos rows ---------
    enc_in = data_ref[R_ENC_IN:R_ENC_IN + BNE, :]
    enc_add = data_ref[R_ENC_ADD:R_ENC_ADD + BNE, :]
    x2 = jnp.dot(enc_in, wmat_ref[W_PATCH:W_PATCH + FP, :],
                 preferred_element_type=jnp.float32) + enc_add          # (BNE, 128)

    e_bias = data_ref[R_EBIAS:R_EBIAS + NUM_HEADS * BNE, 0:BNE]
    e_hmask = data_ref[R_EMASK:R_EMASK + NUM_HEADS * BNE, :]
    e_coll = data_ref[R_ECOLL:R_ECOLL + BNE, 0:NUM_HEADS * BNE]

    for d in range(DEPTH):
        v0 = V_EBLK + d * 10
        w0 = W_EBLK + d * 3 * FP
        vb = [vrow(v0 + i) for i in range(10)]
        x2 = _block(x2, NUM_HEADS, 1.0 / EMBED_DIM, cmask_e,
                    wqkv_ref[d * FP:(d + 1) * FP, :],
                    wmat_ref[w0:w0 + FP, :],
                    wmat_ref[w0 + FP:w0 + 2 * FP, :],
                    wmat_ref[w0 + 2 * FP:w0 + 3 * FP, :],
                    vb, e_bias, e_hmask, e_coll)

    x2 = _layernorm(x2, vrow(V_ENORM), vrow(V_ENORM + 1), cmask_e, 1.0 / EMBED_DIM)

    # -------- decoder embed + (unshuffle + cls + mask-token + pos) assembly ----
    xdf = jnp.dot(x2, wmat_ref[W_DEC_EMB:W_DEC_EMB + FP, :],
                  preferred_element_type=jnp.float32) + vrow(V_DEC_EMB_B)  # (BNE, 128)
    sel = data_ref[R_SEL:R_SEL + NDT, 0:BNE]
    y2 = jnp.dot(sel, xdf, preferred_element_type=jnp.float32) \
        + data_ref[R_DADD:R_DADD + NDT, :]                               # (NDT, 128)

    d_bias = data_ref[R_DBIAS:R_DBIAS + DEC_HEADS * NDT, 0:NDT]
    d_hmask = data_ref[R_DMASK:R_DMASK + DEC_HEADS * NDT, :]
    d_coll = data_ref[R_DCOLL:R_DCOLL + NDT, 0:DEC_HEADS * NDT]

    for d in range(DEC_DEPTH):
        v0 = V_DBLK + d * 10
        w0 = W_DBLK + d * 3 * FP
        vb = [vrow(v0 + i) for i in range(10)]
        y2 = _block(y2, DEC_HEADS, 1.0 / DEC_DIM, cmask_d,
                    wqkv_ref[(DEPTH + d) * FP:(DEPTH + d + 1) * FP, :],
                    wmat_ref[w0:w0 + FP, :],
                    wmat_ref[w0 + FP:w0 + 2 * FP, :],
                    wmat_ref[w0 + 2 * FP:w0 + 3 * FP, :],
                    vb, d_bias, d_hmask, d_coll)

    # TODO(synk): reference calls self.decoder_norm which __init__ never defines;
    # mapped to LayerNorm(decoder_embed_dim) here.
    y2 = _layernorm(y2, vrow(V_DNORM), vrow(V_DNORM + 1), cmask_d, 1.0 / DEC_DIM)

    # ---------------- prediction head (Linear -> GELU -> Linear) --------------
    hid = _gelu(jnp.dot(y2, wmat_ref[W_PRED1:W_PRED1 + FP, :],
                        preferred_element_type=jnp.float32) + vrow(V_PRED_B))
    pr = jnp.dot(hid, wmat_ref[W_PRED2:W_PRED2 + FP, :],
                 preferred_element_type=jnp.float32) + vrow(V_PRED_B + 1)  # (NDT, 128)
    pred_ref[...] = pr                                                     # lane-dense store

    # ---------------- masked MSE loss ------------------------------------------
    diff = pr - data_ref[R_TGT:R_TGT + NDT, :]
    per_tok = jnp.sum(diff * diff, axis=-1, keepdims=True) * (1.0 / PRED_DIM)  # (NDT, 1)
    lw = data_ref[R_LW:R_LW + NDT, 0:1]                                        # (NDT, 1)
    loss_ref[...] = jnp.sum(per_tok * lw, axis=0, keepdims=True)               # (1, 1)


# ------------------------------ parameter init --------------------------------
def _w(k, shape):
    return jax.random.normal(k, shape, jnp.float32) * 0.02


def init_block_params(key, dim, mlp_hidden):
    ks = jax.random.split(key, 6)
    z = lambda n: jnp.zeros((1, n), jnp.float32)
    return dict(
        ln1_w=jnp.ones((1, dim), jnp.float32), ln1_b=z(dim),
        wq=_w(ks[0], (dim, dim)), bq=z(dim),
        wk=_w(ks[1], (dim, dim)), bk=z(dim),
        wv=_w(ks[2], (dim, dim)), bv=z(dim),
        wo=_w(ks[3], (dim, dim)), bo=z(dim),
        ln2_w=jnp.ones((1, dim), jnp.float32), ln2_b=z(dim),
        w1=_w(ks[4], (dim, mlp_hidden)), b1=z(mlp_hidden),
        w2=_w(ks[5], (mlp_hidden, dim)), b2=z(dim),
    )


def init_params(key):
    ks = jax.random.split(key, 15)
    return dict(
        patch_w=_w(ks[0], (PATCH_DIM, EMBED_DIM)),
        patch_b=jnp.zeros((1, EMBED_DIM), jnp.float32),
        cls_token=_w(ks[1], (1, 1, EMBED_DIM)),
        pos_spatial=_w(ks[2], (1, H_GRID * W_GRID, EMBED_DIM)),
        pos_temporal=_w(ks[3], (1, T_GRID, EMBED_DIM)),
        pos_class=_w(ks[4], (1, 1, EMBED_DIM)),
        norm_w=jnp.ones((1, EMBED_DIM), jnp.float32),
        norm_b=jnp.zeros((1, EMBED_DIM), jnp.float32),
        dec_embed_w=_w(ks[5], (EMBED_DIM, DEC_DIM)),
        dec_embed_b=jnp.zeros((1, DEC_DIM), jnp.float32),
        mask_token=_w(ks[6], (1, 1, DEC_DIM)),
        dec_cls_token=_w(ks[7], (1, 1, DEC_DIM)),
        dec_pos_spatial=_w(ks[8], (1, H_GRID * W_GRID, DEC_DIM)),
        dec_pos_temporal=_w(ks[9], (1, T_GRID, DEC_DIM)),
        dec_pos_class=_w(ks[10], (1, 1, DEC_DIM)),
        dec_norm_w=jnp.ones((1, DEC_DIM), jnp.float32),
        dec_norm_b=jnp.zeros((1, DEC_DIM), jnp.float32),
        pred_w1=_w(ks[11], (DEC_DIM, PRED_DIM)),
        pred_b1=jnp.zeros((1, PRED_DIM), jnp.float32),
        pred_w2=_w(ks[12], (PRED_DIM, PRED_DIM)),
        pred_b2=jnp.zeros((1, PRED_DIM), jnp.float32),
        blocks=[init_block_params(jax.random.fold_in(ks[13], i), EMBED_DIM, MLP_E)
                for i in range(DEPTH)],
        dec_blocks=[init_block_params(jax.random.fold_in(ks[14], i), DEC_DIM, MLP_D)
                    for i in range(DEC_DEPTH)],
    )


# --------------------- host-side (JAX) packing into slabs ---------------------
def _pad_mat(a):
    out = jnp.zeros((FP, FP), jnp.float32)
    return out.at[:a.shape[0], :a.shape[1]].set(a)


def _pad_vec(a):
    a = jnp.asarray(a, jnp.float32).reshape(1, -1)
    out = jnp.zeros((1, FP), jnp.float32)
    return out.at[:, :a.shape[1]].set(a)


def _pad_cols(a):
    a = jnp.asarray(a, jnp.float32)
    r, c = a.shape
    if c == FP:
        return a
    return jnp.concatenate([a, jnp.zeros((r, FP - c), jnp.float32)], axis=1)


def _block_vec_rows(bl, scale):
    return [_pad_vec(bl['ln1_w']), _pad_vec(bl['ln1_b']),
            _pad_vec(bl['bq'] * scale), _pad_vec(bl['bk']), _pad_vec(bl['bv']),
            _pad_vec(bl['bo']), _pad_vec(bl['ln2_w']), _pad_vec(bl['ln2_b']),
            _pad_vec(bl['b1']), _pad_vec(bl['b2'])]


def pack_weights(p):
    scale_e = HD_E ** (-0.5)
    scale_d = HD_D ** (-0.5)

    # fused QKV slab (width 3*128), qk scale folded into Wq / bq
    qkv_rows = []
    for bl in p['blocks']:
        qkv_rows.append(jnp.concatenate(
            [_pad_mat(bl['wq'] * scale_e), _pad_mat(bl['wk']), _pad_mat(bl['wv'])], axis=1))
    for bl in p['dec_blocks']:
        qkv_rows.append(jnp.concatenate(
            [_pad_mat(bl['wq'] * scale_d), _pad_mat(bl['wk']), _pad_mat(bl['wv'])], axis=1))
    wqkv = jnp.concatenate(qkv_rows, axis=0)

    # all other weight matrices (width 128)
    mats = [_pad_mat(p['patch_w'])]
    for bl in p['blocks']:
        mats += [_pad_mat(bl['wo']), _pad_mat(bl['w1']), _pad_mat(bl['w2'])]
    mats.append(_pad_mat(p['dec_embed_w']))
    for bl in p['dec_blocks']:
        mats += [_pad_mat(bl['wo']), _pad_mat(bl['w1']), _pad_mat(bl['w2'])]
    mats += [_pad_mat(p['pred_w1']), _pad_mat(p['pred_w2'])]
    wmat = jnp.concatenate(mats, axis=0)

    # all row vectors (width 128)
    rows = []
    for bl in p['blocks']:
        rows += _block_vec_rows(bl, scale_e)
    rows += [_pad_vec(p['norm_w']), _pad_vec(p['norm_b']), _pad_vec(p['dec_embed_b'])]
    for bl in p['dec_blocks']:
        rows += _block_vec_rows(bl, scale_d)
    rows += [_pad_vec(p['dec_norm_w']), _pad_vec(p['dec_norm_b']),
             _pad_vec(p['pred_b1']), _pad_vec(p['pred_b2'])]
    cm_e = jnp.zeros((1, FP), jnp.float32).at[:, :EMBED_DIM].set(1.0)
    cm_d = jnp.zeros((1, FP), jnp.float32).at[:, :DEC_DIM].set(1.0)
    rows += [cm_e, cm_d]
    vecs = jnp.concatenate(rows, axis=0)
    vecs = jnp.concatenate(
        [vecs, jnp.zeros((VEC_ROWS - vecs.shape[0], FP), jnp.float32)], axis=0)

    return wqkv, wmat, vecs


# ------------------------------ forward pass ----------------------------------
def patchify(imgs, p1, p2, u):
    """imgs: (N, C, T, H, W) -> (N, t*h*w, u*p1*p2*C), same einsum as torch."""
    N, C, T, H, W = imgs.shape
    t, h, w = T // u, H // p1, W // p2
    xx = imgs.reshape(N, C, t, u, h, p1, w, p2)
    xx = jnp.transpose(xx, (0, 2, 4, 6, 3, 5, 7, 1))   # nctuhpwq -> nthwupqc
    return xx.reshape(N, t * h * w, u * p1 * p2 * C)


def mae_forward(x, p, mask_key):
    if x.ndim == 4:
        x = x[:, None]                                # (B, 1, T, H, W)
    N = x.shape[0]
    L, E, D, K = NUM_PATCHES, EMBED_DIM, DEC_DIM, LEN_KEEP

    # --------- plain-JAX glue: patchify + random-masking bookkeeping ----------
    patches = patchify(x, FEAT_H, FEAT_W, T_PATCH)                     # (B, L, 32)
    noise = jax.random.uniform(mask_key, (N, L))
    ids_shuffle = jnp.argsort(noise, axis=1)
    ids_keep = jnp.sort(ids_shuffle[:, :K], axis=1)                    # (B, K)
    keep_oh = (ids_keep[:, :, None] ==
               jnp.arange(L)[None, None, :]).astype(jnp.float32)       # (B, K, L)
    is_kept = jnp.sum(keep_oh, axis=1)                                 # (B, L)
    mask = 1.0 - is_kept                                               # 1 = removed

    x_keep = jnp.take_along_axis(patches, ids_keep[:, :, None], axis=1)  # (B, K, 32)

    pos = (jnp.tile(p['pos_spatial'], (1, T_GRID, 1))
           + jnp.repeat(p['pos_temporal'], H_GRID, axis=1))            # (1, L, E)
    pos = jnp.broadcast_to(pos, (N, L, E))
    pos_keep = jnp.take_along_axis(pos, ids_keep[:, :, None], axis=1)  # (B, K, E)

    enc_in = jnp.zeros((BNE, FP), jnp.float32)
    enc_add = jnp.zeros((BNE, FP), jnp.float32)
    cls_row = (p['cls_token'] + p['pos_class']).reshape(E)
    for b in range(B):
        enc_in = enc_in.at[b * NE + 1:b * NE + 1 + K, :PATCH_DIM].set(x_keep[b])
        enc_add = enc_add.at[b * NE, :E].set(cls_row)
        enc_add = enc_add.at[b * NE + 1:b * NE + 1 + K, :E].set(
            pos_keep[b] + p['patch_b'].reshape(1, E))

    dpos = (jnp.tile(p['dec_pos_spatial'], (1, T_GRID, 1))
            + jnp.repeat(p['dec_pos_temporal'], H_GRID * W_GRID, axis=1))   # (1, L, D)
    sel = jnp.zeros((NDT, FP), jnp.float32)
    dec_add = jnp.zeros((NDT, FP), jnp.float32)
    dcls_row = (p['dec_cls_token'] + p['dec_pos_class']).reshape(D)
    mt = p['mask_token'].reshape(1, D)
    for b in range(B):
        sel = sel.at[b * ND_PAD + 1:b * ND_PAD + 1 + L,
                     b * NE + 1:b * NE + 1 + K].set(jnp.transpose(keep_oh[b]))
        dec_add = dec_add.at[b * ND_PAD, :D].set(dcls_row)
        dec_add = dec_add.at[b * ND_PAD + 1:b * ND_PAD + 1 + L, :D].set(
            dpos[0] + mask[b][:, None] * mt)

    idx = jnp.linspace(0.0, x.shape[2] - 1, NUM_STOCKS).astype(jnp.int32)
    imgs = jnp.take(x, idx, axis=2)
    target = patchify(imgs, FEAT_H, FEAT_W, T_PRED_PATCH)              # (B, L, 32)
    tgt_rows = jnp.zeros((NDT, FP), jnp.float32)
    lw = jnp.zeros((NDT, FP), jnp.float32)
    inv_msum = 1.0 / jnp.sum(mask)
    for b in range(B):
        tgt_rows = tgt_rows.at[b * ND_PAD + 1:b * ND_PAD + 1 + L, :PRED_DIM].set(target[b])
        lw = lw.at[b * ND_PAD + 1:b * ND_PAD + 1 + L, 0].set(mask[b] * inv_msum)

    data = jnp.concatenate([
        enc_in, enc_add,
        _pad_cols(ENC_ATTN_BIAS), _pad_cols(ENC_HEAD_MASK), _pad_cols(ENC_COLLAPSE),
        sel, dec_add,
        _pad_cols(DEC_ATTN_BIAS), _pad_cols(DEC_HEAD_MASK), _pad_cols(DEC_COLLAPSE),
        tgt_rows, lw,
    ], axis=0)
    assert data.shape == (DATA_ROWS, FP)

    wqkv, wmat, vecs = pack_weights(p)

    # --------- single fused Pallas kernel: 4 packed inputs, 2 outputs ---------
    loss2, pred_raw = pl.pallas_call(
        mae_fused_kernel,
        out_shape=(jax.ShapeDtypeStruct((1, 1), jnp.float32),
                   jax.ShapeDtypeStruct((NDT, FP), jnp.float32)),
        in_specs=[_vmem_spec() for _ in range(4)],
        out_specs=(_vmem_spec(), _vmem_spec()),
    )(wqkv, wmat, vecs, data)

    pred = pred_raw.reshape(B, ND_PAD, FP)[:, 1:1 + NUM_PATCHES, :PRED_DIM]
    return loss2[0, 0], pred, mask


# ------------------------------------ main ------------------------------------
if __name__ == "__main__":
    key = jax.random.PRNGKey(0)
    kx, kp, km = jax.random.split(key, 3)
    x = jax.random.normal(kx, (B, NUM_STOCKS, FEAT_H, FEAT_W), jnp.float32)
    params = init_params(kp)
    fwd = jax.jit(mae_forward)
    loss, pred, mask = fwd(x, params, km)
    jax.block_until_ready((loss, pred, mask))
    assert pred.shape == (B, NUM_PATCHES, PRED_DIM)
    assert mask.shape == (B, NUM_PATCHES)
    assert loss.shape == ()
    assert bool(jnp.isfinite(loss))
    print("KERNEL_OK")
</pallas_src>

<mosaic_0001>
module attributes {stable_mosaic.version = 11 : i64} {
  func.func @mae_fused_kernel(%arg0: memref<384x384xf32, #tpu.memory_space<vmem>>, %arg1: memref<1664x128xf32, #tpu.memory_space<vmem>>, %arg2: memref<40x128xf32, #tpu.memory_space<vmem>>, %arg3: memref<400x128xf32, #tpu.memory_space<vmem>>, %arg4: memref<1x1xf32, #tpu.memory_space<vmem>>, %arg5: memref<24x128xf32, #tpu.memory_space<vmem>>) attributes {dimension_semantics = [], scalar_prefetch = 0 : i64, scratch_operands = 0 : i64, tpu.core_type = #tpu.core_type<tc>} {
    %c37 = arith.constant 37 : index
    %c0 = arith.constant 0 : index
    %0 = vector.load %arg2[%c37, %c0] : memref<40x128xf32, #tpu.memory_space<vmem>>, vector<1x128xf32>
    %c38 = arith.constant 38 : index
    %c0_0 = arith.constant 0 : index
    %1 = vector.load %arg2[%c38, %c0_0] : memref<40x128xf32, #tpu.memory_space<vmem>>, vector<1x128xf32>
    %c0_1 = arith.constant 0 : index
    %c0_2 = arith.constant 0 : index
    %2 = vector.load %arg3[%c0_1, %c0_2] : memref<400x128xf32, #tpu.memory_space<vmem>>, vector<8x128xf32>
    %c8 = arith.constant 8 : index
    %c0_3 = arith.constant 0 : index
    %3 = vector.load %arg3[%c8, %c0_3] : memref<400x128xf32, #tpu.memory_space<vmem>>, vector<8x128xf32>
    %c0_4 = arith.constant 0 : index
    %c0_5 = arith.constant 0 : index
    %4 = vector.load %arg1[%c0_4, %c0_5] : memref<1664x128xf32, #tpu.memory_space<vmem>>, vector<128x128xf32>
    %cst = arith.constant dense<0.000000e+00> : vector<8x128xf32>
    %5 = tpu.matmul %2, %4, %cst {dimension_numbers = #tpu.dot_dimension_numbers<[1], [0], [0], [1], [0, 0, 1, 1], [], []>} : vector<8x128xf32>, vector<128x128xf32>, vector<8x128xf32> -> vector<8x128xf32>
    %6 = arith.addf %5, %3 : vector<8x128xf32>
    %c16 = arith.constant 16 : index
    %c0_6 = arith.constant 0 : index
    %7 = vector.load %arg3[%c16, %c0_6] : memref<400x128xf32, #tpu.memory_space<vmem>>, vector<32x8xf32>
    %c48 = arith.constant 48 : index
    %c0_7 = arith.constant 0 : index
    %8 = vector.load %arg3[%c48, %c0_7] : memref<400x128xf32, #tpu.memory_space<vmem>>, vector<32x128xf32>
    %c80 = arith.constant 80 : index
    %c0_8 = arith.constant 0 : index
    %9 = vector.load %arg3[%c80, %c0_8] : memref<400x128xf32, #tpu.memory_space<vmem>>, vector<8x32xf32>
    %c0_9 = arith.constant 0 : index
    %c0_10 = arith.constant 0 : index
    %10 = vector.load %arg2[%c0_9, %c0_10] : memref<40x128xf32, #tpu.memory_space<vmem>>, vector<1x128xf32>
    %c1 = arith.constant 1 : index
    %c0_11 = arith.constant 0 : index
    %11 = vector.load %arg2[%c1, %c0_11] : memref<40x128xf32, #tpu.memory_space<vmem>>, vector<1x128xf32>
    %c2 = arith.constant 2 : index
    %c0_12 = arith.constant 0 : index
    %12 = vector.load %arg2[%c2, %c0_12] : memref<40x128xf32, #tpu.memory_space<vmem>>, vector<1x128xf32>
    %c3 = arith.constant 3 : index
    %c0_13 = arith.constant 0 : index
    %13 = vector.load %arg2[%c3, %c0_13] : memref<40x128xf32, #tpu.memory_space<vmem>>, vector<1x128xf32>
    %c4 = arith.constant 4 : index
    %c0_14 = arith.constant 0 : index
    %14 = vector.load %arg2[%c4, %c0_14] : memref<40x128xf32, #tpu.memory_space<vmem>>, vector<1x128xf32>
    %c5 = arith.constant 5 : index
    %c0_15 = arith.constant 0 : index
    %15 = vector.load %arg2[%c5, %c0_15] : memref<40x128xf32, #tpu.memory_space<vmem>>, vector<1x128xf32>
    %c6 = arith.constant 6 : index
    %c0_16 = arith.constant 0 : index
    %16 = vector.load %arg2[%c6, %c0_16] : memref<40x128xf32, #tpu.memory_space<vmem>>, vector<1x128xf32>
    %c7 = arith.constant 7 : index
    %c0_17 = arith.constant 0 : index
    %17 = vector.load %arg2[%c7, %c0_17] : memref<40x128xf32, #tpu.memory_space<vmem>>, vector<1x128xf32>
    %c8_18 = arith.constant 8 : index
    %c0_19 = arith.constant 0 : index
    %18 = vector.load %arg2[%c8_18, %c0_19] : memref<40x128xf32, #tpu.memory_space<vmem>>, vector<1x128xf32>
    %c9 = arith.constant 9 : index
    %c0_20 = arith.constant 0 : index
    %19 = vector.load %arg2[%c9, %c0_20] : memref<40x128xf32, #tpu.memory_space<vmem>>, vector<1x128xf32>
    %c0_21 = arith.constant 0 : index
    %c0_22 = arith.constant 0 : index
    %20 = vector.load %arg0[%c0_21, %c0_22] : memref<384x384xf32, #tpu.memory_space<vmem>>, vector<128x384xf32>
    %c128 = arith.constant 128 : index
    %c0_23 = arith.constant 0 : index
    %21 = vector.load %arg1[%c128, %c0_23] : memref<1664x128xf32, #tpu.memory_space<vmem>>, vector<128x128xf32>
    %c256 = arith.constant 256 : index
    %c0_24 = arith.constant 0 : index
    %22 = vector.load %arg1[%c256, %c0_24] : memref<1664x128xf32, #tpu.memory_space<vmem>>, vector<128x128xf32>
    %c384 = arith.constant 384 : index
    %c0_25 = arith.constant 0 : index
    %23 = vector.load %arg1[%c384, %c0_25] : memref<1664x128xf32, #tpu.memory_space<vmem>>, vector<128x128xf32>
    %cst_26 = arith.constant dense<0.000000e+00> : vector<8xf32>
    %24 = vector.multi_reduction <add>, %6, %cst_26 [1] : vector<8x128xf32> to vector<8xf32>
    %25 = vector.shape_cast %24 : vector<8xf32> to vector<8x1xf32>
    %cst_27 = arith.constant 3.125000e-02 : f32
    %26 = vector.broadcast %cst_27 : f32 to vector<8x1xf32>
    %27 = arith.mulf %25, %26 : vector<8x1xf32>
    %28 = vector.broadcast %27 : vector<8x1xf32> to vector<8x128xf32>
    %29 = arith.subf %6, %28 : vector<8x128xf32>
    %30 = vector.broadcast %0 : vector<1x128xf32> to vector<8x128xf32>
    %31 = arith.mulf %29, %30 : vector<8x128xf32>
    %32 = arith.mulf %31, %31 : vector<8x128xf32>
    %cst_28 = arith.constant dense<0.000000e+00> : vector<8xf32>
    %33 = vector.multi_reduction <add>, %32, %cst_28 [1] : vector<8x128xf32> to vector<8xf32>
    %34 = vector.shape_cast %33 : vector<8xf32> to vector<8x1xf32>
    %cst_29 = arith.constant 3.125000e-02 : f32
    %35 = vector.broadcast %cst_29 : f32 to vector<8x1xf32>
    %36 = arith.mulf %34, %35 : vector<8x1xf32>
    %cst_30 = arith.constant 9.99999997E-7 : f32
    %37 = vector.broadcast %cst_30 : f32 to vector<8x1xf32>
    %38 = arith.addf %36, %37 : vector<8x1xf32>
    %39 = math.rsqrt %38 : vector<8x1xf32>
    %40 = vector.broadcast %39 : vector<8x1xf32> to vector<8x128xf32>
    %41 = arith.mulf %31, %40 : vector<8x128xf32>
    %42 = vector.broadcast %10 : vector<1x128xf32> to vector<8x128xf32>
    %43 = arith.mulf %41, %42 : vector<8x128xf32>
    %44 = vector.broadcast %11 : vector<1x128xf32> to vector<8x128xf32>
    %45 = arith.addf %43, %44 : vector<8x128xf32>
    %cst_31 = arith.constant dense<0.000000e+00> : vector<8x384xf32>
    %46 = tpu.matmul %45, %20, %cst_31 {dimension_numbers = #tpu.dot_dimension_numbers<[1], [0], [0], [1], [0, 0, 1, 1], [], []>} : vector<8x128xf32>, vector<128x384xf32>, vector<8x384xf32> -> vector<8x384xf32>
    %47 = vector.extract_strided_slice %46 {offsets = [0, 0], sizes = [8, 128], strides = [1, 1]} : vector<8x384xf32> to vector<8x128xf32>
    %48 = vector.broadcast %12 : vector<1x128xf32> to vector<8x128xf32>
    %49 = arith.addf %47, %48 : vector<8x128xf32>
    %50 = vector.extract_strided_slice %46 {offsets = [0, 128], sizes = [8, 128], strides = [1, 1]} : vector<8x384xf32> to vector<8x128xf32>
    %51 = vector.broadcast %13 : vector<1x128xf32> to vector<8x128xf32>
    %52 = arith.addf %50, %51 : vector<8x128xf32>
    %53 = vector.extract_strided_slice %46 {offsets = [0, 256], sizes = [8, 128], strides = [1, 1]} : vector<8x384xf32> to vector<8x128xf32>
    %54 = vector.broadcast %14 : vector<1x128xf32> to vector<8x128xf32>
    %55 = arith.addf %53, %54 : vector<8x128xf32>
    %56 = tpu.concatenate %49, %49, %49, %49 in 0 : vector<8x128xf32>, vector<8x128xf32>, vector<8x128xf32>, vector<8x128xf32> -> vector<32x128xf32>
    %57 = arith.mulf %56, %8 : vector<32x128xf32>
    %cst_32 = arith.constant dense<0.000000e+00> : vector<32x8xf32>
    %58 = tpu.matmul %57, %52, %cst_32 {dimension_numbers = #tpu.dot_dimension_numbers<[1], [1], [0], [0], [0, 0, 1, 0], [], []>} : vector<32x128xf32>, vector<8x128xf32>, vector<32x8xf32> -> vector<32x8xf32>
    %59 = arith.addf %58, %7 : vector<32x8xf32>
    %cst_33 = arith.constant dense<0xFF800000> : vector<32xf32>
    %60 = vector.multi_reduction <maximumf>, %59, %cst_33 [1] : vector<32x8xf32> to vector<32xf32>
    %61 = vector.shape_cast %60 : vector<32xf32> to vector<32x1xf32>
    %62 = vector.broadcast %61 : vector<32x1xf32> to vector<32x8xf32>
    %63 = arith.subf %59, %62 : vector<32x8xf32>
    %64 = math.exp %63 : vector<32x8xf32>
    %cst_34 = arith.constant dense<0.000000e+00> : vector<32xf32>
    %65 = vector.multi_reduction <add>, %64, %cst_34 [1] : vector<32x8xf32> to vector<32xf32>
    %66 = vector.shape_cast %65 : vector<32xf32> to vector<32x1xf32>
    %67 = vector.broadcast %66 : vector<32x1xf32> to vector<32x8xf32>
    %68 = arith.divf %64, %67 : vector<32x8xf32>
    %cst_35 = arith.constant dense<0.000000e+00> : vector<32x128xf32>
    %69 = tpu.matmul %68, %55, %cst_35 {dimension_numbers = #tpu.dot_dimension_numbers<[1], [0], [0], [1], [0, 0, 1, 1], [], []>} : vector<32x8xf32>, vector<8x128xf32>, vector<32x128xf32> -> vector<32x128xf32>
    %70 = arith.mulf %69, %8 : vector<32x128xf32>
    %cst_36 = arith.constant dense<0.000000e+00> : vector<8x128xf32>
    %71 = tpu.matmul %9, %70, %cst_36 {dimension_numbers = #tpu.dot_dimension_numbers<[1], [0], [0], [1], [0, 0, 1, 1], [], []>} : vector<8x32xf32>, vector<32x128xf32>, vector<8x128xf32> -> vector<8x128xf32>
    %cst_37 = arith.constant dense<0.000000e+00> : vector<8x128xf32>
    %72 = tpu.matmul %71, %21, %cst_37 {dimension_numbers = #tpu.dot_dimension_numbers<[1], [0], [0], [1], [0, 0, 1, 1], [], []>} : vector<8x128xf32>, vector<128x128xf32>, vector<8x128xf32> -> vector<8x128xf32>
    %73 = arith.addf %6, %72 : vector<8x128xf32>
    %74 = vector.broadcast %15 : vector<1x128xf32> to vector<8x128xf32>
    %75 = arith.addf %73, %74 : vector<8x128xf32>
    %cst_38 = arith.constant dense<0.000000e+00> : vector<8xf32>
    %76 = vector.multi_reduction <add>, %75, %cst_38 [1] : vector<8x128xf32> to vector<8xf32>
    %77 = vector.shape_cast %76 : vector<8xf32> to vector<8x1xf32>
    %cst_39 = arith.constant 3.125000e-02 : f32
    %78 = vector.broadcast %cst_39 : f32 to vector<8x1xf32>
    %79 = arith.mulf %77, %78 : vector<8x1xf32>
    %80 = vector.broadcast %79 : vector<8x1xf32> to vector<8x128xf32>
    %81 = arith.subf %75, %80 : vector<8x128xf32>
    %82 = vector.broadcast %0 : vector<1x128xf32> to vector<8x128xf32>
    %83 = arith.mulf %81, %82 : vector<8x128xf32>
    %84 = arith.mulf %83, %83 : vector<8x128xf32>
    %cst_40 = arith.constant dense<0.000000e+00> : vector<8xf32>
    %85 = vector.multi_reduction <add>, %84, %cst_40 [1] : vector<8x128xf32> to vector<8xf32>
    %86 = vector.shape_cast %85 : vector<8xf32> to vector<8x1xf32>
    %cst_41 = arith.constant 3.125000e-02 : f32
    %87 = vector.broadcast %cst_41 : f32 to vector<8x1xf32>
    %88 = arith.mulf %86, %87 : vector<8x1xf32>
    %cst_42 = arith.constant 9.99999997E-7 : f32
    %89 = vector.broadcast %cst_42 : f32 to vector<8x1xf32>
    %90 = arith.addf %88, %89 : vector<8x1xf32>
    %91 = math.rsqrt %90 : vector<8x1xf32>
    %92 = vector.broadcast %91 : vector<8x1xf32> to vector<8x128xf32>
    %93 = arith.mulf %83, %92 : vector<8x128xf32>
    %94 = vector.broadcast %16 : vector<1x128xf32> to vector<8x128xf32>
    %95 = arith.mulf %93, %94 : vector<8x128xf32>
    %96 = vector.broadcast %17 : vector<1x128xf32> to vector<8x128xf32>
    %97 = arith.addf %95, %96 : vector<8x128xf32>
    %cst_43 = arith.constant dense<0.000000e+00> : vector<8x128xf32>
    %98 = tpu.matmul %97, %22, %cst_43 {dimension_numbers = #tpu.dot_dimension_numbers<[1], [0], [0], [1], [0, 0, 1, 1], [], []>} : vector<8x128xf32>, vector<128x128xf32>, vector<8x128xf32> -> vector<8x128xf32>
    %99 = vector.broadcast %18 : vector<1x128xf32> to vector<8x128xf32>
    %100 = arith.addf %98, %99 : vector<8x128xf32>
    %cst_44 = arith.constant 5.000000e-01 : f32
    %101 = vector.broadcast %cst_44 : f32 to vector<8x128xf32>
    %102 = arith.mulf %101, %100 : vector<8x128xf32>
    %cst_45 = arith.constant 0.707106769 : f32
    %103 = vector.broadcast %cst_45 : f32 to vector<8x128xf32>
    %104 = arith.mulf %100, %103 : vector<8x128xf32>
    %105 = math.erf %104 : vector<8x128xf32>
    %cst_46 = arith.constant 1.000000e+00 : f32
    %106 = vector.broadcast %cst_46 : f32 to vector<8x128xf32>
    %107 = arith.addf %106, %105 : vector<8x128xf32>
    %108 = arith.mulf %102, %107 : vector<8x128xf32>
    %cst_47 = arith.constant dense<0.000000e+00> : vector<8x128xf32>
    %109 = tpu.matmul %108, %23, %cst_47 {dimension_numbers = #tpu.dot_dimension_numbers<[1], [0], [0], [1], [0, 0, 1, 1], [], []>} : vector<8x128xf32>, vector<128x128xf32>, vector<8x128xf32> -> vector<8x128xf32>
    %110 = arith.addf %75, %109 : vector<8x128xf32>
    %111 = vector.broadcast %19 : vector<1x128xf32> to vector<8x128xf32>
    %112 = arith.addf %110, %111 : vector<8x128xf32>
    %c10 = arith.constant 10 : index
    %c0_48 = arith.constant 0 : index
    %113 = vector.load %arg2[%c10, %c0_48] : memref<40x128xf32, #tpu.memory_space<vmem>>, vector<1x128xf32>
    %c11 = arith.constant 11 : index
    %c0_49 = arith.constant 0 : index
    %114 = vector.load %arg2[%c11, %c0_49] : memref<40x128xf32, #tpu.memory_space<vmem>>, vector<1x128xf32>
    %c12 = arith.constant 12 : index
    %c0_50 = arith.constant 0 : index
    %115 = vector.load %arg2[%c12, %c0_50] : memref<40x128xf32, #tpu.memory_space<vmem>>, vector<1x128xf32>
    %c13 = arith.constant 13 : index
    %c0_51 = arith.constant 0 : index
    %116 = vector.load %arg2[%c13, %c0_51] : memref<40x128xf32, #tpu.memory_space<vmem>>, vector<1x128xf32>
    %c14 = arith.constant 14 : index
    %c0_52 = arith.constant 0 : index
    %117 = vector.load %arg2[%c14, %c0_52] : memref<40x128xf32, #tpu.memory_space<vmem>>, vector<1x128xf32>
    %c15 = arith.constant 15 : index
    %c0_53 = arith.constant 0 : index
    %118 = vector.load %arg2[%c15, %c0_53] : memref<40x128xf32, #tpu.memory_space<vmem>>, vector<1x128xf32>
    %c16_54 = arith.constant 16 : index
    %c0_55 = arith.constant 0 : index
    %119 = vector.load %arg2[%c16_54, %c0_55] : memref<40x128xf32, #tpu.memory_space<vmem>>, vector<1x128xf32>
    %c17 = arith.constant 17 : index
    %c0_56 = arith.constant 0 : index
    %120 = vector.load %arg2[%c17, %c0_56] : memref<40x128xf32, #tpu.memory_space<vmem>>, vector<1x128xf32>
    %c18 = arith.constant 18 : index
    %c0_57 = arith.constant 0 : index
    %121 = vector.load %arg2[%c18, %c0_57] : memref<40x128xf32, #tpu.memory_space<vmem>>, vector<1x128xf32>
    %c19 = arith.constant 19 : index
    %c0_58 = arith.constant 0 : index
    %122 = vector.load %arg2[%c19, %c0_58] : memref<40x128xf32, #tpu.memory_space<vmem>>, vector<1x128xf32>
    %c128_59 = arith.constant 128 : index
    %c0_60 = arith.constant 0 : index
    %123 = vector.load %arg0[%c128_59, %c0_60] : memref<384x384xf32, #tpu.memory_space<vmem>>, vector<128x384xf32>
    %c512 = arith.constant 512 : index
    %c0_61 = arith.constant 0 : index
    %124 = vector.load %arg1[%c512, %c0_61] : memref<1664x128xf32, #tpu.memory_space<vmem>>, vector<128x128xf32>
    %c640 = arith.constant 640 : index
    %c0_62 = arith.constant 0 : index
    %125 = vector.load %arg1[%c640, %c0_62] : memref<1664x128xf32, #tpu.memory_space<vmem>>, vector<128x128xf32>
    %c768 = arith.constant 768 : index
    %c0_63 = arith.constant 0 : index
    %126 = vector.load %arg1[%c768, %c0_63] : memref<1664x128xf32, #tpu.memory_space<vmem>>, vector<128x128xf32>
    %cst_64 = arith.constant dense<0.000000e+00> : vector<8xf32>
    %127 = vector.multi_reduction <add>, %112, %cst_64 [1] : vector<8x128xf32> to vector<8xf32>
    %128 = vector.shape_cast %127 : vector<8xf32> to vector<8x1xf32>
    %cst_65 = arith.constant 3.125000e-02 : f32
    %129 = vector.broadcast %cst_65 : f32 to vector<8x1xf32>
    %130 = arith.mulf %128, %129 : vector<8x1xf32>
    %131 = vector.broadcast %130 : vector<8x1xf32> to vector<8x128xf32>
    %132 = arith.subf %112, %131 : vector<8x128xf32>
    %133 = vector.broadcast %0 : vector<1x128xf32> to vector<8x128xf32>
    %134 = arith.mulf %132, %133 : vector<8x128xf32>
    %135 = arith.mulf %134, %134 : vector<8x128xf32>
    %cst_66 = arith.constant dense<0.000000e+00> : vector<8xf32>
    %136 = vector.multi_reduction <add>, %135, %cst_66 [1] : vector<8x128xf32> to vector<8xf32>
    %137 = vector.shape_cast %136 : vector<8xf32> to vector<8x1xf32>
    %cst_67 = arith.constant 3.125000e-02 : f32
    %138 = vector.broadcast %cst_67 : f32 to vector<8x1xf32>
    %139 = arith.mulf %137, %138 : vector<8x1xf32>
    %cst_68 = arith.constant 9.99999997E-7 : f32
    %140 = vector.broadcast %cst_68 : f32 to vector<8x1xf32>
    %141 = arith.addf %139, %140 : vector<8x1xf32>
    %142 = math.rsqrt %141 : vector<8x1xf32>
    %143 = vector.broadcast %142 : vector<8x1xf32> to vector<8x128xf32>
    %144 = arith.mulf %134, %143 : vector<8x128xf32>
    %145 = vector.broadcast %113 : vector<1x128xf32> to vector<8x128xf32>
    %146 = arith.mulf %144, %145 : vector<8x128xf32>
    %147 = vector.broadcast %114 : vector<1x128xf32> to vector<8x128xf32>
    %148 = arith.addf %146, %147 : vector<8x128xf32>
    %cst_69 = arith.constant dense<0.000000e+00> : vector<8x384xf32>
    %149 = tpu.matmul %148, %123, %cst_69 {dimension_numbers = #tpu.dot_dimension_numbers<[1], [0], [0], [1], [0, 0, 1, 1], [], []>} : vector<8x128xf32>, vector<128x384xf32>, vector<8x384xf32> -> vector<8x384xf32>
    %150 = vector.extract_strided_slice %149 {offsets = [0, 0], sizes = [8, 128], strides = [1, 1]} : vector<8x384xf32> to vector<8x128xf32>
    %151 = vector.broadcast %115 : vector<1x128xf32> to vector<8x128xf32>
    %152 = arith.addf %150, %151 : vector<8x128xf32>
    %153 = vector.extract_strided_slice %149 {offsets = [0, 128], sizes = [8, 128], strides = [1, 1]} : vector<8x384xf32> to vector<8x128xf32>
    %154 = vector.broadcast %116 : vector<1x128xf32> to vector<8x128xf32>
    %155 = arith.addf %153, %154 : vector<8x128xf32>
    %156 = vector.extract_strided_slice %149 {offsets = [0, 256], sizes = [8, 128], strides = [1, 1]} : vector<8x384xf32> to vector<8x128xf32>
    %157 = vector.broadcast %117 : vector<1x128xf32> to vector<8x128xf32>
    %158 = arith.addf %156, %157 : vector<8x128xf32>
    %159 = tpu.concatenate %152, %152, %152, %152 in 0 : vector<8x128xf32>, vector<8x128xf32>, vector<8x128xf32>, vector<8x128xf32> -> vector<32x128xf32>
    %160 = arith.mulf %159, %8 : vector<32x128xf32>
    %cst_70 = arith.constant dense<0.000000e+00> : vector<32x8xf32>
    %161 = tpu.matmul %160, %155, %cst_70 {dimension_numbers = #tpu.dot_dimension_numbers<[1], [1], [0], [0], [0, 0, 1, 0], [], []>} : vector<32x128xf32>, vector<8x128xf32>, vector<32x8xf32> -> vector<32x8xf32>
    %162 = arith.addf %161, %7 : vector<32x8xf32>
    %cst_71 = arith.constant dense<0xFF800000> : vector<32xf32>
    %163 = vector.multi_reduction <maximumf>, %162, %cst_71 [1] : vector<32x8xf32> to vector<32xf32>
    %164 = vector.shape_cast %163 : vector<32xf32> to vector<32x1xf32>
    %165 = vector.broadcast %164 : vector<32x1xf32> to vector<32x8xf32>
    %166 = arith.subf %162, %165 : vector<32x8xf32>
    %167 = math.exp %166 : vector<32x8xf32>
    %cst_72 = arith.constant dense<0.000000e+00> : vector<32xf32>
    %168 = vector.multi_reduction <add>, %167, %cst_72 [1] : vector<32x8xf32> to vector<32xf32>
    %169 = vector.shape_cast %168 : vector<32xf32> to vector<32x1xf32>
    %170 = vector.broadcast %169 : vector<32x1xf32> to vector<32x8xf32>
    %171 = arith.divf %167, %170 : vector<32x8xf32>
    %cst_73 = arith.constant dense<0.000000e+00> : vector<32x128xf32>
    %172 = tpu.matmul %171, %158, %cst_73 {dimension_numbers = #tpu.dot_dimension_numbers<[1], [0], [0], [1], [0, 0, 1, 1], [], []>} : vector<32x8xf32>, vector<8x128xf32>, vector<32x128xf32> -> vector<32x128xf32>
    %173 = arith.mulf %172, %8 : vector<32x128xf32>
    %cst_74 = arith.constant dense<0.000000e+00> : vector<8x128xf32>
    %174 = tpu.matmul %9, %173, %cst_74 {dimension_numbers = #tpu.dot_dimension_numbers<[1], [0], [0], [1], [0, 0, 1, 1], [], []>} : vector<8x32xf32>, vector<32x128xf32>, vector<8x128xf32> -> vector<8x128xf32>
    %cst_75 = arith.constant dense<0.000000e+00> : vector<8x128xf32>
    %175 = tpu.matmul %174, %124, %cst_75 {dimension_numbers = #tpu.dot_dimension_numbers<[1], [0], [0], [1], [0, 0, 1, 1], [], []>} : vector<8x128xf32>, vector<128x128xf32>, vector<8x128xf32> -> vector<8x128xf32>
    %176 = arith.addf %112, %175 : vector<8x128xf32>
    %177 = vector.broadcast %118 : vector<1x128xf32> to vector<8x128xf32>
    %178 = arith.addf %176, %177 : vector<8x128xf32>
    %cst_76 = arith.constant dense<0.000000e+00> : vector<8xf32>
    %179 = vector.multi_reduction <add>, %178, %cst_76 [1] : vector<8x128xf32> to vector<8xf32>
    %180 = vector.shape_cast %179 : vector<8xf32> to vector<8x1xf32>
    %cst_77 = arith.constant 3.125000e-02 : f32
    %181 = vector.broadcast %cst_77 : f32 to vector<8x1xf32>
    %182 = arith.mulf %180, %181 : vector<8x1xf32>
    %183 = vector.broadcast %182 : vector<8x1xf32> to vector<8x128xf32>
    %184 = arith.subf %178, %183 : vector<8x128xf32>
    %185 = vector.broadcast %0 : vector<1x128xf32> to vector<8x128xf32>
    %186 = arith.mulf %184, %185 : vector<8x128xf32>
    %187 = arith.mulf %186, %186 : vector<8x128xf32>
    %cst_78 = arith.constant dense<0.000000e+00> : vector<8xf32>
    %188 = vector.multi_reduction <add>, %187, %cst_78 [1] : vector<8x128xf32> to vector<8xf32>
    %189 = vector.shape_cast %188 : vector<8xf32> to vector<8x1xf32>
    %cst_79 = arith.constant 3.125000e-02 : f32
    %190 = vector.broadcast %cst_79 : f32 to vector<8x1xf32>
    %191 = arith.mulf %189, %190 : vector<8x1xf32>
    %cst_80 = arith.constant 9.99999997E-7 : f32
    %192 = vector.broadcast %cst_80 : f32 to vector<8x1xf32>
    %193 = arith.addf %191, %192 : vector<8x1xf32>
    %194 = math.rsqrt %193 : vector<8x1xf32>
    %195 = vector.broadcast %194 : vector<8x1xf32> to vector<8x128xf32>
    %196 = arith.mulf %186, %195 : vector<8x128xf32>
    %197 = vector.broadcast %119 : vector<1x128xf32> to vector<8x128xf32>
    %198 = arith.mulf %196, %197 : vector<8x128xf32>
    %199 = vector.broadcast %120 : vector<1x128xf32> to vector<8x128xf32>
    %200 = arith.addf %198, %199 : vector<8x128xf32>
    %cst_81 = arith.constant dense<0.000000e+00> : vector<8x128xf32>
    %201 = tpu.matmul %200, %125, %cst_81 {dimension_numbers = #tpu.dot_dimension_numbers<[1], [0], [0], [1], [0, 0, 1, 1], [], []>} : vector<8x128xf32>, vector<128x128xf32>, vector<8x128xf32> -> vector<8x128xf32>
    %202 = vector.broadcast %121 : vector<1x128xf32> to vector<8x128xf32>
    %203 = arith.addf %201, %202 : vector<8x128xf32>
    %cst_82 = arith.constant 5.000000e-01 : f32
    %204 = vector.broadcast %cst_82 : f32 to vector<8x128xf32>
    %205 = arith.mulf %204, %203 : vector<8x128xf32>
    %cst_83 = arith.constant 0.707106769 : f32
    %206 = vector.broadcast %cst_83 : f32 to vector<8x128xf32>
    %207 = arith.mulf %203, %206 : vector<8x128xf32>
    %208 = math.erf %207 : vector<8x128xf32>
    %cst_84 = arith.constant 1.000000e+00 : f32
    %209 = vector.broadcast %cst_84 : f32 to vector<8x128xf32>
    %210 = arith.addf %209, %208 : vector<8x128xf32>
    %211 = arith.mulf %205, %210 : vector<8x128xf32>
    %cst_85 = arith.constant dense<0.000000e+00> : vector<8x128xf32>
    %212 = tpu.matmul %211, %126, %cst_85 {dimension_numbers = #tpu.dot_dimension_numbers<[1], [0], [0], [1], [0, 0, 1, 1], [], []>} : vector<8x128xf32>, vector<128x128xf32>, vector<8x128xf32> -> vector<8x128xf32>
    %213 = arith.addf %178, %212 : vector<8x128xf32>
    %214 = vector.broadcast %122 : vector<1x128xf32> to vector<8x128xf32>
    %215 = arith.addf %213, %214 : vector<8x128xf32>
    %c20 = arith.constant 20 : index
    %c0_86 = arith.constant 0 : index
    %216 = vector.load %arg2[%c20, %c0_86] : memref<40x128xf32, #tpu.memory_space<vmem>>, vector<1x128xf32>
    %c21 = arith.constant 21 : index
    %c0_87 = arith.constant 0 : index
    %217 = vector.load %arg2[%c21, %c0_87] : memref<40x128xf32, #tpu.memory_space<vmem>>, vector<1x128xf32>
    %cst_88 = arith.constant dense<0.000000e+00> : vector<8xf32>
    %218 = vector.multi_reduction <add>, %215, %cst_88 [1] : vector<8x128xf32> to vector<8xf32>
    %219 = vector.shape_cast %218 : vector<8xf32> to vector<8x1xf32>
    %cst_89 = arith.constant 3.125000e-02 : f32
    %220 = vector.broadcast %cst_89 : f32 to vector<8x1xf32>
    %221 = arith.mulf %219, %220 : vector<8x1xf32>
    %222 = vector.broadcast %221 : vector<8x1xf32> to vector<8x128xf32>
    %223 = arith.subf %215, %222 : vector<8x128xf32>
    %224 = vector.broadcast %0 : vector<1x128xf32> to vector<8x128xf32>
    %225 = arith.mulf %223, %224 : vector<8x128xf32>
    %226 = arith.mulf %225, %225 : vector<8x128xf32>
    %cst_90 = arith.constant dense<0.000000e+00> : vector<8xf32>
    %227 = vector.multi_reduction <add>, %226, %cst_90 [1] : vector<8x128xf32> to vector<8xf32>
    %228 = vector.shape_cast %227 : vector<8xf32> to vector<8x1xf32>
    %cst_91 = arith.constant 3.125000e-02 : f32
    %229 = vector.broadcast %cst_91 : f32 to vector<8x1xf32>
    %230 = arith.mulf %228, %229 : vector<8x1xf32>
    %cst_92 = arith.constant 9.99999997E-7 : f32
    %231 = vector.broadcast %cst_92 : f32 to vector<8x1xf32>
    %232 = arith.addf %230, %231 : vector<8x1xf32>
    %233 = math.rsqrt %232 : vector<8x1xf32>
    %234 = vector.broadcast %233 : vector<8x1xf32> to vector<8x128xf32>
    %235 = arith.mulf %225, %234 : vector<8x128xf32>
    %236 = vector.broadcast %216 : vector<1x128xf32> to vector<8x128xf32>
    %237 = arith.mulf %235, %236 : vector<8x128xf32>
    %238 = vector.broadcast %217 : vector<1x128xf32> to vector<8x128xf32>
    %239 = arith.addf %237, %238 : vector<8x128xf32>
    %c896 = arith.constant 896 : index
    %c0_93 = arith.constant 0 : index
    %240 = vector.load %arg1[%c896, %c0_93] : memref<1664x128xf32, #tpu.memory_space<vmem>>, vector<128x128xf32>
    %cst_94 = arith.constant dense<0.000000e+00> : vector<8x128xf32>
    %241 = tpu.matmul %239, %240, %cst_94 {dimension_numbers = #tpu.dot_dimension_numbers<[1], [0], [0], [1], [0, 0, 1, 1], [], []>} : vector<8x128xf32>, vector<128x128xf32>, vector<8x128xf32> -> vector<8x128xf32>
    %c22 = arith.constant 22 : index
    %c0_95 = arith.constant 0 : index
    %242 = vector.load %arg2[%c22, %c0_95] : memref<40x128xf32, #tpu.memory_space<vmem>>, vector<1x128xf32>
    %243 = vector.broadcast %242 : vector<1x128xf32> to vector<8x128xf32>
    %244 = arith.addf %241, %243 : vector<8x128xf32>
    %c88 = arith.constant 88 : index
    %c0_96 = arith.constant 0 : index
    %245 = vector.load %arg3[%c88, %c0_96] : memref<400x128xf32, #tpu.memory_space<vmem>>, vector<24x8xf32>
    %cst_97 = arith.constant dense<0.000000e+00> : vector<24x128xf32>
    %246 = tpu.matmul %245, %244, %cst_97 {dimension_numbers = #tpu.dot_dimension_numbers<[1], [0], [0], [1], [0, 0, 1, 1], [], []>} : vector<24x8xf32>, vector<8x128xf32>, vector<24x128xf32> -> vector<24x128xf32>
    %c112 = arith.constant 112 : index
    %c0_98 = arith.constant 0 : index
    %247 = vector.load %arg3[%c112, %c0_98] : memref<400x128xf32, #tpu.memory_space<vmem>>, vector<24x128xf32>
    %248 = arith.addf %246, %247 : vector<24x128xf32>
    %c136 = arith.constant 136 : index
    %c0_99 = arith.constant 0 : index
    %249 = vector.load %arg3[%c136, %c0_99] : memref<400x128xf32, #tpu.memory_space<vmem>>, vector<96x24xf32>
    %c232 = arith.constant 232 : index
    %c0_100 = arith.constant 0 : index
    %250 = vector.load %arg3[%c232, %c0_100] : memref<400x128xf32, #tpu.memory_space<vmem>>, vector<96x128xf32>
    %c328 = arith.constant 328 : index
    %c0_101 = arith.constant 0 : index
    %251 = vector.load %arg3[%c328, %c0_101] : memref<400x128xf32, #tpu.memory_space<vmem>>, vector<24x96xf32>
    %c23 = arith.constant 23 : index
    %c0_102 = arith.constant 0 : index
    %252 = vector.load %arg2[%c23, %c0_102] : memref<40x128xf32, #tpu.memory_space<vmem>>, vector<1x128xf32>
    %c24 = arith.constant 24 : index
    %c0_103 = arith.constant 0 : index
    %253 = vector.load %arg2[%c24, %c0_103] : memref<40x128xf32, #tpu.memory_space<vmem>>, vector<1x128xf32>
    %c25 = arith.constant 25 : index
    %c0_104 = arith.constant 0 : index
    %254 = vector.load %arg2[%c25, %c0_104] : memref<40x128xf32, #tpu.memory_space<vmem>>, vector<1x128xf32>
    %c26 = arith.constant 26 : index
    %c0_105 = arith.constant 0 : index
    %255 = vector.load %arg2[%c26, %c0_105] : memref<40x128xf32, #tpu.memory_space<vmem>>, vector<1x128xf32>
    %c27 = arith.constant 27 : index
    %c0_106 = arith.constant 0 : index
    %256 = vector.load %arg2[%c27, %c0_106] : memref<40x128xf32, #tpu.memory_space<vmem>>, vector<1x128xf32>
    %c28 = arith.constant 28 : index
    %c0_107 = arith.constant 0 : index
    %257 = vector.load %arg2[%c28, %c0_107] : memref<40x128xf32, #tpu.memory_space<vmem>>, vector<1x128xf32>
    %c29 = arith.constant 29 : index
    %c0_108 = arith.constant 0 : index
    %258 = vector.load %arg2[%c29, %c0_108] : memref<40x128xf32, #tpu.memory_space<vmem>>, vector<1x128xf32>
    %c30 = arith.constant 30 : index
    %c0_109 = arith.constant 0 : index
    %259 = vector.load %arg2[%c30, %c0_109] : memref<40x128xf32, #tpu.memory_space<vmem>>, vector<1x128xf32>
    %c31 = arith.constant 31 : index
    %c0_110 = arith.constant 0 : index
    %260 = vector.load %arg2[%c31, %c0_110] : memref<40x128xf32, #tpu.memory_space<vmem>>, vector<1x128xf32>
    %c32 = arith.constant 32 : index
    %c0_111 = arith.constant 0 : index
    %261 = vector.load %arg2[%c32, %c0_111] : memref<40x128xf32, #tpu.memory_space<vmem>>, vector<1x128xf32>
    %c256_112 = arith.constant 256 : index
    %c0_113 = arith.constant 0 : index
    %262 = vector.load %arg0[%c256_112, %c0_113] : memref<384x384xf32, #tpu.memory_space<vmem>>, vector<128x384xf32>
    %c1024 = arith.constant 1024 : index
    %c0_114 = arith.constant 0 : index
    %263 = vector.load %arg1[%c1024, %c0_114] : memref<1664x128xf32, #tpu.memory_space<vmem>>, vector<128x128xf32>
    %c1152 = arith.constant 1152 : index
    %c0_115 = arith.constant 0 : index
    %264 = vector.load %arg1[%c1152, %c0_115] : memref<1664x128xf32, #tpu.memory_space<vmem>>, vector<128x128xf32>
    %c1280 = arith.constant 1280 : index
    %c0_116 = arith.constant 0 : index
    %265 = vector.load %arg1[%c1280, %c0_116] : memref<1664x128xf32, #tpu.memory_space<vmem>>, vector<128x128xf32>
    %cst_117 = arith.constant dense<0.000000e+00> : vector<24xf32>
    %266 = vector.multi_reduction <add>, %248, %cst_117 [1] : vector<24x128xf32> to vector<24xf32>
    %267 = vector.shape_cast %266 : vector<24xf32> to vector<24x1xf32>
    %cst_118 = arith.constant 6.250000e-02 : f32
    %268 = vector.broadcast %cst_118 : f32 to vector<24x1xf32>
    %269 = arith.mulf %267, %268 : vector<24x1xf32>
    %270 = vector.broadcast %269 : vector<24x1xf32> to vector<24x128xf32>
    %271 = arith.subf %248, %270 : vector<24x128xf32>
    %272 = vector.broadcast %1 : vector<1x128xf32> to vector<24x128xf32>
    %273 = arith.mulf %271, %272 : vector<24x128xf32>
    %274 = arith.mulf %273, %273 : vector<24x128xf32>
    %cst_119 = arith.constant dense<0.000000e+00> : vector<24xf32>
    %275 = vector.multi_reduction <add>, %274, %cst_119 [1] : vector<24x128xf32> to vector<24xf32>
    %276 = vector.shape_cast %275 : vector<24xf32> to vector<24x1xf32>
    %cst_120 = arith.constant 6.250000e-02 : f32
    %277 = vector.broadcast %cst_120 : f32 to vector<24x1xf32>
    %278 = arith.mulf %276, %277 : vector<24x1xf32>
    %cst_121 = arith.constant 9.99999997E-7 : f32
    %279 = vector.broadcast %cst_121 : f32 to vector<24x1xf32>
    %280 = arith.addf %278, %279 : vector<24x1xf32>
    %281 = math.rsqrt %280 : vector<24x1xf32>
    %282 = vector.broadcast %281 : vector<24x1xf32> to vector<24x128xf32>
    %283 = arith.mulf %273, %282 : vector<24x128xf32>
    %284 = vector.broadcast %252 : vector<1x128xf32> to vector<24x128xf32>
    %285 = arith.mulf %283, %284 : vector<24x128xf32>
    %286 = vector.broadcast %253 : vector<1x128xf32> to vector<24x128xf32>
    %287 = arith.addf %285, %286 : vector<24x128xf32>
    %cst_122 = arith.constant dense<0.000000e+00> : vector<24x384xf32>
    %288 = tpu.matmul %287, %262, %cst_122 {dimension_numbers = #tpu.dot_dimension_numbers<[1], [0], [0], [1], [0, 0, 1, 1], [], []>} : vector<24x128xf32>, vector<128x384xf32>, vector<24x384xf32> -> vector<24x384xf32>
    %289 = vector.extract_strided_slice %288 {offsets = [0, 0], sizes = [24, 128], strides = [1, 1]} : vector<24x384xf32> to vector<24x128xf32>
    %290 = vector.broadcast %254 : vector<1x128xf32> to vector<24x128xf32>
    %291 = arith.addf %289, %290 : vector<24x128xf32>
    %292 = vector.extract_strided_slice %288 {offsets = [0, 128], sizes = [24, 128], strides = [1, 1]} : vector<24x384xf32> to vector<24x128xf32>
    %293 = vector.broadcast %255 : vector<1x128xf32> to vector<24x128xf32>
    %294 = arith.addf %292, %293 : vector<24x128xf32>
    %295 = vector.extract_strided_slice %288 {offsets = [0, 256], sizes = [24, 128], strides = [1, 1]} : vector<24x384xf32> to vector<24x128xf32>
    %296 = vector.broadcast %256 : vector<1x128xf32> to vector<24x128xf32>
    %297 = arith.addf %295, %296 : vector<24x128xf32>
    %298 = tpu.concatenate %291, %291, %291, %291 in 0 : vector<24x128xf32>, vector<24x128xf32>, vector<24x128xf32>, vector<24x128xf32> -> vector<96x128xf32>
    %299 = arith.mulf %298, %250 : vector<96x128xf32>
    %cst_123 = arith.constant dense<0.000000e+00> : vector<96x24xf32>
    %300 = tpu.matmul %299, %294, %cst_123 {dimension_numbers = #tpu.dot_dimension_numbers<[1], [1], [0], [0], [0, 0, 1, 0], [], []>} : vector<96x128xf32>, vector<24x128xf32>, vector<96x24xf32> -> vector<96x24xf32>
    %301 = arith.addf %300, %249 : vector<96x24xf32>
    %cst_124 = arith.constant dense<0xFF800000> : vector<96xf32>
    %302 = vector.multi_reduction <maximumf>, %301, %cst_124 [1] : vector<96x24xf32> to vector<96xf32>
    %303 = vector.shape_cast %302 : vector<96xf32> to vector<96x1xf32>
    %304 = vector.broadcast %303 : vector<96x1xf32> to vector<96x24xf32>
    %305 = arith.subf %301, %304 : vector<96x24xf32>
    %306 = math.exp %305 : vector<96x24xf32>
    %cst_125 = arith.constant dense<0.000000e+00> : vector<96xf32>
    %307 = vector.multi_reduction <add>, %306, %cst_125 [1] : vector<96x24xf32> to vector<96xf32>
    %308 = vector.shape_cast %307 : vector<96xf32> to vector<96x1xf32>
    %309 = vector.broadcast %308 : vector<96x1xf32> to vector<96x24xf32>
    %310 = arith.divf %306, %309 : vector<96x24xf32>
    %cst_126 = arith.constant dense<0.000000e+00> : vector<96x128xf32>
    %311 = tpu.matmul %310, %297, %cst_126 {dimension_numbers = #tpu.dot_dimension_numbers<[1], [0], [0], [1], [0, 0, 1, 1], [], []>} : vector<96x24xf32>, vector<24x128xf32>, vector<96x128xf32> -> vector<96x128xf32>
    %312 = arith.mulf %311, %250 : vector<96x128xf32>
    %cst_127 = arith.constant dense<0.000000e+00> : vector<24x128xf32>
    %313 = tpu.matmul %251, %312, %cst_127 {dimension_numbers = #tpu.dot_dimension_numbers<[1], [0], [0], [1], [0, 0, 1, 1], [], []>} : vector<24x96xf32>, vector<96x128xf32>, vector<24x128xf32> -> vector<24x128xf32>
    %cst_128 = arith.constant dense<0.000000e+00> : vector<24x128xf32>
    %314 = tpu.matmul %313, %263, %cst_128 {dimension_numbers = #tpu.dot_dimension_numbers<[1], [0], [0], [1], [0, 0, 1, 1], [], []>} : vector<24x128xf32>, vector<128x128xf32>, vector<24x128xf32> -> vector<24x128xf32>
    %315 = arith.addf %248, %314 : vector<24x128xf32>
    %316 = vector.broadcast %257 : vector<1x128xf32> to vector<24x128xf32>
    %317 = arith.addf %315, %316 : vector<24x128xf32>
    %cst_129 = arith.constant dense<0.000000e+00> : vector<24xf32>
    %318 = vector.multi_reduction <add>, %317, %cst_129 [1] : vector<24x128xf32> to vector<24xf32>
    %319 = vector.shape_cast %318 : vector<24xf32> to vector<24x1xf32>
    %cst_130 = arith.constant 6.250000e-02 : f32
    %320 = vector.broadcast %cst_130 : f32 to vector<24x1xf32>
    %321 = arith.mulf %319, %320 : vector<24x1xf32>
    %322 = vector.broadcast %321 : vector<24x1xf32> to vector<24x128xf32>
    %323 = arith.subf %317, %322 : vector<24x128xf32>
    %324 = vector.broadcast %1 : vector<1x128xf32> to vector<24x128xf32>
    %325 = arith.mulf %323, %324 : vector<24x128xf32>
    %326 = arith.mulf %325, %325 : vector<24x128xf32>
    %cst_131 = arith.constant dense<0.000000e+00> : vector<24xf32>
    %327 = vector.multi_reduction <add>, %326, %cst_131 [1] : vector<24x128xf32> to vector<24xf32>
    %328 = vector.shape_cast %327 : vector<24xf32> to vector<24x1xf32>
    %cst_132 = arith.constant 6.250000e-02 : f32
    %329 = vector.broadcast %cst_132 : f32 to vector<24x1xf32>
    %330 = arith.mulf %328, %329 : vector<24x1xf32>
    %cst_133 = arith.constant 9.99999997E-7 : f32
    %331 = vector.broadcast %cst_133 : f32 to vector<24x1xf32>
    %332 = arith.addf %330, %331 : vector<24x1xf32>
    %333 = math.rsqrt %332 : vector<24x1xf32>
    %334 = vector.broadcast %333 : vector<24x1xf32> to vector<24x128xf32>
    %335 = arith.mulf %325, %334 : vector<24x128xf32>
    %336 = vector.broadcast %258 : vector<1x128xf32> to vector<24x128xf32>
    %337 = arith.mulf %335, %336 : vector<24x128xf32>
    %338 = vector.broadcast %259 : vector<1x128xf32> to vector<24x128xf32>
    %339 = arith.addf %337, %338 : vector<24x128xf32>
    %cst_134 = arith.constant dense<0.000000e+00> : vector<24x128xf32>
    %340 = tpu.matmul %339, %264, %cst_134 {dimension_numbers = #tpu.dot_dimension_numbers<[1], [0], [0], [1], [0, 0, 1, 1], [], []>} : vector<24x128xf32>, vector<128x128xf32>, vector<24x128xf32> -> vector<24x128xf32>
    %341 = vector.broadcast %260 : vector<1x128xf32> to vector<24x128xf32>
    %342 = arith.addf %340, %341 : vector<24x128xf32>
    %cst_135 = arith.constant 5.000000e-01 : f32
    %343 = vector.broadcast %cst_135 : f32 to vector<24x128xf32>
    %344 = arith.mulf %343, %342 : vector<24x128xf32>
    %cst_136 = arith.constant 0.707106769 : f32
    %345 = vector.broadcast %cst_136 : f32 to vector<24x128xf32>
    %346 = arith.mulf %342, %345 : vector<24x128xf32>
    %347 = math.erf %346 : vector<24x128xf32>
    %cst_137 = arith.constant 1.000000e+00 : f32
    %348 = vector.broadcast %cst_137 : f32 to vector<24x128xf32>
    %349 = arith.addf %348, %347 : vector<24x128xf32>
    %350 = arith.mulf %344, %349 : vector<24x128xf32>
    %cst_138 = arith.constant dense<0.000000e+00> : vector<24x128xf32>
    %351 = tpu.matmul %350, %265, %cst_138 {dimension_numbers = #tpu.dot_dimension_numbers<[1], [0], [0], [1], [0, 0, 1, 1], [], []>} : vector<24x128xf32>, vector<128x128xf32>, vector<24x128xf32> -> vector<24x128xf32>
    %352 = arith.addf %317, %351 : vector<24x128xf32>
    %353 = vector.broadcast %261 : vector<1x128xf32> to vector<24x128xf32>
    %354 = arith.addf %352, %353 : vector<24x128xf32>
    %c33 = arith.constant 33 : index
    %c0_139 = arith.constant 0 : index
    %355 = vector.load %arg2[%c33, %c0_139] : memref<40x128xf32, #tpu.memory_space<vmem>>, vector<1x128xf32>
    %c34 = arith.constant 34 : index
    %c0_140 = arith.constant 0 : index
    %356 = vector.load %arg2[%c34, %c0_140] : memref<40x128xf32, #tpu.memory_space<vmem>>, vector<1x128xf32>
    %cst_141 = arith.constant dense<0.000000e+00> : vector<24xf32>
    %357 = vector.multi_reduction <add>, %354, %cst_141 [1] : vector<24x128xf32> to vector<24xf32>
    %358 = vector.shape_cast %357 : vector<24xf32> to vector<24x1xf32>
    %cst_142 = arith.constant 6.250000e-02 : f32
    %359 = vector.broadcast %cst_142 : f32 to vector<24x1xf32>
    %360 = arith.mulf %358, %359 : vector<24x1xf32>
    %361 = vector.broadcast %360 : vector<24x1xf32> to vector<24x128xf32>
    %362 = arith.subf %354, %361 : vector<24x128xf32>
    %363 = vector.broadcast %1 : vector<1x128xf32> to vector<24x128xf32>
    %364 = arith.mulf %362, %363 : vector<24x128xf32>
    %365 = arith.mulf %364, %364 : vector<24x128xf32>
    %cst_143 = arith.constant dense<0.000000e+00> : vector<24xf32>
    %366 = vector.multi_reduction <add>, %365, %cst_143 [1] : vector<24x128xf32> to vector<24xf32>
    %367 = vector.shape_cast %366 : vector<24xf32> to vector<24x1xf32>
    %cst_144 = arith.constant 6.250000e-02 : f32
    %368 = vector.broadcast %cst_144 : f32 to vector<24x1xf32>
    %369 = arith.mulf %367, %368 : vector<24x1xf32>
    %cst_145 = arith.constant 9.99999997E-7 : f32
    %370 = vector.broadcast %cst_145 : f32 to vector<24x1xf32>
    %371 = arith.addf %369, %370 : vector<24x1xf32>
    %372 = math.rsqrt %371 : vector<24x1xf32>
    %373 = vector.broadcast %372 : vector<24x1xf32> to vector<24x128xf32>
    %374 = arith.mulf %364, %373 : vector<24x128xf32>
    %375 = vector.broadcast %355 : vector<1x128xf32> to vector<24x128xf32>
    %376 = arith.mulf %374, %375 : vector<24x128xf32>
    %377 = vector.broadcast %356 : vector<1x128xf32> to vector<24x128xf32>
    %378 = arith.addf %376, %377 : vector<24x128xf32>
    %c1408 = arith.constant 1408 : index
    %c0_146 = arith.constant 0 : index
    %379 = vector.load %arg1[%c1408, %c0_146] : memref<1664x128xf32, #tpu.memory_space<vmem>>, vector<128x128xf32>
    %cst_147 = arith.constant dense<0.000000e+00> : vector<24x128xf32>
    %380 = tpu.matmul %378, %379, %cst_147 {dimension_numbers = #tpu.dot_dimension_numbers<[1], [0], [0], [1], [0, 0, 1, 1], [], []>} : vector<24x128xf32>, vector<128x128xf32>, vector<24x128xf32> -> vector<24x128xf32>
    %c35 = arith.constant 35 : index
    %c0_148 = arith.constant 0 : index
    %381 = vector.load %arg2[%c35, %c0_148] : memref<40x128xf32, #tpu.memory_space<vmem>>, vector<1x128xf32>
    %382 = vector.broadcast %381 : vector<1x128xf32> to vector<24x128xf32>
    %383 = arith.addf %380, %382 : vector<24x128xf32>
    %cst_149 = arith.constant 5.000000e-01 : f32
    %384 = vector.broadcast %cst_149 : f32 to vector<24x128xf32>
    %385 = arith.mulf %384, %383 : vector<24x128xf32>
    %cst_150 = arith.constant 0.707106769 : f32
    %386 = vector.broadcast %cst_150 : f32 to vector<24x128xf32>
    %387 = arith.mulf %383, %386 : vector<24x128xf32>
    %388 = math.erf %387 : vector<24x128xf32>
    %cst_151 = arith.constant 1.000000e+00 : f32
    %389 = vector.broadcast %cst_151 : f32 to vector<24x128xf32>
    %390 = arith.addf %389, %388 : vector<24x128xf32>
    %391 = arith.mulf %385, %390 : vector<24x128xf32>
    %c1536 = arith.constant 1536 : index
    %c0_152 = arith.constant 0 : index
    %392 = vector.load %arg1[%c1536, %c0_152] : memref<1664x128xf32, #tpu.memory_space<vmem>>, vector<128x128xf32>
    %cst_153 = arith.constant dense<0.000000e+00> : vector<24x128xf32>
    %393 = tpu.matmul %391, %392, %cst_153 {dimension_numbers = #tpu.dot_dimension_numbers<[1], [0], [0], [1], [0, 0, 1, 1], [], []>} : vector<24x128xf32>, vector<128x128xf32>, vector<24x128xf32> -> vector<24x128xf32>
    %c36 = arith.constant 36 : index
    %c0_154 = arith.constant 0 : index
    %394 = vector.load %arg2[%c36, %c0_154] : memref<40x128xf32, #tpu.memory_space<vmem>>, vector<1x128xf32>
    %395 = vector.broadcast %394 : vector<1x128xf32> to vector<24x128xf32>
    %396 = arith.addf %393, %395 : vector<24x128xf32>
    %c0_155 = arith.constant 0 : index
    %c0_156 = arith.constant 0 : index
    %397 = vector.load %arg5[%c0_155, %c0_156] : memref<24x128xf32, #tpu.memory_space<vmem>>, vector<24x128xf32>
    tpu.vector_store %arg5[%c0_155, %c0_156], %396 {strides = array<i32>} : memref<24x128xf32, #tpu.memory_space<vmem>>, vector<24x128xf32>,
    %c352 = arith.constant 352 : index
    %c0_157 = arith.constant 0 : index
    %398 = vector.load %arg3[%c352, %c0_157] : memref<400x128xf32, #tpu.memory_space<vmem>>, vector<24x128xf32>
    %399 = arith.subf %396, %398 : vector<24x128xf32>
    %400 = arith.mulf %399, %399 : vector<24x128xf32>
    %cst_158 = arith.constant dense<0.000000e+00> : vector<24xf32>
    %401 = vector.multi_reduction <add>, %400, %cst_158 [1] : vector<24x128xf32> to vector<24xf32>
    %402 = vector.shape_cast %401 : vector<24xf32> to vector<24x1xf32>
    %cst_159 = arith.constant 3.125000e-02 : f32
    %403 = vector.broadcast %cst_159 : f32 to vector<24x1xf32>
    %404 = arith.mulf %402, %403 : vector<24x1xf32>
    %c376 = arith.constant 376 : index
    %c0_160 = arith.constant 0 : index
    %405 = vector.load %arg3[%c376, %c0_160] : memref<400x128xf32, #tpu.memory_space<vmem>>, vector<24x1xf32>
    %406 = arith.mulf %404, %405 : vector<24x1xf32>
    %cst_161 = arith.constant dense<0.000000e+00> : vector<1xf32>
    %407 = vector.multi_reduction <add>, %406, %cst_161 [0] : vector<24x1xf32> to vector<1xf32>
    %408 = vector.shape_cast %407 : vector<1xf32> to vector<1x1xf32>
    %c0_162 = arith.constant 0 : index
    %c0_163 = arith.constant 0 : index
    %409 = vector.load %arg4[%c0_162, %c0_163] : memref<1x1xf32, #tpu.memory_space<vmem>>, vector<1x1xf32>
    tpu.vector_store %arg4[%c0_162, %c0_163], %408 {strides = array<i32>} : memref<1x1xf32, #tpu.memory_space<vmem>>, vector<1x1xf32>,
    return
  }
}

</mosaic_0001>

<llo_original>
// kernel: mae_forward.1
$region0: #{mae_forward.1}
  #allocation0 [shape = 'u32[]', space=smem, size = 0x4, offset = 0x4, fixed_abs, tag = 'smem constant byte address 0x4 - core index']
  #allocation1 [shape = 'u32[144,128]{1,0:T(1,128)}', space=vmem, size = 0x12000, scoped, tag = 'internal scratch']
  %s0 = inlined_call_operand.vmem [shape: f32[384,384], index: 0, kind: input, shape index: {}]
  %s1 = inlined_call_operand.vmem [shape: f32[1664,128], index: 1, kind: input, shape index: {}]
  %s2 = inlined_call_operand.vmem [shape: f32[40,128], index: 2, kind: input, shape index: {}]
  %s3 = inlined_call_operand.vmem [shape: f32[400,128], index: 3, kind: input, shape index: {}]
  %s4 = inlined_call_operand.hbm [shape: f32[1,1], index: 4, kind: output, shape index: {0}]
  %s5 = inlined_call_operand.vmem [shape: f32[24,128], index: 5, kind: output, shape index: {1}]
  %6 = xla_tuple %s4, %s5
  %s7 = sld [smem:[#allocation0]]
  $region34: #{mae_forward.1} parent=0
    _
  %s9 = ssub.s32 1, %s7
  %s10 = scalar_select 0, %s9, %s7
  $region1: #{mae_forward.1} parent=0
    #allocation2 [shape = 'u8[512]{0}', space=vmem, size = 0x400, scoped, tag = 'output window, operand 0, single buffered']
    #allocation3 [shape = 's32[1]{0}', space=sflag, size = 0x4, scoped, tag = 'scoped memory for mae_forward.1']
    %11 = vsyncpa [#allocation3], 0
    // Predicated region
    $region2: #{mae_forward.1} parent=1 // pred_check
      _
    $region3: #{mae_forward.1} parent=1 // pred_check_branch
      %13 = sbr.rel (0) target = $region5
    $region4: #{mae_forward.1} parent=1 // pred_region
      _
    $region5: #{mae_forward.1} parent=1 // pred_fallthru
      _
    // Predicated region
    $region6: #{mae_forward.1} parent=1 // pred_check
      _
    $region7: #{mae_forward.1} parent=1 // pred_check_branch
      %15 = sbr.rel (0) target = $region9
    $region8: #{mae_forward.1} parent=1 // pred_region
      _
    $region9: #{mae_forward.1} parent=1 // pred_fallthru
      _
    // Predicated region
    $region10: #{mae_forward.1} parent=1 // pred_check
      _
    $region11: #{mae_forward.1} parent=1 // pred_check_branch
      %17 = sbr.rel (0) target = $region13
    $region12: #{mae_forward.1} parent=1 // pred_region
      _
    $region13: #{mae_forward.1} parent=1 // pred_fallthru
      _
    // Predicated region
    $region14: #{mae_forward.1} parent=1 // pred_check
      _
    $region15: #{mae_forward.1} parent=1 // pred_check_branch
      %19 = sbr.rel (0) target = $region17
    $region16: #{mae_forward.1} parent=1 // pred_region
      _
    $region17: #{mae_forward.1} parent=1 // pred_fallthru
      _
    %v20 = vld [vmem:[%s2 + $0x25] sm:$0x1]
    %v21 = vld [vmem:[%s2 + $0x26] sm:$0x1]
    %v22 = vld [vmem:[%s3] sm:$0xff]
    %v23 = vld [vmem:[%s3 + $0x8] sm:$0xff]
    %v24 = vld [vmem:[%s1] sm:$0xff]
    %v25 = vld [vmem:[%s1 + $0x8] sm:$0xff]
    %v26 = vld [vmem:[%s1 + $0x10] sm:$0xff]
    %v27 = vld [vmem:[%s1 + $0x18] sm:$0xff]
    %v28 = vld [vmem:[%s1 + $0x20] sm:$0xff]
    %v29 = vld [vmem:[%s1 + $0x28] sm:$0xff]
    %v30 = vld [vmem:[%s1 + $0x30] sm:$0xff]
    %v31 = vld [vmem:[%s1 + $0x38] sm:$0xff]
    %v32 = vld [vmem:[%s1 + $0x40] sm:$0xff]
    %v33 = vld [vmem:[%s1 + $0x48] sm:$0xff]
    %v34 = vld [vmem:[%s1 + $0x50] sm:$0xff]
    %v35 = vld [vmem:[%s1 + $0x58] sm:$0xff]
    %v36 = vld [vmem:[%s1 + $0x60] sm:$0xff]
    %v37 = vld [vmem:[%s1 + $0x68] sm:$0xff]
    %v38 = vld [vmem:[%s1 + $0x70] sm:$0xff]
    %v39 = vld [vmem:[%s1 + $0x78] sm:$0xff]
    %40 = vmatprep.subr.mxu0 0.0
    %41 = vmatpush1.msra.mxu0 %v24
    %42 = vmatprep.subr.mxu0 0.0
    %43 = vmatpush1.msra.mxu0 %v25
    %44 = vmatprep.subr.mxu0 0.0
    %45 = vmatpush1.msra.mxu0 %v26
    %46 = vmatprep.subr.mxu0 0.0
    %47 = vmatpush1.msra.mxu0 %v27
    %48 = vmatprep.subr.mxu0 0.0
    %49 = vmatpush1.msra.mxu0 %v28
    %50 = vmatprep.subr.mxu0 0.0
    %51 = vmatpush1.msra.mxu0 %v29
    %52 = vmatprep.subr.mxu0 0.0
    %53 = vmatpush1.msra.mxu0 %v30
    %54 = vmatprep.subr.mxu0 0.0
    %55 = vmatpush1.msra.mxu0 %v31
    %56 = vmatprep.subr.mxu0 0.0
    %57 = vmatpush1.msra.mxu0 %v32
    %58 = vmatprep.subr.mxu0 0.0
    %59 = vmatpush1.msra.mxu0 %v33
    %60 = vmatprep.subr.mxu0 0.0
    %61 = vmatpush1.msra.mxu0 %v34
    %62 = vmatprep.subr.mxu0 0.0
    %63 = vmatpush1.msra.mxu0 %v35
    %64 = vmatprep.subr.mxu0 0.0
    %65 = vmatpush1.msra.mxu0 %v36
    %66 = vmatprep.subr.mxu0 0.0
    %67 = vmatpush1.msra.mxu0 %v37
    %68 = vmatprep.subr.mxu0 0.0
    %69 = vmatpush1.msra.mxu0 %v38
    %70 = vmatprep.subr.mxu0 0.0
    %71 = vmatpush1.msra.mxu0 %v39
    %72 = vmatprep.subr.mxu0 0.0
    %73 = vmatpush1.msra.mxu0 0.0
    %74 = vmatprep.subr.mxu0 0.0
    %75 = vmatpush1.msra.mxu0 0.0
    %76 = vmatprep.subr.mxu0 0.0
    %77 = vmatpush1.msra.mxu0 0.0
    %78 = vmatprep.subr.mxu0 0.0
    %79 = vmatpush1.msra.mxu0 0.0
    %80 = vmatprep.subr.mxu0 0.0
    %81 = vmatpush1.msra.mxu0 0.0
    %82 = vmatprep.subr.mxu0 0.0
    %83 = vmatpush1.msra.mxu0 0.0
    %84 = vmatprep.subr.mxu0 0.0
    %85 = vmatpush1.msra.mxu0 0.0
    %86 = vmatprep.subr.mxu0 0.0
    %87 = vmatpush1.msra.mxu0 0.0
    %88 = vmatprep.subr.mxu0 0.0
    %89 = vmatpush1.msra.mxu0 0.0
    %90 = vmatprep.subr.mxu0 0.0
    %91 = vmatpush1.msra.mxu0 0.0
    %92 = vmatprep.subr.mxu0 0.0
    %93 = vmatpush1.msra.mxu0 0.0
    %94 = vmatprep.subr.mxu0 0.0
    %95 = vmatpush1.msra.mxu0 0.0
    %96 = vmatprep.subr.mxu0 0.0
    %97 = vmatpush1.msra.mxu0 0.0
    %98 = vmatprep.subr.mxu0 0.0
    %99 = vmatpush1.msra.mxu0 0.0
    %100 = vmatprep.subr.mxu0 0.0
    %101 = vmatpush1.msra.mxu0 0.0
    %102 = vmatprep.subr.mxu0 0.0
    %103 = vmatpush1.msra.mxu0 0.0
    %104 = vmatprep.mubr.f32.mxu0 0.0
    %105 = vmatmul.mubr.f32.gmra.mrb[0].mxu0 %v22
    %v106 = vpop.f32.mrb[0].mxu0
    %v107 = vadd.f32 %v23, %v106
    %v108 = vpop.f32.mrb[0].mxu0
    %109 = vdwg.mxu0
    %v110 = vld [vmem:[%s3 + $0x10] sm:$0xff]
    %v111 = vld [vmem:[%s3 + $0x18] sm:$0xff]
    %v112 = vld [vmem:[%s3 + $0x20] sm:$0xff]
    %v113 = vld [vmem:[%s3 + $0x28] sm:$0xff]
    %v114 = vld [vmem:[%s3 + $0x30] sm:$0xff]
    %v115 = vld [vmem:[%s3 + $0x38] sm:$0xff]
    %v116 = vld [vmem:[%s3 + $0x40] sm:$0xff]
    %v117 = vld [vmem:[%s3 + $0x48] sm:$0xff]
    %v118 = vld [vmem:[%s3 + $0x50] sm:$0xff]
    %v119 = vld [vmem:[%s2] sm:$0x1]
    %v120 = vld [vmem:[%s2 + $0x1] sm:$0x1]
    %v121 = vld [vmem:[%s2 + $0x2] sm:$0x1]
    %v122 = vld [vmem:[%s2 + $0x3] sm:$0x1]
    %v123 = vld [vmem:[%s2 + $0x4] sm:$0x1]
    %v124 = vld [vmem:[%s2 + $0x5] sm:$0x1]
    %v125 = vld [vmem:[%s2 + $0x6] sm:$0x1]
    %v126 = vld [vmem:[%s2 + $0x7] sm:$0x1]
    %v127 = vld [vmem:[%s2 + $0x8] sm:$0x1]
    %v128 = vld [vmem:[%s2 + $0x9] sm:$0x1]
    %v129 = vld [vmem:[%s0] sm:$0xff]
    %v130 = vld [vmem:[%s0 + $0x8] sm:$0xff]
    %v131 = vld [vmem:[%s0 + $0x10] sm:$0xff]
    %v132 = vld [vmem:[%s0 + $0x18] sm:$0xff]
    %v133 = vld [vmem:[%s0 + $0x20] sm:$0xff]
    %v134 = vld [vmem:[%s0 + $0x28] sm:$0xff]
    %v135 = vld [vmem:[%s0 + $0x30] sm:$0xff]
    %v136 = vld [vmem:[%s0 + $0x38] sm:$0xff]
    %v137 = vld [vmem:[%s0 + $0x40] sm:$0xff]
    %v138 = vld [vmem:[%s0 + $0x48] sm:$0xff]
    %v139 = vld [vmem:[%s0 + $0x50] sm:$0xff]
    %v140 = vld [vmem:[%s0 + $0x58] sm:$0xff]
    %v141 = vld [vmem:[%s0 + $0x60] sm:$0xff]
    %v142 = vld [vmem:[%s0 + $0x68] sm:$0xff]
    %v143 = vld [vmem:[%s0 + $0x70] sm:$0xff]
    %v144 = vld [vmem:[%s0 + $0x78] sm:$0xff]
    %v145 = vld [vmem:[%s0 + $0x80] sm:$0xff]
    %v146 = vld [vmem:[%s0 + $0x88] sm:$0xff]
    %v147 = vld [vmem:[%s0 + $0x90] sm:$0xff]
    %v148 = vld [vmem:[%s0 + $0x98] sm:$0xff]
    %v149 = vld [vmem:[%s0 + $0xa0] sm:$0xff]
    %v150 = vld [vmem:[%s0 + $0xa8] sm:$0xff]
    %v151 = vld [vmem:[%s0 + $0xb0] sm:$0xff]
    %v152 = vld [vmem:[%s0 + $0xb8] sm:$0xff]
    %v153 = vld [vmem:[%s0 + $0xc0] sm:$0xff]
    %v154 = vld [vmem:[%s0 + $0xc8] sm:$0xff]
    %v155 = vld [vmem:[%s0 + $0xd0] sm:$0xff]
    %v156 = vld [vmem:[%s0 + $0xd8] sm:$0xff]
    %v157 = vld [vmem:[%s0 + $0xe0] sm:$0xff]
    %v158 = vld [vmem:[%s0 + $0xe8] sm:$0xff]
    %v159 = vld [vmem:[%s0 + $0xf0] sm:$0xff]
    %v160 = vld [vmem:[%s0 + $0xf8] sm:$0xff]
    %v161 = vld [vmem:[%s0 + $0x100] sm:$0xff]
    %v162 = vld [vmem:[%s0 + $0x108] sm:$0xff]
    %v163 = vld [vmem:[%s0 + $0x110] sm:$0xff]
    %v164 = vld [vmem:[%s0 + $0x118] sm:$0xff]
    %v165 = vld [vmem:[%s0 + $0x120] sm:$0xff]
    %v166 = vld [vmem:[%s0 + $0x128] sm:$0xff]
    %v167 = vld [vmem:[%s0 + $0x130] sm:$0xff]
    %v168 = vld [vmem:[%s0 + $0x138] sm:$0xff]
    %v169 = vld [vmem:[%s0 + $0x140] sm:$0xff]
    %v170 = vld [vmem:[%s0 + $0x148] sm:$0xff]
    %v171 = vld [vmem:[%s0 + $0x150] sm:$0xff]
    %v172 = vld [vmem:[%s0 + $0x158] sm:$0xff]
    %v173 = vld [vmem:[%s0 + $0x160] sm:$0xff]
    %v174 = vld [vmem:[%s0 + $0x168] sm:$0xff]
    %v175 = vld [vmem:[%s0 + $0x170] sm:$0xff]
    %v176 = vld [vmem:[%s0 + $0x178] sm:$0xff]
    %v177 = vld [vmem:[%s1 + $0x80] sm:$0xff]
    %v178 = vld [vmem:[%s1 + $0x88] sm:$0xff]
    %v179 = vld [vmem:[%s1 + $0x90] sm:$0xff]
    %v180 = vld [vmem:[%s1 + $0x98] sm:$0xff]
    %v181 = vld [vmem:[%s1 + $0xa0] sm:$0xff]
    %v182 = vld [vmem:[%s1 + $0xa8] sm:$0xff]
    %v183 = vld [vmem:[%s1 + $0xb0] sm:$0xff]
    %v184 = vld [vmem:[%s1 + $0xb8] sm:$0xff]
    %v185 = vld [vmem:[%s1 + $0xc0] sm:$0xff]
    %v186 = vld [vmem:[%s1 + $0xc8] sm:$0xff]
    %v187 = vld [vmem:[%s1 + $0xd0] sm:$0xff]
    %v188 = vld [vmem:[%s1 + $0xd8] sm:$0xff]
    %v189 = vld [vmem:[%s1 + $0xe0] sm:$0xff]
    %v190 = vld [vmem:[%s1 + $0xe8] sm:$0xff]
    %v191 = vld [vmem:[%s1 + $0xf0] sm:$0xff]
    %v192 = vld [vmem:[%s1 + $0xf8] sm:$0xff]
    %v193 = vld [vmem:[%s1 + $0x100] sm:$0xff]
    %v194 = vld [vmem:[%s1 + $0x108] sm:$0xff]
    %v195 = vld [vmem:[%s1 + $0x110] sm:$0xff]
    %v196 = vld [vmem:[%s1 + $0x118] sm:$0xff]
    %v197 = vld [vmem:[%s1 + $0x120] sm:$0xff]
    %v198 = vld [vmem:[%s1 + $0x128] sm:$0xff]
    %v199 = vld [vmem:[%s1 + $0x130] sm:$0xff]
    %v200 = vld [vmem:[%s1 + $0x138] sm:$0xff]
    %v201 = vld [vmem:[%s1 + $0x140] sm:$0xff]
    %v202 = vld [vmem:[%s1 + $0x148] sm:$0xff]
    %v203 = vld [vmem:[%s1 + $0x150] sm:$0xff]
    %v204 = vld [vmem:[%s1 + $0x158] sm:$0xff]
    %v205 = vld [vmem:[%s1 + $0x160] sm:$0xff]
    %v206 = vld [vmem:[%s1 + $0x168] sm:$0xff]
    %v207 = vld [vmem:[%s1 + $0x170] sm:$0xff]
    %v208 = vld [vmem:[%s1 + $0x178] sm:$0xff]
    %v209 = vld [vmem:[%s1 + $0x180] sm:$0xff]
    %v210 = vld [vmem:[%s1 + $0x188] sm:$0xff]
    %v211 = vld [vmem:[%s1 + $0x190] sm:$0xff]
    %v212 = vld [vmem:[%s1 + $0x198] sm:$0xff]
    %v213 = vld [vmem:[%s1 + $0x1a0] sm:$0xff]
    %v214 = vld [vmem:[%s1 + $0x1a8] sm:$0xff]
    %v215 = vld [vmem:[%s1 + $0x1b0] sm:$0xff]
    %v216 = vld [vmem:[%s1 + $0x1b8] sm:$0xff]
    %v217 = vld [vmem:[%s1 + $0x1c0] sm:$0xff]
    %v218 = vld [vmem:[%s1 + $0x1c8] sm:$0xff]
    %v219 = vld [vmem:[%s1 + $0x1d0] sm:$0xff]
    %v220 = vld [vmem:[%s1 + $0x1d8] sm:$0xff]
    %v221 = vld [vmem:[%s1 + $0x1e0] sm:$0xff]
    %v222 = vld [vmem:[%s1 + $0x1e8] sm:$0xff]
    %v223 = vld [vmem:[%s1 + $0x1f0] sm:$0xff]
    %v224 = vld [vmem:[%s1 + $0x1f8] sm:$0xff]
    %225 = vadd.xlane.f32.xlu0 %v107
    %v226 = vpop.xlane.xlu0 %225
    %v227 = vmul.f32 %v226, 0.03125
    %v228 = vsub.f32 %v107, %v227
    %v229 = vlaneseq
    %v230 = vshrl.u32 %v229, 7
    %v231 = vsub.s32 0, %v230
    %v232 = vrot.slane %v20, %v231
    %v233 = vmul.f32 %v228, %v232
    %v234 = vmul.f32 %v233, %v233
    %235 = vadd.xlane.f32.xlu0 %v234
    %v236 = vpop.xlane.xlu0 %235
    %v237 = vmul.f32 %v236, 0.03125
    %v238 = vadd.f32 %v237, 1e-06
    %v239 = vrsqrt.pop %v238
    %v240 = vmul.f32 %v233, %v239
    %v241 = vlaneseq
    %v242 = vshrl.u32 %v241, 7
    %v243 = vsub.s32 0, %v242
    %v244 = vrot.slane %v119, %v243
    %v245 = vmul.f32 %v240, %v244
    %v246 = vlaneseq
    %v247 = vshrl.u32 %v246, 7
    %v248 = vsub.s32 0, %v247
    %v249 = vrot.slane %v120, %v248
    %v250 = vadd.f32 %v245, %v249
    %251 = vmatprep.subr.mxu0 %v130
    %252 = vmatpush1.msra.mxu0 %v129
    %253 = vmatprep.subr.mxu0 %v133
    %254 = vmatpush1.msra.mxu0 %v132
    %255 = vmatprep.subr.mxu0 %v136
    %256 = vmatpush1.msra.mxu0 %v135
    %257 = vmatprep.subr.mxu0 %v139
    %258 = vmatpush1.msra.mxu0 %v138
    %259 = vmatprep.subr.mxu0 %v142
    %260 = vmatpush1.msra.mxu0 %v141
    %261 = vmatprep.subr.mxu0 %v145
    %262 = vmatpush1.msra.mxu0 %v144
    %263 = vmatprep.subr.mxu0 %v148
    %264 = vmatpush1.msra.mxu0 %v147
    %265 = vmatprep.subr.mxu0 %v151
    %266 = vmatpush1.msra.mxu0 %v150
    %267 = vmatprep.subr.mxu0 %v154
    %268 = vmatpush1.msra.mxu0 %v153
    %269 = vmatprep.subr.mxu0 %v157
    %270 = vmatpush1.msra.mxu0 %v156
    %271 = vmatprep.subr.mxu0 %v160
    %272 = vmatpush1.msra.mxu0 %v159
    %273 = vmatprep.subr.mxu0 %v163
    %274 = vmatpush1.msra.mxu0 %v162
    %275 = vmatprep.subr.mxu0 %v166
    %276 = vmatpush1.msra.mxu0 %v165
    %277 = vmatprep.subr.mxu0 %v169
    %278 = vmatpush1.msra.mxu0 %v168
    %279 = vmatprep.subr.mxu0 %v172
    %280 = vmatpush1.msra.mxu0 %v171
    %281 = vmatprep.subr.mxu0 %v175
    %282 = vmatpush1.msra.mxu0 %v174
    %283 = vmatprep.subr.mxu0 0.0
    %284 = vmatpush1.msra.mxu0 0.0
    %285 = vmatprep.subr.mxu0 0.0
    %286 = vmatpush1.msra.mxu0 0.0
    %287 = vmatprep.subr.mxu0 0.0
    %288 = vmatpush1.msra.mxu0 0.0
    %289 = vmatprep.subr.mxu0 0.0
    %290 = vmatpush1.msra.mxu0 0.0
    %291 = vmatprep.subr.mxu0 0.0
    %292 = vmatpush1.msra.mxu0 0.0
    %293 = vmatprep.subr.mxu0 0.0
    %294 = vmatpush1.msra.mxu0 0.0
    %295 = vmatprep.subr.mxu0 0.0
    %296 = vmatpush1.msra.mxu0 0.0
    %297 = vmatprep.subr.mxu0 0.0
    %298 = vmatpush1.msra.mxu0 0.0
    %299 = vmatprep.subr.mxu0 0.0
    %300 = vmatpush1.msra.mxu0 0.0
    %301 = vmatprep.subr.mxu0 0.0
    %302 = vmatpush1.msra.mxu0 0.0
    %303 = vmatprep.subr.mxu0 0.0
    %304 = vmatpush1.msra.mxu0 0.0
    %305 = vmatprep.subr.mxu0 0.0
    %306 = vmatpush1.msra.mxu0 0.0
    %307 = vmatprep.subr.mxu0 0.0
    %308 = vmatpush1.msra.mxu0 0.0
    %309 = vmatprep.subr.mxu0 0.0
    %310 = vmatpush1.msra.mxu0 0.0
    %311 = vmatprep.subr.mxu0 0.0
    %312 = vmatpush1.msra.mxu0 0.0
    %313 = vmatprep.subr.mxu0 0.0
    %314 = vmatpush1.msra.mxu0 0.0
    %315 = vmatprep.mubr.f32.mxu0 0.0
    %316 = vmatmul.mubr.f32.gmra.mrb[0].mxu0 %v250
    %v317 = vpop.f32.mrb[0].mxu0
    %v318 = vadd.f32 0.0, %v317
    %v319 = vpop.f32.mrb[0].mxu0
    %v320 = vadd.f32 0.0, %v319
    %321 = vdwg.mxu0
    %322 = vmatprep.subr.mxu0 0.0
    %323 = vmatpush1.msra.mxu0 %v131
    %324 = vmatprep.subr.mxu0 0.0
    %325 = vmatpush1.msra.mxu0 %v134
    %326 = vmatprep.subr.mxu0 0.0
    %327 = vmatpush1.msra.mxu0 %v137
    %328 = vmatprep.subr.mxu0 0.0
    %329 = vmatpush1.msra.mxu0 %v140
    %330 = vmatprep.subr.mxu0 0.0
    %331 = vmatpush1.msra.mxu0 %v143
    %332 = vmatprep.subr.mxu0 0.0
    %333 = vmatpush1.msra.mxu0 %v146
    %334 = vmatprep.subr.mxu0 0.0
    %335 = vmatpush1.msra.mxu0 %v149
    %336 = vmatprep.subr.mxu0 0.0
    %337 = vmatpush1.msra.mxu0 %v152
    %338 = vmatprep.subr.mxu0 0.0
    %339 = vmatpush1.msra.mxu0 %v155
    %340 = vmatprep.subr.mxu0 0.0
    %341 = vmatpush1.msra.mxu0 %v158
    %342 = vmatprep.subr.mxu0 0.0
    %343 = vmatpush1.msra.mxu0 %v161
    %344 = vmatprep.subr.mxu0 0.0
    %345 = vmatpush1.msra.mxu0 %v164
    %346 = vmatprep.subr.mxu0 0.0
    %347 = vmatpush1.msra.mxu0 %v167
    %348 = vmatprep.subr.mxu0 0.0
    %349 = vmatpush1.msra.mxu0 %v170
    %350 = vmatprep.subr.mxu0 0.0
    %351 = vmatpush1.msra.mxu0 %v173
    %352 = vmatprep.subr.mxu0 0.0
    %353 = vmatpush1.msra.mxu0 %v176
    %354 = vmatprep.subr.mxu0 0.0
    %355 = vmatpush1.msra.mxu0 0.0
    %356 = vmatprep.subr.mxu0 0.0
    %357 = vmatpush1.msra.mxu0 0.0
    %358 = vmatprep.subr.mxu0 0.0
    %359 = vmatpush1.msra.mxu0 0.0
    %360 = vmatprep.subr.mxu0 0.0
    %361 = vmatpush1.msra.mxu0 0.0
    %362 = vmatprep.subr.mxu0 0.0
    %363 = vmatpush1.msra.mxu0 0.0
    %364 = vmatprep.subr.mxu0 0.0
    %365 = vmatpush1.msra.mxu0 0.0
    %366 = vmatprep.subr.mxu0 0.0
    %367 = vmatpush1.msra.mxu0 0.0
    %368 = vmatprep.subr.mxu0 0.0
    %369 = vmatpush1.msra.mxu0 0.0
    %370 = vmatprep.subr.mxu0 0.0
    %371 = vmatpush1.msra.mxu0 0.0
    %372 = vmatprep.subr.mxu0 0.0
    %373 = vmatpush1.msra.mxu0 0.0
    %374 = vmatprep.subr.mxu0 0.0
    %375 = vmatpush1.msra.mxu0 0.0
    %376 = vmatprep.subr.mxu0 0.0
    %377 = vmatpush1.msra.mxu0 0.0
    %378 = vmatprep.subr.mxu0 0.0
    %379 = vmatpush1.msra.mxu0 0.0
    %380 = vmatprep.subr.mxu0 0.0
    %381 = vmatpush1.msra.mxu0 0.0
    %382 = vmatprep.subr.mxu0 0.0
    %383 = vmatpush1.msra.mxu0 0.0
    %384 = vmatprep.subr.mxu0 0.0
    %385 = vmatpush1.msra.mxu0 0.0
    %386 = vmatprep.mubr.f32.mxu0 0.0
    %387 = vmatmul.mubr.f32.gmra.mrb[0].mxu0 %v250
    %v388 = vpop.f32.mrb[0].mxu0
    %v389 = vadd.f32 0.0, %v388
    %v390 = vpop.f32.mrb[0].mxu0
    %391 = vdwg.mxu0
    %v392 = vlaneseq
    %v393 = vshrl.u32 %v392, 7
    %v394 = vsub.s32 0, %v393
    %v395 = vrot.slane %v121, %v394
    %v396 = vadd.f32 %v318, %v395
    %v397 = vlaneseq
    %v398 = vshrl.u32 %v397, 7
    %v399 = vsub.s32 0, %v398
    %v400 = vrot.slane %v122, %v399
    %v401 = vadd.f32 %v320, %v400
    %v402 = vlaneseq
    %v403 = vshrl.u32 %v402, 7
    %v404 = vsub.s32 0, %v403
    %v405 = vrot.slane %v123, %v404
    %v406 = vadd.f32 %v389, %v405
    %v407 = vmul.f32 %v396, %v114
    %v408 = vmul.f32 %v396, %v115
    %v409 = vmul.f32 %v396, %v116
    %v410 = vmul.f32 %v396, %v117
    %411 = vmatprep.subr.mxu0 0.0
    %412 = vmatpush1.xpose.msra.mxu0 %v401
    %413 = vmatprep.subr.mxu0 0.0
    %414 = vmatpush1.xpose.msra.mxu0 0.0
    %415 = vmatprep.subr.mxu0 0.0
    %416 = vmatpush1.xpose.msra.mxu0 0.0
    %417 = vmatprep.subr.mxu0 0.0
    %418 = vmatpush1.xpose.msra.mxu0 0.0
    %419 = vmatprep.subr.mxu0 0.0
    %420 = vmatpush1.xpose.msra.mxu0 0.0
    %421 = vmatprep.subr.mxu0 0.0
    %422 = vmatpush1.xpose.msra.mxu0 0.0
    %423 = vmatprep.subr.mxu0 0.0
    %424 = vmatpush1.xpose.msra.mxu0 0.0
    %425 = vmatprep.subr.mxu0 0.0
    %426 = vmatpush1.xpose.msra.mxu0 0.0
    %427 = vmatprep.subr.mxu0 0.0
    %428 = vmatpush1.xpose.msra.mxu0 0.0
    %429 = vmatprep.subr.mxu0 0.0
    %430 = vmatpush1.xpose.msra.mxu0 0.0
    %431 = vmatprep.subr.mxu0 0.0
    %432 = vmatpush1.xpose.msra.mxu0 0.0
    %433 = vmatprep.subr.mxu0 0.0
    %434 = vmatpush1.xpose.msra.mxu0 0.0
    %435 = vmatprep.subr.mxu0 0.0
    %436 = vmatpush1.xpose.msra.mxu0 0.0
    %437 = vmatprep.subr.mxu0 0.0
    %438 = vmatpush1.xpose.msra.mxu0 0.0
    %439 = vmatprep.subr.mxu0 0.0
    %440 = vmatpush1.xpose.msra.mxu0 0.0
    %441 = vmatprep.subr.mxu0 0.0
    %442 = vmatpush1.xpose.msra.mxu0 0.0
    %443 = vmatprep.subr.mxu0 0.0
    %444 = vmatpush1.xpose.msra.mxu0 0.0
    %445 = vmatprep.subr.mxu0 0.0
    %446 = vmatpush1.xpose.msra.mxu0 0.0
    %447 = vmatprep.subr.mxu0 0.0
    %448 = vmatpush1.xpose.msra.mxu0 0.0
    %449 = vmatprep.subr.mxu0 0.0
    %450 = vmatpush1.xpose.msra.mxu0 0.0
    %451 = vmatprep.subr.mxu0 0.0
    %452 = vmatpush1.xpose.msra.mxu0 0.0
    %453 = vmatprep.subr.mxu0 0.0
    %454 = vmatpush1.xpose.msra.mxu0 0.0
    %455 = vmatprep.subr.mxu0 0.0
    %456 = vmatpush1.xpose.msra.mxu0 0.0
    %457 = vmatprep.subr.mxu0 0.0
    %458 = vmatpush1.xpose.msra.mxu0 0.0
    %459 = vmatprep.subr.mxu0 0.0
    %460 = vmatpush1.xpose.msra.mxu0 0.0
    %461 = vmatprep.subr.mxu0 0.0
    %462 = vmatpush1.xpose.msra.mxu0 0.0
    %463 = vmatprep.subr.mxu0 0.0
    %464 = vmatpush1.xpose.msra.mxu0 0.0
    %465 = vmatprep.subr.mxu0 0.0
    %466 = vmatpush1.xpose.msra.mxu0 0.0
    %467 = vmatprep.subr.mxu0 0.0
    %468 = vmatpush1.xpose.msra.mxu0 0.0
    %469 = vmatprep.subr.mxu0 0.0
    %470 = vmatpush1.xpose.msra.mxu0 0.0
    %471 = vmatprep.subr.mxu0 0.0
    %472 = vmatpush1.xpose.msra.mxu0 0.0
    %473 = vmatprep.subr.mxu0 0.0
    %474 = vmatpush1.xpose.msra.mxu0 0.0
    %475 = vmatprep.mubr.f32.mxu0 0.0
    %476 = vmatmul.mubr.f32.gmra.mrb[0].mxu0 %v407
    %v477 = vpop.f32.mrb[0].mxu0
    %v478 = vadd.f32 %v110, %v477
    %v479 = vpop.f32.mrb[0].mxu0
    %480 = vmatprep.mubr.f32.mxu0 0.0
    %481 = vmatmul.mubr.f32.gmra.mrb[0].mxu0 %v408
    %v482 = vpop.f32.mrb[0].mxu0
    %v483 = vadd.f32 %v111, %v482
    %v484 = vpop.f32.mrb[0].mxu0
    %485 = vmatprep.mubr.f32.mxu0 0.0
    %486 = vmatmul.mubr.f32.gmra.mrb[0].mxu0 %v409
    %v487 = vpop.f32.mrb[0].mxu0
    %v488 = vadd.f32 %v112, %v487
    %v489 = vpop.f32.mrb[0].mxu0
    %490 = vmatprep.mubr.f32.mxu0 0.0
    %491 = vmatmul.mubr.f32.gmra.mrb[0].mxu0 %v410
    %v492 = vpop.f32.mrb[0].mxu0
    %v493 = vadd.f32 %v113, %v492
    %v494 = vpop.f32.mrb[0].mxu0
    %495 = vdwg.mxu0
    %vm496 = vcmask 64512
    %v497 = vsel %vm496, %v478, -inf
    %498 = vmax.xlane.f32.xlu0 %v497
    %v499 = vpop.xlane.xlu0 %498
    %v500 = vsel %vm496, %v483, -inf
    %501 = vmax.xlane.f32.xlu0 %v500
    %v502 = vpop.xlane.xlu0 %501
    %v503 = vsel %vm496, %v488, -inf
    %504 = vmax.xlane.f32.xlu0 %v503
    %v505 = vpop.xlane.xlu0 %504
    %v506 = vsel %vm496, %v493, -inf
    %507 = vmax.xlane.f32.xlu0 %v506
    %v508 = vpop.xlane.xlu0 %507
    %v509 = vsub.f32 %v478, %v499
    %v510 = vsub.f32 %v483, %v502
    %v511 = vsub.f32 %v488, %v505
    %v512 = vsub.f32 %v493, %v508
    %v513 = vmul.f32 %v509, 1.442695
    %v514 = vpow.pop %v513
    %v515 = vmul.f32 %v510, 1.442695
    %v516 = vpow.pop %v515
    %v517 = vmul.f32 %v511, 1.442695
    %v518 = vpow.pop %v517
    %v519 = vmul.f32 %v512, 1.442695
    %v520 = vpow.pop %v519
    %v521 = vsel %vm496, %v514, 0.0
    %522 = vadd.xlane.f32.xlu0 %v521
    %v523 = vpop.xlane.xlu0 %522
    %v524 = vsel %vm496, %v516, 0.0
    %525 = vadd.xlane.f32.xlu0 %v524
    %v526 = vpop.xlane.xlu0 %525
    %v527 = vsel %vm496, %v518, 0.0
    %528 = vadd.xlane.f32.xlu0 %v527
    %v529 = vpop.xlane.xlu0 %528
    %v530 = vsel %vm496, %v520, 0.0
    %531 = vadd.xlane.f32.xlu0 %v530
    %v532 = vpop.xlane.xlu0 %531
    %v533 = vrcp.pop %v523
    %v534 = vmul.f32 %v514, %v533
    %v535 = vrcp.pop %v526
    %v536 = vmul.f32 %v516, %v535
    %v537 = vrcp.pop %v529
    %v538 = vmul.f32 %v518, %v537
    %v539 = vrcp.pop %v532
    %v540 = vmul.f32 %v520, %v539
    %v542 = vsel %vm496, %v534, 0
    %v545 = vsel %vm496, %v536, 0
    %v548 = vsel %vm496, %v538, 0
    %v551 = vsel %vm496, %v540, 0
    %553 = vmatprep.subr.mxu0 0.0
    %554 = vmatpush1.msra.mxu0 %v406
    %555 = vmatprep.subr.mxu0 0.0
    %556 = vmatpush1.msra.mxu0 0.0
    %557 = vmatprep.subr.mxu0 0.0
    %558 = vmatpush1.msra.mxu0 0.0
    %559 = vmatprep.subr.mxu0 0.0
    %560 = vmatpush1.msra.mxu0 0.0
    %561 = vmatprep.subr.mxu0 0.0
    %562 = vmatpush1.msra.mxu0 0.0
    %563 = vmatprep.subr.mxu0 0.0
    %564 = vmatpush1.msra.mxu0 0.0
    %565 = vmatprep.subr.mxu0 0.0
    %566 = vmatpush1.msra.mxu0 0.0
    %567 = vmatprep.subr.mxu0 0.0
    %568 = vmatpush1.msra.mxu0 0.0
    %569 = vmatprep.subr.mxu0 0.0
    %570 = vmatpush1.msra.mxu0 0.0
    %571 = vmatprep.subr.mxu0 0.0
    %572 = vmatpush1.msra.mxu0 0.0
    %573 = vmatprep.subr.mxu0 0.0
    %574 = vmatpush1.msra.mxu0 0.0
    %575 = vmatprep.subr.mxu0 0.0
    %576 = vmatpush1.msra.mxu0 0.0
    %577 = vmatprep.subr.mxu0 0.0
    %578 = vmatpush1.msra.mxu0 0.0
    %579 = vmatprep.subr.mxu0 0.0
    %580 = vmatpush1.msra.mxu0 0.0
    %581 = vmatprep.subr.mxu0 0.0
    %582 = vmatpush1.msra.mxu0 0.0
    %583 = vmatprep.subr.mxu0 0.0
    %584 = vmatpush1.msra.mxu0 0.0
    %585 = vmatprep.subr.mxu0 0.0
    %586 = vmatpush1.msra.mxu0 0.0
    %587 = vmatprep.subr.mxu0 0.0
    %588 = vmatpush1.msra.mxu0 0.0
    %589 = vmatprep.subr.mxu0 0.0
    %590 = vmatpush1.msra.mxu0 0.0
    %591 = vmatprep.subr.mxu0 0.0
    %592 = vmatpush1.msra.mxu0 0.0
    %593 = vmatprep.subr.mxu0 0.0
    %594 = vmatpush1.msra.mxu0 0.0
    %595 = vmatprep.subr.mxu0 0.0
    %596 = vmatpush1.msra.mxu0 0.0
    %597 = vmatprep.subr.mxu0 0.0
    %598 = vmatpush1.msra.mxu0 0.0
    %599 = vmatprep.subr.mxu0 0.0
    %600 = vmatpush1.msra.mxu0 0.0
    %601 = vmatprep.subr.mxu0 0.0
    %602 = vmatpush1.msra.mxu0 0.0
    %603 = vmatprep.subr.mxu0 0.0
    %604 = vmatpush1.msra.mxu0 0.0
    %605 = vmatprep.subr.mxu0 0.0
    %606 = vmatpush1.msra.mxu0 0.0
    %607 = vmatprep.subr.mxu0 0.0
    %608 = vmatpush1.msra.mxu0 0.0
    %609 = vmatprep.subr.mxu0 0.0
    %610 = vmatpush1.msra.mxu0 0.0
    %611 = vmatprep.subr.mxu0 0.0
    %612 = vmatpush1.msra.mxu0 0.0
    %613 = vmatprep.subr.mxu0 0.0
    %614 = vmatpush1.msra.mxu0 0.0
    %615 = vmatprep.subr.mxu0 0.0
    %616 = vmatpush1.msra.mxu0 0.0
    %617 = vmatprep.mubr.f32.mxu0 0.0
    %618 = vmatmul.mubr.f32.gmra.mrb[0].mxu0 %v542
    %v619 = vpop.f32.mrb[0].mxu0
    %v620 = vadd.f32 0.0, %v619
    %v621 = vpop.f32.mrb[0].mxu0
    %622 = vmatprep.mubr.f32.mxu0 0.0
    %623 = vmatmul.mubr.f32.gmra.mrb[0].mxu0 %v545
    %v624 = vpop.f32.mrb[0].mxu0
    %v625 = vadd.f32 0.0, %v624
    %v626 = vpop.f32.mrb[0].mxu0
    %627 = vmatprep.mubr.f32.mxu0 0.0
    %628 = vmatmul.mubr.f32.gmra.mrb[0].mxu0 %v548
    %v629 = vpop.f32.mrb[0].mxu0
    %v630 = vadd.f32 0.0, %v629
    %v631 = vpop.f32.mrb[0].mxu0
    %632 = vmatprep.mubr.f32.mxu0 0.0
    %633 = vmatmul.mubr.f32.gmra.mrb[0].mxu0 %v551
    %v634 = vpop.f32.mrb[0].mxu0
    %v635 = vadd.f32 0.0, %v634
    %v636 = vpop.f32.mrb[0].mxu0
    %637 = vdwg.mxu0
    %v638 = vmul.f32 %v620, %v114
    %v639 = vmul.f32 %v625, %v115
    %v640 = vmul.f32 %v630, %v116
    %v641 = vmul.f32 %v635, %v117
    %vm642 = vcmask 261120
    %v644 = vsel %vm642, %v118, 0
    %646 = vmatprep.subr.mxu0 0.0
    %647 = vmatpush1.msra.mxu0 %v638
    %648 = vmatprep.subr.mxu0 0.0
    %649 = vmatpush1.msra.mxu0 %v639
    %650 = vmatprep.subr.mxu0 0.0
    %651 = vmatpush1.msra.mxu0 %v640
    %652 = vmatprep.subr.mxu0 0.0
    %653 = vmatpush1.msra.mxu0 %v641
    %654 = vmatprep.subr.mxu0 0.0
    %655 = vmatpush1.msra.mxu0 0.0
    %656 = vmatprep.subr.mxu0 0.0
    %657 = vmatpush1.msra.mxu0 0.0
    %658 = vmatprep.subr.mxu0 0.0
    %659 = vmatpush1.msra.mxu0 0.0
    %660 = vmatprep.subr.mxu0 0.0
    %661 = vmatpush1.msra.mxu0 0.0
    %662 = vmatprep.subr.mxu0 0.0
    %663 = vmatpush1.msra.mxu0 0.0
    %664 = vmatprep.subr.mxu0 0.0
    %665 = vmatpush1.msra.mxu0 0.0
    %666 = vmatprep.subr.mxu0 0.0
    %667 = vmatpush1.msra.mxu0 0.0
    %668 = vmatprep.subr.mxu0 0.0
    %669 = vmatpush1.msra.mxu0 0.0
    %670 = vmatprep.subr.mxu0 0.0
    %671 = vmatpush1.msra.mxu0 0.0
    %672 = vmatprep.subr.mxu0 0.0
    %673 = vmatpush1.msra.mxu0 0.0
    %674 = vmatprep.subr.mxu0 0.0
    %675 = vmatpush1.msra.mxu0 0.0
    %676 = vmatprep.subr.mxu0 0.0
    %677 = vmatpush1.msra.mxu0 0.0
    %678 = vmatprep.subr.mxu0 0.0
    %679 = vmatpush1.msra.mxu0 0.0
    %680 = vmatprep.subr.mxu0 0.0
    %681 = vmatpush1.msra.mxu0 0.0
    %682 = vmatprep.subr.mxu0 0.0
    %683 = vmatpush1.msra.mxu0 0.0
    %684 = vmatprep.subr.mxu0 0.0
    %685 = vmatpush1.msra.mxu0 0.0
    %686 = vmatprep.subr.mxu0 0.0
    %687 = vmatpush1.msra.mxu0 0.0
    %688 = vmatprep.subr.mxu0 0.0
    %689 = vmatpush1.msra.mxu0 0.0
    %690 = vmatprep.subr.mxu0 0.0
    %691 = vmatpush1.msra.mxu0 0.0
    %692 = vmatprep.subr.mxu0 0.0
    %693 = vmatpush1.msra.mxu0 0.0
    %694 = vmatprep.subr.mxu0 0.0
    %695 = vmatpush1.msra.mxu0 0.0
    %696 = vmatprep.subr.mxu0 0.0
    %697 = vmatpush1.msra.mxu0 0.0
    %698 = vmatprep.subr.mxu0 0.0
    %699 = vmatpush1.msra.mxu0 0.0
    %700 = vmatprep.subr.mxu0 0.0
    %701 = vmatpush1.msra.mxu0 0.0
    %702 = vmatprep.subr.mxu0 0.0
    %703 = vmatpush1.msra.mxu0 0.0
    %704 = vmatprep.subr.mxu0 0.0
    %705 = vmatpush1.msra.mxu0 0.0
    %706 = vmatprep.subr.mxu0 0.0
    %707 = vmatpush1.msra.mxu0 0.0
    %708 = vmatprep.subr.mxu0 0.0
    %709 = vmatpush1.msra.mxu0 0.0
    %710 = vmatprep.mubr.f32.mxu0 0.0
    %711 = vmatmul.mubr.f32.gmra.mrb[0].mxu0 %v644
    %v712 = vpop.f32.mrb[0].mxu0
    %v713 = vadd.f32 0.0, %v712
    %v714 = vpop.f32.mrb[0].mxu0
    %715 = vdwg.mxu0
    %716 = vmatprep.subr.mxu0 0.0
    %717 = vmatpush1.msra.mxu0 %v177
    %718 = vmatprep.subr.mxu0 0.0
    %719 = vmatpush1.msra.mxu0 %v178
    %720 = vmatprep.subr.mxu0 0.0
    %721 = vmatpush1.msra.mxu0 %v179
    %722 = vmatprep.subr.mxu0 0.0
    %723 = vmatpush1.msra.mxu0 %v180
    %724 = vmatprep.subr.mxu0 0.0
    %725 = vmatpush1.msra.mxu0 %v181
    %726 = vmatprep.subr.mxu0 0.0
    %727 = vmatpush1.msra.mxu0 %v182
    %728 = vmatprep.subr.mxu0 0.0
    %729 = vmatpush1.msra.mxu0 %v183
    %730 = vmatprep.subr.mxu0 0.0
    %731 = vmatpush1.msra.mxu0 %v184
    %732 = vmatprep.subr.mxu0 0.0
    %733 = vmatpush1.msra.mxu0 %v185
    %734 = vmatprep.subr.mxu0 0.0
    %735 = vmatpush1.msra.mxu0 %v186
    %736 = vmatprep.subr.mxu0 0.0
    %737 = vmatpush1.msra.mxu0 %v187
    %738 = vmatprep.subr.mxu0 0.0
    %739 = vmatpush1.msra.mxu0 %v188
    %740 = vmatprep.subr.mxu0 0.0
    %741 = vmatpush1.msra.mxu0 %v189
    %742 = vmatprep.subr.mxu0 0.0
    %743 = vmatpush1.msra.mxu0 %v190
    %744 = vmatprep.subr.mxu0 0.0
    %745 = vmatpush1.msra.mxu0 %v191
    %746 = vmatprep.subr.mxu0 0.0
    %747 = vmatpush1.msra.mxu0 %v192
    %748 = vmatprep.subr.mxu0 0.0
    %749 = vmatpush1.msra.mxu0 0.0
    %750 = vmatprep.subr.mxu0 0.0
    %751 = vmatpush1.msra.mxu0 0.0
    %752 = vmatprep.subr.mxu0 0.0
    %753 = vmatpush1.msra.mxu0 0.0
    %754 = vmatprep.subr.mxu0 0.0
    %755 = vmatpush1.msra.mxu0 0.0
    %756 = vmatprep.subr.mxu0 0.0
    %757 = vmatpush1.msra.mxu0 0.0
    %758 = vmatprep.subr.mxu0 0.0
    %759 = vmatpush1.msra.mxu0 0.0
    %760 = vmatprep.subr.mxu0 0.0
    %761 = vmatpush1.msra.mxu0 0.0
    %762 = vmatprep.subr.mxu0 0.0
    %763 = vmatpush1.msra.mxu0 0.0
    %764 = vmatprep.subr.mxu0 0.0
    %765 = vmatpush1.msra.mxu0 0.0
    %766 = vmatprep.subr.mxu0 0.0
    %767 = vmatpush1.msra.mxu0 0.0
    %768 = vmatprep.subr.mxu0 0.0
    %769 = vmatpush1.msra.mxu0 0.0
    %770 = vmatprep.subr.mxu0 0.0
    %771 = vmatpush1.msra.mxu0 0.0
    %772 = vmatprep.subr.mxu0 0.0
    %773 = vmatpush1.msra.mxu0 0.0
    %774 = vmatprep.subr.mxu0 0.0
    %775 = vmatpush1.msra.mxu0 0.0
    %776 = vmatprep.subr.mxu0 0.0
    %777 = vmatpush1.msra.mxu0 0.0
    %778 = vmatprep.subr.mxu0 0.0
    %779 = vmatpush1.msra.mxu0 0.0
    %780 = vmatprep.mubr.f32.mxu0 0.0
    %781 = vmatmul.mubr.f32.gmra.mrb[0].mxu0 %v713
    %v782 = vpop.f32.mrb[0].mxu0
    %v783 = vadd.f32 0.0, %v782
    %v784 = vpop.f32.mrb[0].mxu0
    %785 = vdwg.mxu0
    %v786 = vadd.f32 %v107, %v783
    %v787 = vlaneseq
    %v788 = vshrl.u32 %v787, 7
    %v789 = vsub.s32 0, %v788
    %v790 = vrot.slane %v124, %v789
    %v791 = vadd.f32 %v786, %v790
    %792 = vadd.xlane.f32.xlu0 %v791
    %v793 = vpop.xlane.xlu0 %792
    %v794 = vmul.f32 %v793, 0.03125
    %v795 = vsub.f32 %v791, %v794
    %v796 = vmul.f32 %v795, %v232
    %v797 = vmul.f32 %v796, %v796
    %798 = vadd.xlane.f32.xlu0 %v797
    %v799 = vpop.xlane.xlu0 %798
    %v800 = vmul.f32 %v799, 0.03125
    %v801 = vadd.f32 %v800, 1e-06
    %v802 = vrsqrt.pop %v801
    %v803 = vmul.f32 %v796, %v802
    %v804 = vlaneseq
    %v805 = vshrl.u32 %v804, 7
    %v806 = vsub.s32 0, %v805
    %v807 = vrot.slane %v125, %v806
    %v808 = vmul.f32 %v803, %v807
    %v809 = vlaneseq
    %v810 = vshrl.u32 %v809, 7
    %v811 = vsub.s32 0, %v810
    %v812 = vrot.slane %v126, %v811
    %v813 = vadd.f32 %v808, %v812
    %v814 = vlaneseq
    %v815 = vshrl.u32 %v814, 7
    %v816 = vsub.s32 0, %v815
    %v817 = vrot.slane %v127, %v816
    %818 = vmatprep.subr.mxu0 0.0
    %819 = vmatpush1.msra.mxu0 %v193
    %820 = vmatprep.subr.mxu0 0.0
    %821 = vmatpush1.msra.mxu0 %v194
    %822 = vmatprep.subr.mxu0 0.0
    %823 = vmatpush1.msra.mxu0 %v195
    %824 = vmatprep.subr.mxu0 0.0
    %825 = vmatpush1.msra.mxu0 %v196
    %826 = vmatprep.subr.mxu0 0.0
    %827 = vmatpush1.msra.mxu0 %v197
    %828 = vmatprep.subr.mxu0 0.0
    %829 = vmatpush1.msra.mxu0 %v198
    %830 = vmatprep.subr.mxu0 0.0
    %831 = vmatpush1.msra.mxu0 %v199
    %832 = vmatprep.subr.mxu0 0.0
    %833 = vmatpush1.msra.mxu0 %v200
    %834 = vmatprep.subr.mxu0 0.0
    %835 = vmatpush1.msra.mxu0 %v201
    %836 = vmatprep.subr.mxu0 0.0
    %837 = vmatpush1.msra.mxu0 %v202
    %838 = vmatprep.subr.mxu0 0.0
    %839 = vmatpush1.msra.mxu0 %v203
    %840 = vmatprep.subr.mxu0 0.0
    %841 = vmatpush1.msra.mxu0 %v204
    %842 = vmatprep.subr.mxu0 0.0
    %843 = vmatpush1.msra.mxu0 %v205
    %844 = vmatprep.subr.mxu0 0.0
    %845 = vmatpush1.msra.mxu0 %v206
    %846 = vmatprep.subr.mxu0 0.0
    %847 = vmatpush1.msra.mxu0 %v207
    %848 = vmatprep.subr.mxu0 0.0
    %849 = vmatpush1.msra.mxu0 %v208
    %850 = vmatprep.subr.mxu0 0.0
    %851 = vmatpush1.msra.mxu0 0.0
    %852 = vmatprep.subr.mxu0 0.0
    %853 = vmatpush1.msra.mxu0 0.0
    %854 = vmatprep.subr.mxu0 0.0
    %855 = vmatpush1.msra.mxu0 0.0
    %856 = vmatprep.subr.mxu0 0.0
    %857 = vmatpush1.msra.mxu0 0.0
    %858 = vmatprep.subr.mxu0 0.0
    %859 = vmatpush1.msra.mxu0 0.0
    %860 = vmatprep.subr.mxu0 0.0
    %861 = vmatpush1.msra.mxu0 0.0
    %862 = vmatprep.subr.mxu0 0.0
    %863 = vmatpush1.msra.mxu0 0.0
    %864 = vmatprep.subr.mxu0 0.0
    %865 = vmatpush1.msra.mxu0 0.0
    %866 = vmatprep.subr.mxu0 0.0
    %867 = vmatpush1.msra.mxu0 0.0
    %868 = vmatprep.subr.mxu0 0.0
    %869 = vmatpush1.msra.mxu0 0.0
    %870 = vmatprep.subr.mxu0 0.0
    %871 = vmatpush1.msra.mxu0 0.0
    %872 = vmatprep.subr.mxu0 0.0
    %873 = vmatpush1.msra.mxu0 0.0
    %874 = vmatprep.subr.mxu0 0.0
    %875 = vmatpush1.msra.mxu0 0.0
    %876 = vmatprep.subr.mxu0 0.0
    %877 = vmatpush1.msra.mxu0 0.0
    %878 = vmatprep.subr.mxu0 0.0
    %879 = vmatpush1.msra.mxu0 0.0
    %880 = vmatprep.subr.mxu0 0.0
    %881 = vmatpush1.msra.mxu0 0.0
    %882 = vmatprep.mubr.f32.mxu0 0.0
    %883 = vmatmul.mubr.f32.gmra.mrb[0].mxu0 %v813
    %v884 = vpop.f32.mrb[0].mxu0
    %v885 = vadd.f32 %v817, %v884
    %v886 = vpop.f32.mrb[0].mxu0
    %887 = vdwg.mxu0
    %v888 = vmul.f32 %v885, 0.5
    %v889 = vmul.f32 %v885, 0.70710677
    %v890 = verf.f32.pop %v889
    %v891 = vadd.f32 %v890, 1.0
    %v892 = vmul.f32 %v888, %v891
    %893 = vmatprep.subr.mxu0 0.0
    %894 = vmatpush1.msra.mxu0 %v209
    %895 = vmatprep.subr.mxu0 0.0
    %896 = vmatpush1.msra.mxu0 %v210
    %897 = vmatprep.subr.mxu0 0.0
    %898 = vmatpush1.msra.mxu0 %v211
    %899 = vmatprep.subr.mxu0 0.0
    %900 = vmatpush1.msra.mxu0 %v212
    %901 = vmatprep.subr.mxu0 0.0
    %902 = vmatpush1.msra.mxu0 %v213
    %903 = vmatprep.subr.mxu0 0.0
    %904 = vmatpush1.msra.mxu0 %v214
    %905 = vmatprep.subr.mxu0 0.0
    %906 = vmatpush1.msra.mxu0 %v215
    %907 = vmatprep.subr.mxu0 0.0
    %908 = vmatpush1.msra.mxu0 %v216
    %909 = vmatprep.subr.mxu0 0.0
    %910 = vmatpush1.msra.mxu0 %v217
    %911 = vmatprep.subr.mxu0 0.0
    %912 = vmatpush1.msra.mxu0 %v218
    %913 = vmatprep.subr.mxu0 0.0
    %914 = vmatpush1.msra.mxu0 %v219
    %915 = vmatprep.subr.mxu0 0.0
    %916 = vmatpush1.msra.mxu0 %v220
    %917 = vmatprep.subr.mxu0 0.0
    %918 = vmatpush1.msra.mxu0 %v221
    %919 = vmatprep.subr.mxu0 0.0
    %920 = vmatpush1.msra.mxu0 %v222
    %921 = vmatprep.subr.mxu0 0.0
    %922 = vmatpush1.msra.mxu0 %v223
    %923 = vmatprep.subr.mxu0 0.0
    %924 = vmatpush1.msra.mxu0 %v224
    %925 = vmatprep.subr.mxu0 0.0
    %926 = vmatpush1.msra.mxu0 0.0
    %927 = vmatprep.subr.mxu0 0.0
    %928 = vmatpush1.msra.mxu0 0.0
    %929 = vmatprep.subr.mxu0 0.0
    %930 = vmatpush1.msra.mxu0 0.0
    %931 = vmatprep.subr.mxu0 0.0
    %932 = vmatpush1.msra.mxu0 0.0
    %933 = vmatprep.subr.mxu0 0.0
    %934 = vmatpush1.msra.mxu0 0.0
    %935 = vmatprep.subr.mxu0 0.0
    %936 = vmatpush1.msra.mxu0 0.0
    %937 = vmatprep.subr.mxu0 0.0
    %938 = vmatpush1.msra.mxu0 0.0
    %939 = vmatprep.subr.mxu0 0.0
    %940 = vmatpush1.msra.mxu0 0.0
    %941 = vmatprep.subr.mxu0 0.0
    %942 = vmatpush1.msra.mxu0 0.0
    %943 = vmatprep.subr.mxu0 0.0
    %944 = vmatpush1.msra.mxu0 0.0
    %945 = vmatprep.subr.mxu0 0.0
    %946 = vmatpush1.msra.mxu0 0.0
    %947 = vmatprep.subr.mxu0 0.0
    %948 = vmatpush1.msra.mxu0 0.0
    %949 = vmatprep.subr.mxu0 0.0
    %950 = vmatpush1.msra.mxu0 0.0
    %951 = vmatprep.subr.mxu0 0.0
    %952 = vmatpush1.msra.mxu0 0.0
    %953 = vmatprep.subr.mxu0 0.0
    %954 = vmatpush1.msra.mxu0 0.0
    %955 = vmatprep.subr.mxu0 0.0
    %956 = vmatpush1.msra.mxu0 0.0
    %957 = vmatprep.mubr.f32.mxu0 0.0
    %958 = vmatmul.mubr.f32.gmra.mrb[0].mxu0 %v892
    %v959 = vpop.f32.mrb[0].mxu0
    %v960 = vadd.f32 0.0, %v959
    %v961 = vpop.f32.mrb[0].mxu0
    %962 = vdwg.mxu0
    %v963 = vadd.f32 %v791, %v960
    %v964 = vlaneseq
    %v965 = vshrl.u32 %v964, 7
    %v966 = vsub.s32 0, %v965
    %v967 = vrot.slane %v128, %v966
    %v968 = vadd.f32 %v963, %v967
    %v969 = vld [vmem:[%s2 + $0xa] sm:$0x1]
    %v970 = vld [vmem:[%s2 + $0xb] sm:$0x1]
    %v971 = vld [vmem:[%s2 + $0xc] sm:$0x1]
    %v972 = vld [vmem:[%s2 + $0xd] sm:$0x1]
    %v973 = vld [vmem:[%s2 + $0xe] sm:$0x1]
    %v974 = vld [vmem:[%s2 + $0xf] sm:$0x1]
    %v975 = vld [vmem:[%s2 + $0x10] sm:$0x1]
    %v976 = vld [vmem:[%s2 + $0x11] sm:$0x1]
    %v977 = vld [vmem:[%s2 + $0x12] sm:$0x1]
    %v978 = vld [vmem:[%s2 + $0x13] sm:$0x1]
    %v979 = vld [vmem:[%s0 + $0x180] sm:$0xff]
    %v980 = vld [vmem:[%s0 + $0x188] sm:$0xff]
    %v981 = vld [vmem:[%s0 + $0x190] sm:$0xff]
    %v982 = vld [vmem:[%s0 + $0x198] sm:$0xff]
    %v983 = vld [vmem:[%s0 + $0x1a0] sm:$0xff]
    %v984 = vld [vmem:[%s0 + $0x1a8] sm:$0xff]
    %v985 = vld [vmem:[%s0 + $0x1b0] sm:$0xff]
    %v986 = vld [vmem:[%s0 + $0x1b8] sm:$0xff]
    %v987 = vld [vmem:[%s0 + $0x1c0] sm:$0xff]
    %v988 = vld [vmem:[%s0 + $0x1c8] sm:$0xff]
    %v989 = vld [vmem:[%s0 + $0x1d0] sm:$0xff]
    %v990 = vld [vmem:[%s0 + $0x1d8] sm:$0xff]
    %v991 = vld [vmem:[%s0 + $0x1e0] sm:$0xff]
    %v992 = vld [vmem:[%s0 + $0x1e8] sm:$0xff]
    %v993 = vld [vmem:[%s0 + $0x1f0] sm:$0xff]
    %v994 = vld [vmem:[%s0 + $0x1f8] sm:$0xff]
    %v995 = vld [vmem:[%s0 + $0x200] sm:$0xff]
    %v996 = vld [vmem:[%s0 + $0x208] sm:$0xff]
    %v997 = vld [vmem:[%s0 + $0x210] sm:$0xff]
    %v998 = vld [vmem:[%s0 + $0x218] sm:$0xff]
    %v999 = vld [vmem:[%s0 + $0x220] sm:$0xff]
    %v1000 = vld [vmem:[%s0 + $0x228] sm:$0xff]
    %v1001 = vld [vmem:[%s0 + $0x230] sm:$0xff]
    %v1002 = vld [vmem:[%s0 + $0x238] sm:$0xff]
    %v1003 = vld [vmem:[%s0 + $0x240] sm:$0xff]
    %v1004 = vld [vmem:[%s0 + $0x248] sm:$0xff]
    %v1005 = vld [vmem:[%s0 + $0x250] sm:$0xff]
    %v1006 = vld [vmem:[%s0 + $0x258] sm:$0xff]
    %v1007 = vld [vmem:[%s0 + $0x260] sm:$0xff]
    %v1008 = vld [vmem:[%s0 + $0x268] sm:$0xff]
    %v1009 = vld [vmem:[%s0 + $0x270] sm:$0xff]
    %v1010 = vld [vmem:[%s0 + $0x278] sm:$0xff]
    %v1011 = vld [vmem:[%s0 + $0x280] sm:$0xff]
    %v1012 = vld [vmem:[%s0 + $0x288] sm:$0xff]
    %v1013 = vld [vmem:[%s0 + $0x290] sm:$0xff]
    %v1014 = vld [vmem:[%s0 + $0x298] sm:$0xff]
    %v1015 = vld [vmem:[%s0 + $0x2a0] sm:$0xff]
    %v1016 = vld [vmem:[%s0 + $0x2a8] sm:$0xff]
    %v1017 = vld [vmem:[%s0 + $0x2b0] sm:$0xff]
    %v1018 = vld [vmem:[%s0 + $0x2b8] sm:$0xff]
    %v1019 = vld [vmem:[%s0 + $0x2c0] sm:$0xff]
    %v1020 = vld [vmem:[%s0 + $0x2c8] sm:$0xff]
    %v1021 = vld [vmem:[%s0 + $0x2d0] sm:$0xff]
    %v1022 = vld [vmem:[%s0 + $0x2d8] sm:$0xff]
    %v1023 = vld [vmem:[%s0 + $0x2e0] sm:$0xff]
    %v1024 = vld [vmem:[%s0 + $0x2e8] sm:$0xff]
    %v1025 = vld [vmem:[%s0 + $0x2f0] sm:$0xff]
    %v1026 = vld [vmem:[%s0 + $0x2f8] sm:$0xff]
    %v1027 = vld [vmem:[%s1 + $0x200] sm:$0xff]
    %v1028 = vld [vmem:[%s1 + $0x208] sm:$0xff]
    %v1029 = vld [vmem:[%s1 + $0x210] sm:$0xff]
    %v1030 = vld [vmem:[%s1 + $0x218] sm:$0xff]
    %v1031 = vld [vmem:[%s1 + $0x220] sm:$0xff]
    %v1032 = vld [vmem:[%s1 + $0x228] sm:$0xff]
    %v1033 = vld [vmem:[%s1 + $0x230] sm:$0xff]
    %v1034 = vld [vmem:[%s1 + $0x238] sm:$0xff]
    %v1035 = vld [vmem:[%s1 + $0x240] sm:$0xff]
    %v1036 = vld [vmem:[%s1 + $0x248] sm:$0xff]
    %v1037 = vld [vmem:[%s1 + $0x250] sm:$0xff]
    %v1038 = vld [vmem:[%s1 + $0x258] sm:$0xff]
    %v1039 = vld [vmem:[%s1 + $0x260] sm:$0xff]
    %v1040 = vld [vmem:[%s1 + $0x268] sm:$0xff]
    %v1041 = vld [vmem:[%s1 + $0x270] sm:$0xff]
    %v1042 = vld [vmem:[%s1 + $0x278] sm:$0xff]
    %v1043 = vld [vmem:[%s1 + $0x280] sm:$0xff]
    %v1044 = vld [vmem:[%s1 + $0x288] sm:$0xff]
    %v1045 = vld [vmem:[%s1 + $0x290] sm:$0xff]
    %v1046 = vld [vmem:[%s1 + $0x298] sm:$0xff]
    %v1047 = vld [vmem:[%s1 + $0x2a0] sm:$0xff]
    %v1048 = vld [vmem:[%s1 + $0x2a8] sm:$0xff]
    %v1049 = vld [vmem:[%s1 + $0x2b0] sm:$0xff]
    %v1050 = vld [vmem:[%s1 + $0x2b8] sm:$0xff]
    %v1051 = vld [vmem:[%s1 + $0x2c0] sm:$0xff]
    %v1052 = vld [vmem:[%s1 + $0x2c8] sm:$0xff]
    %v1053 = vld [vmem:[%s1 + $0x2d0] sm:$0xff]
    %v1054 = vld [vmem:[%s1 + $0x2d8] sm:$0xff]
    %v1055 = vld [vmem:[%s1 + $0x2e0] sm:$0xff]
    %v1056 = vld [vmem:[%s1 + $0x2e8] sm:$0xff]
    %v1057 = vld [vmem:[%s1 + $0x2f0] sm:$0xff]
    %v1058 = vld [vmem:[%s1 + $0x2f8] sm:$0xff]
    %v1059 = vld [vmem:[%s1 + $0x300] sm:$0xff]
    %v1060 = vld [vmem:[%s1 + $0x308] sm:$0xff]
    %v1061 = vld [vmem:[%s1 + $0x310] sm:$0xff]
    %v1062 = vld [vmem:[%s1 + $0x318] sm:$0xff]
    %v1063 = vld [vmem:[%s1 + $0x320] sm:$0xff]
    %v1064 = vld [vmem:[%s1 + $0x328] sm:$0xff]
    %v1065 = vld [vmem:[%s1 + $0x330] sm:$0xff]
    %v1066 = vld [vmem:[%s1 + $0x338] sm:$0xff]
    %v1067 = vld [vmem:[%s1 + $0x340] sm:$0xff]
    %v1068 = vld [vmem:[%s1 + $0x348] sm:$0xff]
    %v1069 = vld [vmem:[%s1 + $0x350] sm:$0xff]
    %v1070 = vld [vmem:[%s1 + $0x358] sm:$0xff]
    %v1071 = vld [vmem:[%s1 + $0x360] sm:$0xff]
    %v1072 = vld [vmem:[%s1 + $0x368] sm:$0xff]
    %v1073 = vld [vmem:[%s1 + $0x370] sm:$0xff]
    %v1074 = vld [vmem:[%s1 + $0x378] sm:$0xff]
    %1075 = vadd.xlane.f32.xlu0 %v968
    %v1076 = vpop.xlane.xlu0 %1075
    %v1077 = vmul.f32 %v1076, 0.03125
    %v1078 = vsub.f32 %v968, %v1077
    %v1079 = vmul.f32 %v1078, %v232
    %v1080 = vmul.f32 %v1079, %v1079
    %1081 = vadd.xlane.f32.xlu0 %v1080
    %v1082 = vpop.xlane.xlu0 %1081
    %v1083 = vmul.f32 %v1082, 0.03125
    %v1084 = vadd.f32 %v1083, 1e-06
    %v1085 = vrsqrt.pop %v1084
    %v1086 = vmul.f32 %v1079, %v1085
    %v1087 = vlaneseq
    %v1088 = vshrl.u32 %v1087, 7
    %v1089 = vsub.s32 0, %v1088
    %v1090 = vrot.slane %v969, %v1089
    %v1091 = vmul.f32 %v1086, %v1090
    %v1092 = vlaneseq
    %v1093 = vshrl.u32 %v1092, 7
    %v1094 = vsub.s32 0, %v1093
    %v1095 = vrot.slane %v970, %v1094
    %v1096 = vadd.f32 %v1091, %v1095
    %1097 = vmatprep.subr.mxu0 %v980
    %1098 = vmatpush1.msra.mxu0 %v979
    %1099 = vmatprep.subr.mxu0 %v983
    %1100 = vmatpush1.msra.mxu0 %v982
    %1101 = vmatprep.subr.mxu0 %v986
    %1102 = vmatpush1.msra.mxu0 %v985
    %1103 = vmatprep.subr.mxu0 %v989
    %1104 = vmatpush1.msra.mxu0 %v988
    %1105 = vmatprep.subr.mxu0 %v992
    %1106 = vmatpush1.msra.mxu0 %v991
    %1107 = vmatprep.subr.mxu0 %v995
    %1108 = vmatpush1.msra.mxu0 %v994
    %1109 = vmatprep.subr.mxu0 %v998
    %1110 = vmatpush1.msra.mxu0 %v997
    %1111 = vmatprep.subr.mxu0 %v1001
    %1112 = vmatpush1.msra.mxu0 %v1000
    %1113 = vmatprep.subr.mxu0 %v1004
    %1114 = vmatpush1.msra.mxu0 %v1003
    %1115 = vmatprep.subr.mxu0 %v1007
    %1116 = vmatpush1.msra.mxu0 %v1006
    %1117 = vmatprep.subr.mxu0 %v1010
    %1118 = vmatpush1.msra.mxu0 %v1009
    %1119 = vmatprep.subr.mxu0 %v1013
    %1120 = vmatpush1.msra.mxu0 %v1012
    %1121 = vmatprep.subr.mxu0 %v1016
    %1122 = vmatpush1.msra.mxu0 %v1015
    %1123 = vmatprep.subr.mxu0 %v1019
    %1124 = vmatpush1.msra.mxu0 %v1018
    %1125 = vmatprep.subr.mxu0 %v1022
    %1126 = vmatpush1.msra.mxu0 %v1021
    %1127 = vmatprep.subr.mxu0 %v1025
    %1128 = vmatpush1.msra.mxu0 %v1024
    %1129 = vmatprep.subr.mxu0 0.0
    %1130 = vmatpush1.msra.mxu0 0.0
    %1131 = vmatprep.subr.mxu0 0.0
    %1132 = vmatpush1.msra.mxu0 0.0
    %1133 = vmatprep.subr.mxu0 0.0
    %1134 = vmatpush1.msra.mxu0 0.0
    %1135 = vmatprep.subr.mxu0 0.0
    %1136 = vmatpush1.msra.mxu0 0.0
    %1137 = vmatprep.subr.mxu0 0.0
    %1138 = vmatpush1.msra.mxu0 0.0
    %1139 = vmatprep.subr.mxu0 0.0
    %1140 = vmatpush1.msra.mxu0 0.0
    %1141 = vmatprep.subr.mxu0 0.0
    %1142 = vmatpush1.msra.mxu0 0.0
    %1143 = vmatprep.subr.mxu0 0.0
    %1144 = vmatpush1.msra.mxu0 0.0
    %1145 = vmatprep.subr.mxu0 0.0
    %1146 = vmatpush1.msra.mxu0 0.0
    %1147 = vmatprep.subr.mxu0 0.0
    %1148 = vmatpush1.msra.mxu0 0.0
    %1149 = vmatprep.subr.mxu0 0.0
    %1150 = vmatpush1.msra.mxu0 0.0
    %1151 = vmatprep.subr.mxu0 0.0
    %1152 = vmatpush1.msra.mxu0 0.0
    %1153 = vmatprep.subr.mxu0 0.0
    %1154 = vmatpush1.msra.mxu0 0.0
    %1155 = vmatprep.subr.mxu0 0.0
    %1156 = vmatpush1.msra.mxu0 0.0
    %1157 = vmatprep.subr.mxu0 0.0
    %1158 = vmatpush1.msra.mxu0 0.0
    %1159 = vmatprep.subr.mxu0 0.0
    %1160 = vmatpush1.msra.mxu0 0.0
    %1161 = vmatprep.mubr.f32.mxu0 0.0
    %1162 = vmatmul.mubr.f32.gmra.mrb[0].mxu0 %v1096
    %v1163 = vpop.f32.mrb[0].mxu0
    %v1164 = vadd.f32 0.0, %v1163
    %v1165 = vpop.f32.mrb[0].mxu0
    %v1166 = vadd.f32 0.0, %v1165
    %1167 = vdwg.mxu0
    %1168 = vmatprep.subr.mxu0 0.0
    %1169 = vmatpush1.msra.mxu0 %v981
    %1170 = vmatprep.subr.mxu0 0.0
    %1171 = vmatpush1.msra.mxu0 %v984
    %1172 = vmatprep.subr.mxu0 0.0
    %1173 = vmatpush1.msra.mxu0 %v987
    %1174 = vmatprep.subr.mxu0 0.0
    %1175 = vmatpush1.msra.mxu0 %v990
    %1176 = vmatprep.subr.mxu0 0.0
    %1177 = vmatpush1.msra.mxu0 %v993
    %1178 = vmatprep.subr.mxu0 0.0
    %1179 = vmatpush1.msra.mxu0 %v996
    %1180 = vmatprep.subr.mxu0 0.0
    %1181 = vmatpush1.msra.mxu0 %v999
    %1182 = vmatprep.subr.mxu0 0.0
    %1183 = vmatpush1.msra.mxu0 %v1002
    %1184 = vmatprep.subr.mxu0 0.0
    %1185 = vmatpush1.msra.mxu0 %v1005
    %1186 = vmatprep.subr.mxu0 0.0
    %1187 = vmatpush1.msra.mxu0 %v1008
    %1188 = vmatprep.subr.mxu0 0.0
    %1189 = vmatpush1.msra.mxu0 %v1011
    %1190 = vmatprep.subr.mxu0 0.0
    %1191 = vmatpush1.msra.mxu0 %v1014
    %1192 = vmatprep.subr.mxu0 0.0
    %1193 = vmatpush1.msra.mxu0 %v1017
    %1194 = vmatprep.subr.mxu0 0.0
    %1195 = vmatpush1.msra.mxu0 %v1020
    %1196 = vmatprep.subr.mxu0 0.0
    %1197 = vmatpush1.msra.mxu0 %v1023
    %1198 = vmatprep.subr.mxu0 0.0
    %1199 = vmatpush1.msra.mxu0 %v1026
    %1200 = vmatprep.subr.mxu0 0.0
    %1201 = vmatpush1.msra.mxu0 0.0
    %1202 = vmatprep.subr.mxu0 0.0
    %1203 = vmatpush1.msra.mxu0 0.0
    %1204 = vmatprep.subr.mxu0 0.0
    %1205 = vmatpush1.msra.mxu0 0.0
    %1206 = vmatprep.subr.mxu0 0.0
    %1207 = vmatpush1.msra.mxu0 0.0
    %1208 = vmatprep.subr.mxu0 0.0
    %1209 = vmatpush1.msra.mxu0 0.0
    %1210 = vmatprep.subr.mxu0 0.0
    %1211 = vmatpush1.msra.mxu0 0.0
    %1212 = vmatprep.subr.mxu0 0.0
    %1213 = vmatpush1.msra.mxu0 0.0
    %1214 = vmatprep.subr.mxu0 0.0
    %1215 = vmatpush1.msra.mxu0 0.0
    %1216 = vmatprep.subr.mxu0 0.0
    %1217 = vmatpush1.msra.mxu0 0.0
    %1218 = vmatprep.subr.mxu0 0.0
    %1219 = vmatpush1.msra.mxu0 0.0
    %1220 = vmatprep.subr.mxu0 0.0
    %1221 = vmatpush1.msra.mxu0 0.0
    %1222 = vmatprep.subr.mxu0 0.0
    %1223 = vmatpush1.msra.mxu0 0.0
    %1224 = vmatprep.subr.mxu0 0.0
    %1225 = vmatpush1.msra.mxu0 0.0
    %1226 = vmatprep.subr.mxu0 0.0
    %1227 = vmatpush1.msra.mxu0 0.0
    %1228 = vmatprep.subr.mxu0 0.0
    %1229 = vmatpush1.msra.mxu0 0.0
    %1230 = vmatprep.subr.mxu0 0.0
    %1231 = vmatpush1.msra.mxu0 0.0
    %1232 = vmatprep.mubr.f32.mxu0 0.0
    %1233 = vmatmul.mubr.f32.gmra.mrb[0].mxu0 %v1096
    %v1234 = vpop.f32.mrb[0].mxu0
    %v1235 = vadd.f32 0.0, %v1234
    %v1236 = vpop.f32.mrb[0].mxu0
    %1237 = vdwg.mxu0
    %v1238 = vlaneseq
    %v1239 = vshrl.u32 %v1238, 7
    %v1240 = vsub.s32 0, %v1239
    %v1241 = vrot.slane %v971, %v1240
    %v1242 = vadd.f32 %v1164, %v1241
    %v1243 = vlaneseq
    %v1244 = vshrl.u32 %v1243, 7
    %v1245 = vsub.s32 0, %v1244
    %v1246 = vrot.slane %v972, %v1245
    %v1247 = vadd.f32 %v1166, %v1246
    %v1248 = vlaneseq
    %v1249 = vshrl.u32 %v1248, 7
    %v1250 = vsub.s32 0, %v1249
    %v1251 = vrot.slane %v973, %v1250
    %v1252 = vadd.f32 %v1235, %v1251
    %v1253 = vmul.f32 %v1242, %v114
    %v1254 = vmul.f32 %v1242, %v115
    %v1255 = vmul.f32 %v1242, %v116
    %v1256 = vmul.f32 %v1242, %v117
    %1257 = vmatprep.subr.mxu0 0.0
    %1258 = vmatpush1.xpose.msra.mxu0 %v1247
    %1259 = vmatprep.subr.mxu0 0.0
    %1260 = vmatpush1.xpose.msra.mxu0 0.0
    %1261 = vmatprep.subr.mxu0 0.0
    %1262 = vmatpush1.xpose.msra.mxu0 0.0
    %1263 = vmatprep.subr.mxu0 0.0
    %1264 = vmatpush1.xpose.msra.mxu0 0.0
    %1265 = vmatprep.subr.mxu0 0.0
    %1266 = vmatpush1.xpose.msra.mxu0 0.0
    %1267 = vmatprep.subr.mxu0 0.0
    %1268 = vmatpush1.xpose.msra.mxu0 0.0
    %1269 = vmatprep.subr.mxu0 0.0
    %1270 = vmatpush1.xpose.msra.mxu0 0.0
    %1271 = vmatprep.subr.mxu0 0.0
    %1272 = vmatpush1.xpose.msra.mxu0 0.0
    %1273 = vmatprep.subr.mxu0 0.0
    %1274 = vmatpush1.xpose.msra.mxu0 0.0
    %1275 = vmatprep.subr.mxu0 0.0
    %1276 = vmatpush1.xpose.msra.mxu0 0.0
    %1277 = vmatprep.subr.mxu0 0.0
    %1278 = vmatpush1.xpose.msra.mxu0 0.0
    %1279 = vmatprep.subr.mxu0 0.0
    %1280 = vmatpush1.xpose.msra.mxu0 0.0
    %1281 = vmatprep.subr.mxu0 0.0
    %1282 = vmatpush1.xpose.msra.mxu0 0.0
    %1283 = vmatprep.subr.mxu0 0.0
    %1284 = vmatpush1.xpose.msra.mxu0 0.0
    %1285 = vmatprep.subr.mxu0 0.0
    %1286 = vmatpush1.xpose.msra.mxu0 0.0
    %1287 = vmatprep.subr.mxu0 0.0
    %1288 = vmatpush1.xpose.msra.mxu0 0.0
    %1289 = vmatprep.subr.mxu0 0.0
    %1290 = vmatpush1.xpose.msra.mxu0 0.0
    %1291 = vmatprep.subr.mxu0 0.0
    %1292 = vmatpush1.xpose.msra.mxu0 0.0
    %1293 = vmatprep.subr.mxu0 0.0
    %1294 = vmatpush1.xpose.msra.mxu0 0.0
    %1295 = vmatprep.subr.mxu0 0.0
    %1296 = vmatpush1.xpose.msra.mxu0 0.0
    %1297 = vmatprep.subr.mxu0 0.0
    %1298 = vmatpush1.xpose.msra.mxu0 0.0
    %1299 = vmatprep.subr.mxu0 0.0
    %1300 = vmatpush1.xpose.msra.mxu0 0.0
    %1301 = vmatprep.subr.mxu0 0.0
    %1302 = vmatpush1.xpose.msra.mxu0 0.0
    %1303 = vmatprep.subr.mxu0 0.0
    %1304 = vmatpush1.xpose.msra.mxu0 0.0
    %1305 = vmatprep.subr.mxu0 0.0
    %1306 = vmatpush1.xpose.msra.mxu0 0.0
    %1307 = vmatprep.subr.mxu0 0.0
    %1308 = vmatpush1.xpose.msra.mxu0 0.0
    %1309 = vmatprep.subr.mxu0 0.0
    %1310 = vmatpush1.xpose.msra.mxu0 0.0
    %1311 = vmatprep.subr.mxu0 0.0
    %1312 = vmatpush1.xpose.msra.mxu0 0.0
    %1313 = vmatprep.subr.mxu0 0.0
    %1314 = vmatpush1.xpose.msra.mxu0 0.0
    %1315 = vmatprep.subr.mxu0 0.0
    %1316 = vmatpush1.xpose.msra.mxu0 0.0
    %1317 = vmatprep.subr.mxu0 0.0
    %1318 = vmatpush1.xpose.msra.mxu0 0.0
    %1319 = vmatprep.subr.mxu0 0.0
    %1320 = vmatpush1.xpose.msra.mxu0 0.0
    %1321 = vmatprep.mubr.f32.mxu0 0.0
    %1322 = vmatmul.mubr.f32.gmra.mrb[0].mxu0 %v1253
    %v1323 = vpop.f32.mrb[0].mxu0
    %v1324 = vadd.f32 %v110, %v1323
    %v1325 = vpop.f32.mrb[0].mxu0
    %1326 = vmatprep.mubr.f32.mxu0 0.0
    %1327 = vmatmul.mubr.f32.gmra.mrb[0].mxu0 %v1254
    %v1328 = vpop.f32.mrb[0].mxu0
    %v1329 = vadd.f32 %v111, %v1328
    %v1330 = vpop.f32.mrb[0].mxu0
    %1331 = vmatprep.mubr.f32.mxu0 0.0
    %1332 = vmatmul.mubr.f32.gmra.mrb[0].mxu0 %v1255
    %v1333 = vpop.f32.mrb[0].mxu0
    %v1334 = vadd.f32 %v112, %v1333
    %v1335 = vpop.f32.mrb[0].mxu0
    %1336 = vmatprep.mubr.f32.mxu0 0.0
    %1337 = vmatmul.mubr.f32.gmra.mrb[0].mxu0 %v1256
    %v1338 = vpop.f32.mrb[0].mxu0
    %v1339 = vadd.f32 %v113, %v1338
    %v1340 = vpop.f32.mrb[0].mxu0
    %1341 = vdwg.mxu0
    %v1342 = vsel %vm496, %v1324, -inf
    %1343 = vmax.xlane.f32.xlu0 %v1342
    %v1344 = vpop.xlane.xlu0 %1343
    %v1345 = vsel %vm496, %v1329, -inf
    %1346 = vmax.xlane.f32.xlu0 %v1345
    %v1347 = vpop.xlane.xlu0 %1346
    %v1348 = vsel %vm496, %v1334, -inf
    %1349 = vmax.xlane.f32.xlu0 %v1348
    %v1350 = vpop.xlane.xlu0 %1349
    %v1351 = vsel %vm496, %v1339, -inf
    %1352 = vmax.xlane.f32.xlu0 %v1351
    %v1353 = vpop.xlane.xlu0 %1352
    %v1354 = vsub.f32 %v1324, %v1344
    %v1355 = vsub.f32 %v1329, %v1347
    %v1356 = vsub.f32 %v1334, %v1350
    %v1357 = vsub.f32 %v1339, %v1353
    %v1358 = vmul.f32 %v1354, 1.442695
    %v1359 = vpow.pop %v1358
    %v1360 = vmul.f32 %v1355, 1.442695
    %v1361 = vpow.pop %v1360
    %v1362 = vmul.f32 %v1356, 1.442695
    %v1363 = vpow.pop %v1362
    %v1364 = vmul.f32 %v1357, 1.442695
    %v1365 = vpow.pop %v1364
    %v1366 = vsel %vm496, %v1359, 0.0
    %1367 = vadd.xlane.f32.xlu0 %v1366
    %v1368 = vpop.xlane.xlu0 %1367
    %v1369 = vsel %vm496, %v1361, 0.0
    %1370 = vadd.xlane.f32.xlu0 %v1369
    %v1371 = vpop.xlane.xlu0 %1370
    %v1372 = vsel %vm496, %v1363, 0.0
    %1373 = vadd.xlane.f32.xlu0 %v1372
    %v1374 = vpop.xlane.xlu0 %1373
    %v1375 = vsel %vm496, %v1365, 0.0
    %1376 = vadd.xlane.f32.xlu0 %v1375
    %v1377 = vpop.xlane.xlu0 %1376
    %v1378 = vrcp.pop %v1368
    %v1379 = vmul.f32 %v1359, %v1378
    %v1380 = vrcp.pop %v1371
    %v1381 = vmul.f32 %v1361, %v1380
    %v1382 = vrcp.pop %v1374
    %v1383 = vmul.f32 %v1363, %v1382
    %v1384 = vrcp.pop %v1377
    %v1385 = vmul.f32 %v1365, %v1384
    %v1387 = vsel %vm496, %v1379, 0
    %v1390 = vsel %vm496, %v1381, 0
    %v1393 = vsel %vm496, %v1383, 0
    %v1396 = vsel %vm496, %v1385, 0
    %1398 = vmatprep.subr.mxu0 0.0
    %1399 = vmatpush1.msra.mxu0 %v1252
    %1400 = vmatprep.subr.mxu0 0.0
    %1401 = vmatpush1.msra.mxu0 0.0
    %1402 = vmatprep.subr.mxu0 0.0
    %1403 = vmatpush1.msra.mxu0 0.0
    %1404 = vmatprep.subr.mxu0 0.0
    %1405 = vmatpush1.msra.mxu0 0.0
    %1406 = vmatprep.subr.mxu0 0.0
    %1407 = vmatpush1.msra.mxu0 0.0
    %1408 = vmatprep.subr.mxu0 0.0
    %1409 = vmatpush1.msra.mxu0 0.0
    %1410 = vmatprep.subr.mxu0 0.0
    %1411 = vmatpush1.msra.mxu0 0.0
    %1412 = vmatprep.subr.mxu0 0.0
    %1413 = vmatpush1.msra.mxu0 0.0
    %1414 = vmatprep.subr.mxu0 0.0
    %1415 = vmatpush1.msra.mxu0 0.0
    %1416 = vmatprep.subr.mxu0 0.0
    %1417 = vmatpush1.msra.mxu0 0.0
    %1418 = vmatprep.subr.mxu0 0.0
    %1419 = vmatpush1.msra.mxu0 0.0
    %1420 = vmatprep.subr.mxu0 0.0
    %1421 = vmatpush1.msra.mxu0 0.0
    %1422 = vmatprep.subr.mxu0 0.0
    %1423 = vmatpush1.msra.mxu0 0.0
    %1424 = vmatprep.subr.mxu0 0.0
    %1425 = vmatpush1.msra.mxu0 0.0
    %1426 = vmatprep.subr.mxu0 0.0
    %1427 = vmatpush1.msra.mxu0 0.0
    %1428 = vmatprep.subr.mxu0 0.0
    %1429 = vmatpush1.msra.mxu0 0.0
    %1430 = vmatprep.subr.mxu0 0.0
    %1431 = vmatpush1.msra.mxu0 0.0
    %1432 = vmatprep.subr.mxu0 0.0
    %1433 = vmatpush1.msra.mxu0 0.0
    %1434 = vmatprep.subr.mxu0 0.0
    %1435 = vmatpush1.msra.mxu0 0.0
    %1436 = vmatprep.subr.mxu0 0.0
    %1437 = vmatpush1.msra.mxu0 0.0
    %1438 = vmatprep.subr.mxu0 0.0
    %1439 = vmatpush1.msra.mxu0 0.0
    %1440 = vmatprep.subr.mxu0 0.0
    %1441 = vmatpush1.msra.mxu0 0.0
    %1442 = vmatprep.subr.mxu0 0.0
    %1443 = vmatpush1.msra.mxu0 0.0
    %1444 = vmatprep.subr.mxu0 0.0
    %1445 = vmatpush1.msra.mxu0 0.0
    %1446 = vmatprep.subr.mxu0 0.0
    %1447 = vmatpush1.msra.mxu0 0.0
    %1448 = vmatprep.subr.mxu0 0.0
    %1449 = vmatpush1.msra.mxu0 0.0
    %1450 = vmatprep.subr.mxu0 0.0
    %1451 = vmatpush1.msra.mxu0 0.0
    %1452 = vmatprep.subr.mxu0 0.0
    %1453 = vmatpush1.msra.mxu0 0.0
    %1454 = vmatprep.subr.mxu0 0.0
    %1455 = vmatpush1.msra.mxu0 0.0
    %1456 = vmatprep.subr.mxu0 0.0
    %1457 = vmatpush1.msra.mxu0 0.0
    %1458 = vmatprep.subr.mxu0 0.0
    %1459 = vmatpush1.msra.mxu0 0.0
    %1460 = vmatprep.subr.mxu0 0.0
    %1461 = vmatpush1.msra.mxu0 0.0
    %1462 = vmatprep.mubr.f32.mxu0 0.0
    %1463 = vmatmul.mubr.f32.gmra.mrb[0].mxu0 %v1387
    %v1464 = vpop.f32.mrb[0].mxu0
    %v1465 = vadd.f32 0.0, %v1464
    %v1466 = vpop.f32.mrb[0].mxu0
    %1467 = vmatprep.mubr.f32.mxu0 0.0
    %1468 = vmatmul.mubr.f32.gmra.mrb[0].mxu0 %v1390
    %v1469 = vpop.f32.mrb[0].mxu0
    %v1470 = vadd.f32 0.0, %v1469
    %v1471 = vpop.f32.mrb[0].mxu0
    %1472 = vmatprep.mubr.f32.mxu0 0.0
    %1473 = vmatmul.mubr.f32.gmra.mrb[0].mxu0 %v1393
    %v1474 = vpop.f32.mrb[0].mxu0
    %v1475 = vadd.f32 0.0, %v1474
    %v1476 = vpop.f32.mrb[0].mxu0
    %1477 = vmatprep.mubr.f32.mxu0 0.0
    %1478 = vmatmul.mubr.f32.gmra.mrb[0].mxu0 %v1396
    %v1479 = vpop.f32.mrb[0].mxu0
    %v1480 = vadd.f32 0.0, %v1479
    %v1481 = vpop.f32.mrb[0].mxu0
    %1482 = vdwg.mxu0
    %v1483 = vmul.f32 %v1465, %v114
    %v1484 = vmul.f32 %v1470, %v115
    %v1485 = vmul.f32 %v1475, %v116
    %v1486 = vmul.f32 %v1480, %v117
    %1487 = vmatprep.subr.mxu0 0.0
    %1488 = vmatpush1.msra.mxu0 %v1483
    %1489 = vmatprep.subr.mxu0 0.0
    %1490 = vmatpush1.msra.mxu0 %v1484
    %1491 = vmatprep.subr.mxu0 0.0
    %1492 = vmatpush1.msra.mxu0 %v1485
    %1493 = vmatprep.subr.mxu0 0.0
    %1494 = vmatpush1.msra.mxu0 %v1486
    %1495 = vmatprep.subr.mxu0 0.0
    %1496 = vmatpush1.msra.mxu0 0.0
    %1497 = vmatprep.subr.mxu0 0.0
    %1498 = vmatpush1.msra.mxu0 0.0
    %1499 = vmatprep.subr.mxu0 0.0
    %1500 = vmatpush1.msra.mxu0 0.0
    %1501 = vmatprep.subr.mxu0 0.0
    %1502 = vmatpush1.msra.mxu0 0.0
    %1503 = vmatprep.subr.mxu0 0.0
    %1504 = vmatpush1.msra.mxu0 0.0
    %1505 = vmatprep.subr.mxu0 0.0
    %1506 = vmatpush1.msra.mxu0 0.0
    %1507 = vmatprep.subr.mxu0 0.0
    %1508 = vmatpush1.msra.mxu0 0.0
    %1509 = vmatprep.subr.mxu0 0.0
    %1510 = vmatpush1.msra.mxu0 0.0
    %1511 = vmatprep.subr.mxu0 0.0
    %1512 = vmatpush1.msra.mxu0 0.0
    %1513 = vmatprep.subr.mxu0 0.0
    %1514 = vmatpush1.msra.mxu0 0.0
    %1515 = vmatprep.subr.mxu0 0.0
    %1516 = vmatpush1.msra.mxu0 0.0
    %1517 = vmatprep.subr.mxu0 0.0
    %1518 = vmatpush1.msra.mxu0 0.0
    %1519 = vmatprep.subr.mxu0 0.0
    %1520 = vmatpush1.msra.mxu0 0.0
    %1521 = vmatprep.subr.mxu0 0.0
    %1522 = vmatpush1.msra.mxu0 0.0
    %1523 = vmatprep.subr.mxu0 0.0
    %1524 = vmatpush1.msra.mxu0 0.0
    %1525 = vmatprep.subr.mxu0 0.0
    %1526 = vmatpush1.msra.mxu0 0.0
    %1527 = vmatprep.subr.mxu0 0.0
    %1528 = vmatpush1.msra.mxu0 0.0
    %1529 = vmatprep.subr.mxu0 0.0
    %1530 = vmatpush1.msra.mxu0 0.0
    %1531 = vmatprep.subr.mxu0 0.0
    %1532 = vmatpush1.msra.mxu0 0.0
    %1533 = vmatprep.subr.mxu0 0.0
    %1534 = vmatpush1.msra.mxu0 0.0
    %1535 = vmatprep.subr.mxu0 0.0
    %1536 = vmatpush1.msra.mxu0 0.0
    %1537 = vmatprep.subr.mxu0 0.0
    %1538 = vmatpush1.msra.mxu0 0.0
    %1539 = vmatprep.subr.mxu0 0.0
    %1540 = vmatpush1.msra.mxu0 0.0
    %1541 = vmatprep.subr.mxu0 0.0
    %1542 = vmatpush1.msra.mxu0 0.0
    %1543 = vmatprep.subr.mxu0 0.0
    %1544 = vmatpush1.msra.mxu0 0.0
    %1545 = vmatprep.subr.mxu0 0.0
    %1546 = vmatpush1.msra.mxu0 0.0
    %1547 = vmatprep.subr.mxu0 0.0
    %1548 = vmatpush1.msra.mxu0 0.0
    %1549 = vmatprep.subr.mxu0 0.0
    %1550 = vmatpush1.msra.mxu0 0.0
    %1551 = vmatprep.mubr.f32.mxu0 0.0
    %1552 = vmatmul.mubr.f32.gmra.mrb[0].mxu0 %v644
    %v1553 = vpop.f32.mrb[0].mxu0
    %v1554 = vadd.f32 0.0, %v1553
    %v1555 = vpop.f32.mrb[0].mxu0
    %1556 = vdwg.mxu0
    %1557 = vmatprep.subr.mxu0 0.0
    %1558 = vmatpush1.msra.mxu0 %v1027
    %1559 = vmatprep.subr.mxu0 0.0
    %1560 = vmatpush1.msra.mxu0 %v1028
    %1561 = vmatprep.subr.mxu0 0.0
    %1562 = vmatpush1.msra.mxu0 %v1029
    %1563 = vmatprep.subr.mxu0 0.0
    %1564 = vmatpush1.msra.mxu0 %v1030
    %1565 = vmatprep.subr.mxu0 0.0
    %1566 = vmatpush1.msra.mxu0 %v1031
    %1567 = vmatprep.subr.mxu0 0.0
    %1568 = vmatpush1.msra.mxu0 %v1032
    %1569 = vmatprep.subr.mxu0 0.0
    %1570 = vmatpush1.msra.mxu0 %v1033
    %1571 = vmatprep.subr.mxu0 0.0
    %1572 = vmatpush1.msra.mxu0 %v1034
    %1573 = vmatprep.subr.mxu0 0.0
    %1574 = vmatpush1.msra.mxu0 %v1035
    %1575 = vmatprep.subr.mxu0 0.0
    %1576 = vmatpush1.msra.mxu0 %v1036
    %1577 = vmatprep.subr.mxu0 0.0
    %1578 = vmatpush1.msra.mxu0 %v1037
    %1579 = vmatprep.subr.mxu0 0.0
    %1580 = vmatpush1.msra.mxu0 %v1038
    %1581 = vmatprep.subr.mxu0 0.0
    %1582 = vmatpush1.msra.mxu0 %v1039
    %1583 = vmatprep.subr.mxu0 0.0
    %1584 = vmatpush1.msra.mxu0 %v1040
    %1585 = vmatprep.subr.mxu0 0.0
    %1586 = vmatpush1.msra.mxu0 %v1041
    %1587 = vmatprep.subr.mxu0 0.0
    %1588 = vmatpush1.msra.mxu0 %v1042
    %1589 = vmatprep.subr.mxu0 0.0
    %1590 = vmatpush1.msra.mxu0 0.0
    %1591 = vmatprep.subr.mxu0 0.0
    %1592 = vmatpush1.msra.mxu0 0.0
    %1593 = vmatprep.subr.mxu0 0.0
    %1594 = vmatpush1.msra.mxu0 0.0
    %1595 = vmatprep.subr.mxu0 0.0
    %1596 = vmatpush1.msra.mxu0 0.0
    %1597 = vmatprep.subr.mxu0 0.0
    %1598 = vmatpush1.msra.mxu0 0.0
    %1599 = vmatprep.subr.mxu0 0.0
    %1600 = vmatpush1.msra.mxu0 0.0
    %1601 = vmatprep.subr.mxu0 0.0
    %1602 = vmatpush1.msra.mxu0 0.0
    %1603 = vmatprep.subr.mxu0 0.0
    %1604 = vmatpush1.msra.mxu0 0.0
    %1605 = vmatprep.subr.mxu0 0.0
    %1606 = vmatpush1.msra.mxu0 0.0
    %1607 = vmatprep.subr.mxu0 0.0
    %1608 = vmatpush1.msra.mxu0 0.0
    %1609 = vmatprep.subr.mxu0 0.0
    %1610 = vmatpush1.msra.mxu0 0.0
    %1611 = vmatprep.subr.mxu0 0.0
    %1612 = vmatpush1.msra.mxu0 0.0
    %1613 = vmatprep.subr.mxu0 0.0
    %1614 = vmatpush1.msra.mxu0 0.0
    %1615 = vmatprep.subr.mxu0 0.0
    %1616 = vmatpush1.msra.mxu0 0.0
    %1617 = vmatprep.subr.mxu0 0.0
    %1618 = vmatpush1.msra.mxu0 0.0
    %1619 = vmatprep.subr.mxu0 0.0
    %1620 = vmatpush1.msra.mxu0 0.0
    %1621 = vmatprep.mubr.f32.mxu0 0.0
    %1622 = vmatmul.mubr.f32.gmra.mrb[0].mxu0 %v1554
    %v1623 = vpop.f32.mrb[0].mxu0
    %v1624 = vadd.f32 0.0, %v1623
    %v1625 = vpop.f32.mrb[0].mxu0
    %1626 = vdwg.mxu0
    %v1627 = vadd.f32 %v968, %v1624
    %v1628 = vlaneseq
    %v1629 = vshrl.u32 %v1628, 7
    %v1630 = vsub.s32 0, %v1629
    %v1631 = vrot.slane %v974, %v1630
    %v1632 = vadd.f32 %v1627, %v1631
    %1633 = vadd.xlane.f32.xlu0 %v1632
    %v1634 = vpop.xlane.xlu0 %1633
    %v1635 = vmul.f32 %v1634, 0.03125
    %v1636 = vsub.f32 %v1632, %v1635
    %v1637 = vmul.f32 %v1636, %v232
    %v1638 = vmul.f32 %v1637, %v1637
    %1639 = vadd.xlane.f32.xlu0 %v1638
    %v1640 = vpop.xlane.xlu0 %1639
    %v1641 = vmul.f32 %v1640, 0.03125
    %v1642 = vadd.f32 %v1641, 1e-06
    %v1643 = vrsqrt.pop %v1642
    %v1644 = vmul.f32 %v1637, %v1643
    %v1645 = vlaneseq
    %v1646 = vshrl.u32 %v1645, 7
    %v1647 = vsub.s32 0, %v1646
    %v1648 = vrot.slane %v975, %v1647
    %v1649 = vmul.f32 %v1644, %v1648
    %v1650 = vlaneseq
    %v1651 = vshrl.u32 %v1650, 7
    %v1652 = vsub.s32 0, %v1651
    %v1653 = vrot.slane %v976, %v1652
    %v1654 = vadd.f32 %v1649, %v1653
    %v1655 = vlaneseq
    %v1656 = vshrl.u32 %v1655, 7
    %v1657 = vsub.s32 0, %v1656
    %v1658 = vrot.slane %v977, %v1657
    %1659 = vmatprep.subr.mxu0 0.0
    %1660 = vmatpush1.msra.mxu0 %v1043
    %1661 = vmatprep.subr.mxu0 0.0
    %1662 = vmatpush1.msra.mxu0 %v1044
    %1663 = vmatprep.subr.mxu0 0.0
    %1664 = vmatpush1.msra.mxu0 %v1045
    %1665 = vmatprep.subr.mxu0 0.0
    %1666 = vmatpush1.msra.mxu0 %v1046
    %1667 = vmatprep.subr.mxu0 0.0
    %1668 = vmatpush1.msra.mxu0 %v1047
    %1669 = vmatprep.subr.mxu0 0.0
    %1670 = vmatpush1.msra.mxu0 %v1048
    %1671 = vmatprep.subr.mxu0 0.0
    %1672 = vmatpush1.msra.mxu0 %v1049
    %1673 = vmatprep.subr.mxu0 0.0
    %1674 = vmatpush1.msra.mxu0 %v1050
    %1675 = vmatprep.subr.mxu0 0.0
    %1676 = vmatpush1.msra.mxu0 %v1051
    %1677 = vmatprep.subr.mxu0 0.0
    %1678 = vmatpush1.msra.mxu0 %v1052
    %1679 = vmatprep.subr.mxu0 0.0
    %1680 = vmatpush1.msra.mxu0 %v1053
    %1681 = vmatprep.subr.mxu0 0.0
    %1682 = vmatpush1.msra.mxu0 %v1054
    %1683 = vmatprep.subr.mxu0 0.0
    %1684 = vmatpush1.msra.mxu0 %v1055
    %1685 = vmatprep.subr.mxu0 0.0
    %1686 = vmatpush1.msra.mxu0 %v1056
    %1687 = vmatprep.subr.mxu0 0.0
    %1688 = vmatpush1.msra.mxu0 %v1057
    %1689 = vmatprep.subr.mxu0 0.0
    %1690 = vmatpush1.msra.mxu0 %v1058
    %1691 = vmatprep.subr.mxu0 0.0
    %1692 = vmatpush1.msra.mxu0 0.0
    %1693 = vmatprep.subr.mxu0 0.0
    %1694 = vmatpush1.msra.mxu0 0.0
    %1695 = vmatprep.subr.mxu0 0.0
    %1696 = vmatpush1.msra.mxu0 0.0
    %1697 = vmatprep.subr.mxu0 0.0
    %1698 = vmatpush1.msra.mxu0 0.0
    %1699 = vmatprep.subr.mxu0 0.0
    %1700 = vmatpush1.msra.mxu0 0.0
    %1701 = vmatprep.subr.mxu0 0.0
    %1702 = vmatpush1.msra.mxu0 0.0
    %1703 = vmatprep.subr.mxu0 0.0
    %1704 = vmatpush1.msra.mxu0 0.0
    %1705 = vmatprep.subr.mxu0 0.0
    %1706 = vmatpush1.msra.mxu0 0.0
    %1707 = vmatprep.subr.mxu0 0.0
    %1708 = vmatpush1.msra.mxu0 0.0
    %1709 = vmatprep.subr.mxu0 0.0
    %1710 = vmatpush1.msra.mxu0 0.0
    %1711 = vmatprep.subr.mxu0 0.0
    %1712 = vmatpush1.msra.mxu0 0.0
    %1713 = vmatprep.subr.mxu0 0.0
    %1714 = vmatpush1.msra.mxu0 0.0
    %1715 = vmatprep.subr.mxu0 0.0
    %1716 = vmatpush1.msra.mxu0 0.0
    %1717 = vmatprep.subr.mxu0 0.0
    %1718 = vmatpush1.msra.mxu0 0.0
    %1719 = vmatprep.subr.mxu0 0.0
    %1720 = vmatpush1.msra.mxu0 0.0
    %1721 = vmatprep.subr.mxu0 0.0
    %1722 = vmatpush1.msra.mxu0 0.0
    %1723 = vmatprep.mubr.f32.mxu0 0.0
    %1724 = vmatmul.mubr.f32.gmra.mrb[0].mxu0 %v1654
    %v1725 = vpop.f32.mrb[0].mxu0
    %v1726 = vadd.f32 %v1658, %v1725
    %v1727 = vpop.f32.mrb[0].mxu0
    %1728 = vdwg.mxu0
    %v1729 = vmul.f32 %v1726, 0.5
    %v1730 = vmul.f32 %v1726, 0.70710677
    %v1731 = verf.f32.pop %v1730
    %v1732 = vadd.f32 %v1731, 1.0
    %v1733 = vmul.f32 %v1729, %v1732
    %1734 = vmatprep.subr.mxu0 0.0
    %1735 = vmatpush1.msra.mxu0 %v1059
    %1736 = vmatprep.subr.mxu0 0.0
    %1737 = vmatpush1.msra.mxu0 %v1060
    %1738 = vmatprep.subr.mxu0 0.0
    %1739 = vmatpush1.msra.mxu0 %v1061
    %1740 = vmatprep.subr.mxu0 0.0
    %1741 = vmatpush1.msra.mxu0 %v1062
    %1742 = vmatprep.subr.mxu0 0.0
    %1743 = vmatpush1.msra.mxu0 %v1063
    %1744 = vmatprep.subr.mxu0 0.0
    %1745 = vmatpush1.msra.mxu0 %v1064
    %1746 = vmatprep.subr.mxu0 0.0
    %1747 = vmatpush1.msra.mxu0 %v1065
    %1748 = vmatprep.subr.mxu0 0.0
    %1749 = vmatpush1.msra.mxu0 %v1066
    %1750 = vmatprep.subr.mxu0 0.0
    %1751 = vmatpush1.msra.mxu0 %v1067
    %1752 = vmatprep.subr.mxu0 0.0
    %1753 = vmatpush1.msra.mxu0 %v1068
    %1754 = vmatprep.subr.mxu0 0.0
    %1755 = vmatpush1.msra.mxu0 %v1069
    %1756 = vmatprep.subr.mxu0 0.0
    %1757 = vmatpush1.msra.mxu0 %v1070
    %1758 = vmatprep.subr.mxu0 0.0
    %1759 = vmatpush1.msra.mxu0 %v1071
    %1760 = vmatprep.subr.mxu0 0.0
    %1761 = vmatpush1.msra.mxu0 %v1072
    %1762 = vmatprep.subr.mxu0 0.0
    %1763 = vmatpush1.msra.mxu0 %v1073
    %1764 = vmatprep.subr.mxu0 0.0
    %1765 = vmatpush1.msra.mxu0 %v1074
    %1766 = vmatprep.subr.mxu0 0.0
    %1767 = vmatpush1.msra.mxu0 0.0
    %1768 = vmatprep.subr.mxu0 0.0
    %1769 = vmatpush1.msra.mxu0 0.0
    %1770 = vmatprep.subr.mxu0 0.0
    %1771 = vmatpush1.msra.mxu0 0.0
    %1772 = vmatprep.subr.mxu0 0.0
    %1773 = vmatpush1.msra.mxu0 0.0
    %1774 = vmatprep.subr.mxu0 0.0
    %1775 = vmatpush1.msra.mxu0 0.0
    %1776 = vmatprep.subr.mxu0 0.0
    %1777 = vmatpush1.msra.mxu0 0.0
    %1778 = vmatprep.subr.mxu0 0.0
    %1779 = vmatpush1.msra.mxu0 0.0
    %1780 = vmatprep.subr.mxu0 0.0
    %1781 = vmatpush1.msra.mxu0 0.0
    %1782 = vmatprep.subr.mxu0 0.0
    %1783 = vmatpush1.msra.mxu0 0.0
    %1784 = vmatprep.subr.mxu0 0.0
    %1785 = vmatpush1.msra.mxu0 0.0
    %1786 = vmatprep.subr.mxu0 0.0
    %1787 = vmatpush1.msra.mxu0 0.0
    %1788 = vmatprep.subr.mxu0 0.0
    %1789 = vmatpush1.msra.mxu0 0.0
    %1790 = vmatprep.subr.mxu0 0.0
    %1791 = vmatpush1.msra.mxu0 0.0
    %1792 = vmatprep.subr.mxu0 0.0
    %1793 = vmatpush1.msra.mxu0 0.0
    %1794 = vmatprep.subr.mxu0 0.0
    %1795 = vmatpush1.msra.mxu0 0.0
    %1796 = vmatprep.subr.mxu0 0.0
    %1797 = vmatpush1.msra.mxu0 0.0
    %1798 = vmatprep.mubr.f32.mxu0 0.0
    %1799 = vmatmul.mubr.f32.gmra.mrb[0].mxu0 %v1733
    %v1800 = vpop.f32.mrb[0].mxu0
    %v1801 = vadd.f32 0.0, %v1800
    %v1802 = vpop.f32.mrb[0].mxu0
    %1803 = vdwg.mxu0
    %v1804 = vadd.f32 %v1632, %v1801
    %v1805 = vlaneseq
    %v1806 = vshrl.u32 %v1805, 7
    %v1807 = vsub.s32 0, %v1806
    %v1808 = vrot.slane %v978, %v1807
    %v1809 = vadd.f32 %v1804, %v1808
    %v1810 = vld [vmem:[%s2 + $0x14] sm:$0x1]
    %v1811 = vld [vmem:[%s2 + $0x15] sm:$0x1]
    %1812 = vadd.xlane.f32.xlu0 %v1809
    %v1813 = vpop.xlane.xlu0 %1812
    %v1814 = vmul.f32 %v1813, 0.03125
    %v1815 = vsub.f32 %v1809, %v1814
    %v1816 = vmul.f32 %v1815, %v232
    %v1817 = vmul.f32 %v1816, %v1816
    %1818 = vadd.xlane.f32.xlu0 %v1817
    %v1819 = vpop.xlane.xlu0 %1818
    %v1820 = vmul.f32 %v1819, 0.03125
    %v1821 = vadd.f32 %v1820, 1e-06
    %v1822 = vrsqrt.pop %v1821
    %v1823 = vmul.f32 %v1816, %v1822
    %v1824 = vlaneseq
    %v1825 = vshrl.u32 %v1824, 7
    %v1826 = vsub.s32 0, %v1825
    %v1827 = vrot.slane %v1810, %v1826
    %v1828 = vmul.f32 %v1823, %v1827
    %v1829 = vlaneseq
    %v1830 = vshrl.u32 %v1829, 7
    %v1831 = vsub.s32 0, %v1830
    %v1832 = vrot.slane %v1811, %v1831
    %v1833 = vadd.f32 %v1828, %v1832
    %v1834 = vld [vmem:[%s1 + $0x380] sm:$0xff]
    %v1835 = vld [vmem:[%s1 + $0x388] sm:$0xff]
    %v1836 = vld [vmem:[%s1 + $0x390] sm:$0xff]
    %v1837 = vld [vmem:[%s1 + $0x398] sm:$0xff]
    %v1838 = vld [vmem:[%s1 + $0x3a0] sm:$0xff]
    %v1839 = vld [vmem:[%s1 + $0x3a8] sm:$0xff]
    %v1840 = vld [vmem:[%s1 + $0x3b0] sm:$0xff]
    %v1841 = vld [vmem:[%s1 + $0x3b8] sm:$0xff]
    %v1842 = vld [vmem:[%s1 + $0x3c0] sm:$0xff]
    %v1843 = vld [vmem:[%s1 + $0x3c8] sm:$0xff]
    %v1844 = vld [vmem:[%s1 + $0x3d0] sm:$0xff]
    %v1845 = vld [vmem:[%s1 + $0x3d8] sm:$0xff]
    %v1846 = vld [vmem:[%s1 + $0x3e0] sm:$0xff]
    %v1847 = vld [vmem:[%s1 + $0x3e8] sm:$0xff]
    %v1848 = vld [vmem:[%s1 + $0x3f0] sm:$0xff]
    %v1849 = vld [vmem:[%s1 + $0x3f8] sm:$0xff]
    %v1850 = vld [vmem:[%s2 + $0x16] sm:$0x1]
    %v1851 = vlaneseq
    %v1852 = vshrl.u32 %v1851, 7
    %v1853 = vsub.s32 0, %v1852
    %v1854 = vrot.slane %v1850, %v1853
    %1855 = vmatprep.subr.mxu0 0.0
    %1856 = vmatpush1.msra.mxu0 %v1834
    %1857 = vmatprep.subr.mxu0 0.0
    %1858 = vmatpush1.msra.mxu0 %v1835
    %1859 = vmatprep.subr.mxu0 0.0
    %1860 = vmatpush1.msra.mxu0 %v1836
    %1861 = vmatprep.subr.mxu0 0.0
    %1862 = vmatpush1.msra.mxu0 %v1837
    %1863 = vmatprep.subr.mxu0 0.0
    %1864 = vmatpush1.msra.mxu0 %v1838
    %1865 = vmatprep.subr.mxu0 0.0
    %1866 = vmatpush1.msra.mxu0 %v1839
    %1867 = vmatprep.subr.mxu0 0.0
    %1868 = vmatpush1.msra.mxu0 %v1840
    %1869 = vmatprep.subr.mxu0 0.0
    %1870 = vmatpush1.msra.mxu0 %v1841
    %1871 = vmatprep.subr.mxu0 0.0
    %1872 = vmatpush1.msra.mxu0 %v1842
    %1873 = vmatprep.subr.mxu0 0.0
    %1874 = vmatpush1.msra.mxu0 %v1843
    %1875 = vmatprep.subr.mxu0 0.0
    %1876 = vmatpush1.msra.mxu0 %v1844
    %1877 = vmatprep.subr.mxu0 0.0
    %1878 = vmatpush1.msra.mxu0 %v1845
    %1879 = vmatprep.subr.mxu0 0.0
    %1880 = vmatpush1.msra.mxu0 %v1846
    %1881 = vmatprep.subr.mxu0 0.0
    %1882 = vmatpush1.msra.mxu0 %v1847
    %1883 = vmatprep.subr.mxu0 0.0
    %1884 = vmatpush1.msra.mxu0 %v1848
    %1885 = vmatprep.subr.mxu0 0.0
    %1886 = vmatpush1.msra.mxu0 %v1849
    %1887 = vmatprep.subr.mxu0 0.0
    %1888 = vmatpush1.msra.mxu0 0.0
    %1889 = vmatprep.subr.mxu0 0.0
    %1890 = vmatpush1.msra.mxu0 0.0
    %1891 = vmatprep.subr.mxu0 0.0
    %1892 = vmatpush1.msra.mxu0 0.0
    %1893 = vmatprep.subr.mxu0 0.0
    %1894 = vmatpush1.msra.mxu0 0.0
    %1895 = vmatprep.subr.mxu0 0.0
    %1896 = vmatpush1.msra.mxu0 0.0
    %1897 = vmatprep.subr.mxu0 0.0
    %1898 = vmatpush1.msra.mxu0 0.0
    %1899 = vmatprep.subr.mxu0 0.0
    %1900 = vmatpush1.msra.mxu0 0.0
    %1901 = vmatprep.subr.mxu0 0.0
    %1902 = vmatpush1.msra.mxu0 0.0
    %1903 = vmatprep.subr.mxu0 0.0
    %1904 = vmatpush1.msra.mxu0 0.0
    %1905 = vmatprep.subr.mxu0 0.0
    %1906 = vmatpush1.msra.mxu0 0.0
    %1907 = vmatprep.subr.mxu0 0.0
    %1908 = vmatpush1.msra.mxu0 0.0
    %1909 = vmatprep.subr.mxu0 0.0
    %1910 = vmatpush1.msra.mxu0 0.0
    %1911 = vmatprep.subr.mxu0 0.0
    %1912 = vmatpush1.msra.mxu0 0.0
    %1913 = vmatprep.subr.mxu0 0.0
    %1914 = vmatpush1.msra.mxu0 0.0
    %1915 = vmatprep.subr.mxu0 0.0
    %1916 = vmatpush1.msra.mxu0 0.0
    %1917 = vmatprep.subr.mxu0 0.0
    %1918 = vmatpush1.msra.mxu0 0.0
    %1919 = vmatprep.mubr.f32.mxu0 0.0
    %1920 = vmatmul.mubr.f32.gmra.mrb[0].mxu0 %v1833
    %v1921 = vpop.f32.mrb[0].mxu0
    %v1922 = vadd.f32 %v1854, %v1921
    %v1923 = vpop.f32.mrb[0].mxu0
    %1924 = vdwg.mxu0
    %v1925 = vld [vmem:[%s3 + $0x58] sm:$0xff]
    %v1926 = vld [vmem:[%s3 + $0x60] sm:$0xff]
    %v1927 = vld [vmem:[%s3 + $0x68] sm:$0xff]
    %v1928 = vld [vmem:[%s3 + $0x70] sm:$0xff]
    %v1929 = vld [vmem:[%s3 + $0x78] sm:$0xff]
    %v1930 = vld [vmem:[%s3 + $0x80] sm:$0xff]
    %v1932 = vsel %vm496, %v1925, 0
    %v1935 = vsel %vm496, %v1926, 0
    %v1938 = vsel %vm496, %v1927, 0
    %1940 = vmatprep.subr.mxu0 0.0
    %1941 = vmatpush1.msra.mxu0 %v1922
    %1942 = vmatprep.subr.mxu0 0.0
    %1943 = vmatpush1.msra.mxu0 0.0
    %1944 = vmatprep.subr.mxu0 0.0
    %1945 = vmatpush1.msra.mxu0 0.0
    %1946 = vmatprep.subr.mxu0 0.0
    %1947 = vmatpush1.msra.mxu0 0.0
    %1948 = vmatprep.subr.mxu0 0.0
    %1949 = vmatpush1.msra.mxu0 0.0
    %1950 = vmatprep.subr.mxu0 0.0
    %1951 = vmatpush1.msra.mxu0 0.0
    %1952 = vmatprep.subr.mxu0 0.0
    %1953 = vmatpush1.msra.mxu0 0.0
    %1954 = vmatprep.subr.mxu0 0.0
    %1955 = vmatpush1.msra.mxu0 0.0
    %1956 = vmatprep.subr.mxu0 0.0
    %1957 = vmatpush1.msra.mxu0 0.0
    %1958 = vmatprep.subr.mxu0 0.0
    %1959 = vmatpush1.msra.mxu0 0.0
    %1960 = vmatprep.subr.mxu0 0.0
    %1961 = vmatpush1.msra.mxu0 0.0
    %1962 = vmatprep.subr.mxu0 0.0
    %1963 = vmatpush1.msra.mxu0 0.0
    %1964 = vmatprep.subr.mxu0 0.0
    %1965 = vmatpush1.msra.mxu0 0.0
    %1966 = vmatprep.subr.mxu0 0.0
    %1967 = vmatpush1.msra.mxu0 0.0
    %1968 = vmatprep.subr.mxu0 0.0
    %1969 = vmatpush1.msra.mxu0 0.0
    %1970 = vmatprep.subr.mxu0 0.0
    %1971 = vmatpush1.msra.mxu0 0.0
    %1972 = vmatprep.subr.mxu0 0.0
    %1973 = vmatpush1.msra.mxu0 0.0
    %1974 = vmatprep.subr.mxu0 0.0
    %1975 = vmatpush1.msra.mxu0 0.0
    %1976 = vmatprep.subr.mxu0 0.0
    %1977 = vmatpush1.msra.mxu0 0.0
    %1978 = vmatprep.subr.mxu0 0.0
    %1979 = vmatpush1.msra.mxu0 0.0
    %1980 = vmatprep.subr.mxu0 0.0
    %1981 = vmatpush1.msra.mxu0 0.0
    %1982 = vmatprep.subr.mxu0 0.0
    %1983 = vmatpush1.msra.mxu0 0.0
    %1984 = vmatprep.subr.mxu0 0.0
    %1985 = vmatpush1.msra.mxu0 0.0
    %1986 = vmatprep.subr.mxu0 0.0
    %1987 = vmatpush1.msra.mxu0 0.0
    %1988 = vmatprep.subr.mxu0 0.0
    %1989 = vmatpush1.msra.mxu0 0.0
    %1990 = vmatprep.subr.mxu0 0.0
    %1991 = vmatpush1.msra.mxu0 0.0
    %1992 = vmatprep.subr.mxu0 0.0
    %1993 = vmatpush1.msra.mxu0 0.0
    %1994 = vmatprep.subr.mxu0 0.0
    %1995 = vmatpush1.msra.mxu0 0.0
    %1996 = vmatprep.subr.mxu0 0.0
    %1997 = vmatpush1.msra.mxu0 0.0
    %1998 = vmatprep.subr.mxu0 0.0
    %1999 = vmatpush1.msra.mxu0 0.0
    %2000 = vmatprep.subr.mxu0 0.0
    %2001 = vmatpush1.msra.mxu0 0.0
    %2002 = vmatprep.subr.mxu0 0.0
    %2003 = vmatpush1.msra.mxu0 0.0
    %2004 = vmatprep.mubr.f32.mxu0 0.0
    %2005 = vmatmul.mubr.f32.gmra.mrb[0].mxu0 %v1932
    %v2006 = vpop.f32.mrb[0].mxu0
    %v2007 = vadd.f32 %v1928, %v2006
    %v2008 = vpop.f32.mrb[0].mxu0
    %2009 = vmatprep.mubr.f32.mxu0 0.0
    %2010 = vmatmul.mubr.f32.gmra.mrb[0].mxu0 %v1935
    %v2011 = vpop.f32.mrb[0].mxu0
    %v2012 = vadd.f32 %v1929, %v2011
    %v2013 = vpop.f32.mrb[0].mxu0
    %2014 = vmatprep.mubr.f32.mxu0 0.0
    %2015 = vmatmul.mubr.f32.gmra.mrb[0].mxu0 %v1938
    %v2016 = vpop.f32.mrb[0].mxu0
    %v2017 = vadd.f32 %v1930, %v2016
    %v2018 = vpop.f32.mrb[0].mxu0
    %2019 = vdwg.mxu0
    %v2020 = vld [vmem:[%s3 + $0x88] sm:$0xff]
    %v2021 = vld [vmem:[%s3 + $0x90] sm:$0xff]
    %v2022 = vld [vmem:[%s3 + $0x98] sm:$0xff]
    %v2023 = vld [vmem:[%s3 + $0xa0] sm:$0xff]
    %v2024 = vld [vmem:[%s3 + $0xa8] sm:$0xff]
    %v2025 = vld [vmem:[%s3 + $0xb0] sm:$0xff]
    %v2026 = vld [vmem:[%s3 + $0xb8] sm:$0xff]
    %v2027 = vld [vmem:[%s3 + $0xc0] sm:$0xff]
    %v2028 = vld [vmem:[%s3 + $0xc8] sm:$0xff]
    %v2029 = vld [vmem:[%s3 + $0xd0] sm:$0xff]
    %v2030 = vld [vmem:[%s3 + $0xd8] sm:$0xff]
    %v2031 = vld [vmem:[%s3 + $0xe0] sm:$0xff]
    %v2032 = vld [vmem:[%s3 + $0xe8] sm:$0xff]
    %v2033 = vld [vmem:[%s3 + $0xf0] sm:$0xff]
    %v2034 = vld [vmem:[%s3 + $0xf8] sm:$0xff]
    %v2035 = vld [vmem:[%s3 + $0x100] sm:$0xff]
    %v2036 = vld [vmem:[%s3 + $0x108] sm:$0xff]
    %v2037 = vld [vmem:[%s3 + $0x110] sm:$0xff]
    %v2038 = vld [vmem:[%s3 + $0x118] sm:$0xff]
    %v2039 = vld [vmem:[%s3 + $0x120] sm:$0xff]
    %v2040 = vld [vmem:[%s3 + $0x128] sm:$0xff]
    %v2041 = vld [vmem:[%s3 + $0x130] sm:$0xff]
    %v2042 = vld [vmem:[%s3 + $0x138] sm:$0xff]
    %v2043 = vld [vmem:[%s3 + $0x140] sm:$0xff]
    %v2044 = vld [vmem:[%s3 + $0x148] sm:$0xff]
    %v2045 = vld [vmem:[%s3 + $0x150] sm:$0xff]
    %v2046 = vld [vmem:[%s3 + $0x158] sm:$0xff]
    %v2047 = vld [vmem:[%s2 + $0x17] sm:$0x1]
    %v2048 = vld [vmem:[%s2 + $0x18] sm:$0x1]
    %v2049 = vld [vmem:[%s2 + $0x19] sm:$0x1]
    %v2050 = vld [vmem:[%s2 + $0x1a] sm:$0x1]
    %v2051 = vld [vmem:[%s2 + $0x1b] sm:$0x1]
    %v2052 = vld [vmem:[%s2 + $0x1c] sm:$0x1]
    %v2053 = vld [vmem:[%s2 + $0x1d] sm:$0x1]
    %v2054 = vld [vmem:[%s2 + $0x1e] sm:$0x1]
    %v2055 = vld [vmem:[%s2 + $0x1f] sm:$0x1]
    %v2056 = vld [vmem:[%s2 + $0x20] sm:$0x1]
    %v2057 = vld [vmem:[%s0 + $0x300] sm:$0xff]
    %v2058 = vld [vmem:[%s0 + $0x308] sm:$0xff]
    %v2059 = vld [vmem:[%s0 + $0x310] sm:$0xff]
    %v2060 = vld [vmem:[%s0 + $0x318] sm:$0xff]
    %v2061 = vld [vmem:[%s0 + $0x320] sm:$0xff]
    %v2062 = vld [vmem:[%s0 + $0x328] sm:$0xff]
    %v2063 = vld [vmem:[%s0 + $0x330] sm:$0xff]
    %v2064 = vld [vmem:[%s0 + $0x338] sm:$0xff]
    %v2065 = vld [vmem:[%s0 + $0x340] sm:$0xff]
    %v2066 = vld [vmem:[%s0 + $0x348] sm:$0xff]
    %v2067 = vld [vmem:[%s0 + $0x350] sm:$0xff]
    %v2068 = vld [vmem:[%s0 + $0x358] sm:$0xff]
    %v2069 = vld [vmem:[%s0 + $0x360] sm:$0xff]
    %v2070 = vld [vmem:[%s0 + $0x368] sm:$0xff]
    %v2071 = vld [vmem:[%s0 + $0x370] sm:$0xff]
    %v2072 = vld [vmem:[%s0 + $0x378] sm:$0xff]
    %v2073 = vld [vmem:[%s0 + $0x380] sm:$0xff]
    %v2074 = vld [vmem:[%s0 + $0x388] sm:$0xff]
    %v2075 = vld [vmem:[%s0 + $0x390] sm:$0xff]
    %v2076 = vld [vmem:[%s0 + $0x398] sm:$0xff]
    %v2077 = vld [vmem:[%s0 + $0x3a0] sm:$0xff]
    %v2078 = vld [vmem:[%s0 + $0x3a8] sm:$0xff]
    %v2079 = vld [vmem:[%s0 + $0x3b0] sm:$0xff]
    %v2080 = vld [vmem:[%s0 + $0x3b8] sm:$0xff]
    %v2081 = vld [vmem:[%s0 + $0x3c0] sm:$0xff]
    %v2082 = vld [vmem:[%s0 + $0x3c8] sm:$0xff]
    %v2083 = vld [vmem:[%s0 + $0x3d0] sm:$0xff]
    %v2084 = vld [vmem:[%s0 + $0x3d8] sm:$0xff]
    %v2085 = vld [vmem:[%s0 + $0x3e0] sm:$0xff]
    %v2086 = vld [vmem:[%s0 + $0x3e8] sm:$0xff]
    %v2087 = vld [vmem:[%s0 + $0x3f0] sm:$0xff]
    %v2088 = vld [vmem:[%s0 + $0x3f8] sm:$0xff]
    %v2089 = vld [vmem:[%s0 + $0x400] sm:$0xff]
    %v2090 = vld [vmem:[%s0 + $0x408] sm:$0xff]
    %v2091 = vld [vmem:[%s0 + $0x410] sm:$0xff]
    %v2092 = vld [vmem:[%s0 + $0x418] sm:$0xff]
    %v2093 = vld [vmem:[%s0 + $0x420] sm:$0xff]
    %v2094 = vld [vmem:[%s0 + $0x428] sm:$0xff]
    %v2095 = vld [vmem:[%s0 + $0x430] sm:$0xff]
    %v2096 = vld [vmem:[%s0 + $0x438] sm:$0xff]
    %v2097 = vld [vmem:[%s0 + $0x440] sm:$0xff]
    %v2098 = vld [vmem:[%s0 + $0x448] sm:$0xff]
    %v2099 = vld [vmem:[%s0 + $0x450] sm:$0xff]
    %v2100 = vld [vmem:[%s0 + $0x458] sm:$0xff]
    %v2101 = vld [vmem:[%s0 + $0x460] sm:$0xff]
    %v2102 = vld [vmem:[%s0 + $0x468] sm:$0xff]
    %v2103 = vld [vmem:[%s0 + $0x470] sm:$0xff]
    %v2104 = vld [vmem:[%s0 + $0x478] sm:$0xff]
    %v2105 = vld [vmem:[%s1 + $0x400] sm:$0xff]
    %v2106 = vld [vmem:[%s1 + $0x408] sm:$0xff]
    %v2107 = vld [vmem:[%s1 + $0x410] sm:$0xff]
    %v2108 = vld [vmem:[%s1 + $0x418] sm:$0xff]
    %v2109 = vld [vmem:[%s1 + $0x420] sm:$0xff]
    %v2110 = vld [vmem:[%s1 + $0x428] sm:$0xff]
    %v2111 = vld [vmem:[%s1 + $0x430] sm:$0xff]
    %v2112 = vld [vmem:[%s1 + $0x438] sm:$0xff]
    %v2113 = vld [vmem:[%s1 + $0x440] sm:$0xff]
    %v2114 = vld [vmem:[%s1 + $0x448] sm:$0xff]
    %v2115 = vld [vmem:[%s1 + $0x450] sm:$0xff]
    %v2116 = vld [vmem:[%s1 + $0x458] sm:$0xff]
    %v2117 = vld [vmem:[%s1 + $0x460] sm:$0xff]
    %v2118 = vld [vmem:[%s1 + $0x468] sm:$0xff]
    %v2119 = vld [vmem:[%s1 + $0x470] sm:$0xff]
    %v2120 = vld [vmem:[%s1 + $0x478] sm:$0xff]
    %v2121 = vld [vmem:[%s1 + $0x480] sm:$0xff]
    %v2122 = vld [vmem:[%s1 + $0x488] sm:$0xff]
    %v2123 = vld [vmem:[%s1 + $0x490] sm:$0xff]
    %v2124 = vld [vmem:[%s1 + $0x498] sm:$0xff]
    %v2125 = vld [vmem:[%s1 + $0x4a0] sm:$0xff]
    %v2126 = vld [vmem:[%s1 + $0x4a8] sm:$0xff]
    %v2127 = vld [vmem:[%s1 + $0x4b0] sm:$0xff]
    %v2128 = vld [vmem:[%s1 + $0x4b8] sm:$0xff]
    %v2129 = vld [vmem:[%s1 + $0x4c0] sm:$0xff]
    %v2130 = vld [vmem:[%s1 + $0x4c8] sm:$0xff]
    %v2131 = vld [vmem:[%s1 + $0x4d0] sm:$0xff]
    %v2132 = vld [vmem:[%s1 + $0x4d8] sm:$0xff]
    %v2133 = vld [vmem:[%s1 + $0x4e0] sm:$0xff]
    %v2134 = vld [vmem:[%s1 + $0x4e8] sm:$0xff]
    %v2135 = vld [vmem:[%s1 + $0x4f0] sm:$0xff]
    %v2136 = vld [vmem:[%s1 + $0x4f8] sm:$0xff]
    %v2137 = vld [vmem:[%s1 + $0x500] sm:$0xff]
    %v2138 = vld [vmem:[%s1 + $0x508] sm:$0xff]
    %v2139 = vld [vmem:[%s1 + $0x510] sm:$0xff]
    %v2140 = vld [vmem:[%s1 + $0x518] sm:$0xff]
    %v2141 = vld [vmem:[%s1 + $0x520] sm:$0xff]
    %v2142 = vld [vmem:[%s1 + $0x528] sm:$0xff]
    %v2143 = vld [vmem:[%s1 + $0x530] sm:$0xff]
    %v2144 = vld [vmem:[%s1 + $0x538] sm:$0xff]
    %v2145 = vld [vmem:[%s1 + $0x540] sm:$0xff]
    %v2146 = vld [vmem:[%s1 + $0x548] sm:$0xff]
    %v2147 = vld [vmem:[%s1 + $0x550] sm:$0xff]
    %v2148 = vld [vmem:[%s1 + $0x558] sm:$0xff]
    %v2149 = vld [vmem:[%s1 + $0x560] sm:$0xff]
    %v2150 = vld [vmem:[%s1 + $0x568] sm:$0xff]
    %v2151 = vld [vmem:[%s1 + $0x570] sm:$0xff]
    %v2152 = vld [vmem:[%s1 + $0x578] sm:$0xff]
    %2153 = vadd.xlane.f32.xlu0 %v2007
    %v2154 = vpop.xlane.xlu0 %2153
    %2155 = vadd.xlane.f32.xlu0 %v2012
    %v2156 = vpop.xlane.xlu0 %2155
    %2157 = vadd.xlane.f32.xlu0 %v2017
    %v2158 = vpop.xlane.xlu0 %2157
    %v2159 = vmul.f32 %v2154, 0.0625
    %v2160 = vmul.f32 %v2156, 0.0625
    %v2161 = vmul.f32 %v2158, 0.0625
    %v2162 = vsub.f32 %v2007, %v2159
    %v2163 = vsub.f32 %v2012, %v2160
    %v2164 = vsub.f32 %v2017, %v2161
    %v2165 = vlaneseq
    %v2166 = vshrl.u32 %v2165, 7
    %v2167 = vsub.s32 0, %v2166
    %v2168 = vrot.slane %v21, %v2167
    %v2169 = vmul.f32 %v2162, %v2168
    %v2170 = vmul.f32 %v2163, %v2168
    %v2171 = vmul.f32 %v2164, %v2168
    %v2172 = vmul.f32 %v2169, %v2169
    %v2173 = vmul.f32 %v2170, %v2170
    %v2174 = vmul.f32 %v2171, %v2171
    %2175 = vadd.xlane.f32.xlu0 %v2172
    %v2176 = vpop.xlane.xlu0 %2175
    %2177 = vadd.xlane.f32.xlu0 %v2173
    %v2178 = vpop.xlane.xlu0 %2177
    %2179 = vadd.xlane.f32.xlu0 %v2174
    %v2180 = vpop.xlane.xlu0 %2179
    %v2181 = vmul.f32 %v2176, 0.0625
    %v2182 = vmul.f32 %v2178, 0.0625
    %v2183 = vmul.f32 %v2180, 0.0625
    %v2184 = vadd.f32 %v2181, 1e-06
    %v2185 = vadd.f32 %v2182, 1e-06
    %v2186 = vadd.f32 %v2183, 1e-06
    %v2187 = vrsqrt.pop %v2184
    %v2188 = vrsqrt.pop %v2185
    %v2189 = vrsqrt.pop %v2186
    %v2190 = vmul.f32 %v2169, %v2187
    %v2191 = vmul.f32 %v2170, %v2188
    %v2192 = vmul.f32 %v2171, %v2189
    %v2193 = vlaneseq
    %v2194 = vshrl.u32 %v2193, 7
    %v2195 = vsub.s32 0, %v2194
    %v2196 = vrot.slane %v2047, %v2195
    %v2197 = vmul.f32 %v2190, %v2196
    %v2198 = vmul.f32 %v2191, %v2196
    %v2199 = vmul.f32 %v2192, %v2196
    %v2200 = vlaneseq
    %v2201 = vshrl.u32 %v2200, 7
    %v2202 = vsub.s32 0, %v2201
    %v2203 = vrot.slane %v2048, %v2202
    %v2204 = vadd.f32 %v2197, %v2203
    %v2205 = vadd.f32 %v2198, %v2203
    %v2206 = vadd.f32 %v2199, %v2203
    %2207 = vmatprep.subr.mxu0 %v2058
    %2208 = vmatpush1.msra.mxu0 %v2057
    %2209 = vmatprep.subr.mxu0 %v2061
    %2210 = vmatpush1.msra.mxu0 %v2060
    %2211 = vmatprep.subr.mxu0 %v2064
    %2212 = vmatpush1.msra.mxu0 %v2063
    %2213 = vmatprep.subr.mxu0 %v2067
    %2214 = vmatpush1.msra.mxu0 %v2066
    %2215 = vmatprep.subr.mxu0 %v2070
    %2216 = vmatpush1.msra.mxu0 %v2069
    %2217 = vmatprep.subr.mxu0 %v2073
    %2218 = vmatpush1.msra.mxu0 %v2072
    %2219 = vmatprep.subr.mxu0 %v2076
    %2220 = vmatpush1.msra.mxu0 %v2075
    %2221 = vmatprep.subr.mxu0 %v2079
    %2222 = vmatpush1.msra.mxu0 %v2078
    %2223 = vmatprep.subr.mxu0 %v2082
    %2224 = vmatpush1.msra.mxu0 %v2081
    %2225 = vmatprep.subr.mxu0 %v2085
    %2226 = vmatpush1.msra.mxu0 %v2084
    %2227 = vmatprep.subr.mxu0 %v2088
    %2228 = vmatpush1.msra.mxu0 %v2087
    %2229 = vmatprep.subr.mxu0 %v2091
    %2230 = vmatpush1.msra.mxu0 %v2090
    %2231 = vmatprep.subr.mxu0 %v2094
    %2232 = vmatpush1.msra.mxu0 %v2093
    %2233 = vmatprep.subr.mxu0 %v2097
    %2234 = vmatpush1.msra.mxu0 %v2096
    %2235 = vmatprep.subr.mxu0 %v2100
    %2236 = vmatpush1.msra.mxu0 %v2099
    %2237 = vmatprep.subr.mxu0 %v2103
    %2238 = vmatpush1.msra.mxu0 %v2102
    %2239 = vmatprep.subr.mxu0 0.0
    %2240 = vmatpush1.msra.mxu0 0.0
    %2241 = vmatprep.subr.mxu0 0.0
    %2242 = vmatpush1.msra.mxu0 0.0
    %2243 = vmatprep.subr.mxu0 0.0
    %2244 = vmatpush1.msra.mxu0 0.0
    %2245 = vmatprep.subr.mxu0 0.0
    %2246 = vmatpush1.msra.mxu0 0.0
    %2247 = vmatprep.subr.mxu0 0.0
    %2248 = vmatpush1.msra.mxu0 0.0
    %2249 = vmatprep.subr.mxu0 0.0
    %2250 = vmatpush1.msra.mxu0 0.0
    %2251 = vmatprep.subr.mxu0 0.0
    %2252 = vmatpush1.msra.mxu0 0.0
    %2253 = vmatprep.subr.mxu0 0.0
    %2254 = vmatpush1.msra.mxu0 0.0
    %2255 = vmatprep.subr.mxu0 0.0
    %2256 = vmatpush1.msra.mxu0 0.0
    %2257 = vmatprep.subr.mxu0 0.0
    %2258 = vmatpush1.msra.mxu0 0.0
    %2259 = vmatprep.subr.mxu0 0.0
    %2260 = vmatpush1.msra.mxu0 0.0
    %2261 = vmatprep.subr.mxu0 0.0
    %2262 = vmatpush1.msra.mxu0 0.0
    %2263 = vmatprep.subr.mxu0 0.0
    %2264 = vmatpush1.msra.mxu0 0.0
    %2265 = vmatprep.subr.mxu0 0.0
    %2266 = vmatpush1.msra.mxu0 0.0
    %2267 = vmatprep.subr.mxu0 0.0
    %2268 = vmatpush1.msra.mxu0 0.0
    %2269 = vmatprep.subr.mxu0 0.0
    %2270 = vmatpush1.msra.mxu0 0.0
    %2271 = vmatprep.mubr.f32.mxu0 0.0
    %2272 = vmatmul.mubr.f32.gmra.mrb[0].mxu0 %v2204
    %v2273 = vpop.f32.mrb[0].mxu0
    %v2274 = vadd.f32 0.0, %v2273
    %v2275 = vpop.f32.mrb[0].mxu0
    %v2276 = vadd.f32 0.0, %v2275
    %2277 = vmatprep.mubr.f32.mxu0 0.0
    %2278 = vmatmul.mubr.f32.gmra.mrb[0].mxu0 %v2205
    %v2279 = vpop.f32.mrb[0].mxu0
    %v2280 = vadd.f32 0.0, %v2279
    %v2281 = vpop.f32.mrb[0].mxu0
    %v2282 = vadd.f32 0.0, %v2281
    %2283 = vmatprep.mubr.f32.mxu0 0.0
    %2284 = vmatmul.mubr.f32.gmra.mrb[0].mxu0 %v2206
    %v2285 = vpop.f32.mrb[0].mxu0
    %v2286 = vadd.f32 0.0, %v2285
    %v2287 = vpop.f32.mrb[0].mxu0
    %v2288 = vadd.f32 0.0, %v2287
    %2289 = vdwg.mxu0
    %2290 = vmatprep.subr.mxu0 0.0
    %2291 = vmatpush1.msra.mxu0 %v2059
    %2292 = vmatprep.subr.mxu0 0.0
    %2293 = vmatpush1.msra.mxu0 %v2062
    %2294 = vmatprep.subr.mxu0 0.0
    %2295 = vmatpush1.msra.mxu0 %v2065
    %2296 = vmatprep.subr.mxu0 0.0
    %2297 = vmatpush1.msra.mxu0 %v2068
    %2298 = vmatprep.subr.mxu0 0.0
    %2299 = vmatpush1.msra.mxu0 %v2071
    %2300 = vmatprep.subr.mxu0 0.0
    %2301 = vmatpush1.msra.mxu0 %v2074
    %2302 = vmatprep.subr.mxu0 0.0
    %2303 = vmatpush1.msra.mxu0 %v2077
    %2304 = vmatprep.subr.mxu0 0.0
    %2305 = vmatpush1.msra.mxu0 %v2080
    %2306 = vmatprep.subr.mxu0 0.0
    %2307 = vmatpush1.msra.mxu0 %v2083
    %2308 = vmatprep.subr.mxu0 0.0
    %2309 = vmatpush1.msra.mxu0 %v2086
    %2310 = vmatprep.subr.mxu0 0.0
    %2311 = vmatpush1.msra.mxu0 %v2089
    %2312 = vmatprep.subr.mxu0 0.0
    %2313 = vmatpush1.msra.mxu0 %v2092
    %2314 = vmatprep.subr.mxu0 0.0
    %2315 = vmatpush1.msra.mxu0 %v2095
    %2316 = vmatprep.subr.mxu0 0.0
    %2317 = vmatpush1.msra.mxu0 %v2098
    %2318 = vmatprep.subr.mxu0 0.0
    %2319 = vmatpush1.msra.mxu0 %v2101
    %2320 = vmatprep.subr.mxu0 0.0
    %2321 = vmatpush1.msra.mxu0 %v2104
    %2322 = vmatprep.subr.mxu0 0.0
    %2323 = vmatpush1.msra.mxu0 0.0
    %2324 = vmatprep.subr.mxu0 0.0
    %2325 = vmatpush1.msra.mxu0 0.0
    %2326 = vmatprep.subr.mxu0 0.0
    %2327 = vmatpush1.msra.mxu0 0.0
    %2328 = vmatprep.subr.mxu0 0.0
    %2329 = vmatpush1.msra.mxu0 0.0
    %2330 = vmatprep.subr.mxu0 0.0
    %2331 = vmatpush1.msra.mxu0 0.0
    %2332 = vmatprep.subr.mxu0 0.0
    %2333 = vmatpush1.msra.mxu0 0.0
    %2334 = vmatprep.subr.mxu0 0.0
    %2335 = vmatpush1.msra.mxu0 0.0
    %2336 = vmatprep.subr.mxu0 0.0
    %2337 = vmatpush1.msra.mxu0 0.0
    %2338 = vmatprep.subr.mxu0 0.0
    %2339 = vmatpush1.msra.mxu0 0.0
    %2340 = vmatprep.subr.mxu0 0.0
    %2341 = vmatpush1.msra.mxu0 0.0
    %2342 = vmatprep.subr.mxu0 0.0
    %2343 = vmatpush1.msra.mxu0 0.0
    %2344 = vmatprep.subr.mxu0 0.0
    %2345 = vmatpush1.msra.mxu0 0.0
    %2346 = vmatprep.subr.mxu0 0.0
    %2347 = vmatpush1.msra.mxu0 0.0
    %2348 = vmatprep.subr.mxu0 0.0
    %2349 = vmatpush1.msra.mxu0 0.0
    %2350 = vmatprep.subr.mxu0 0.0
    %2351 = vmatpush1.msra.mxu0 0.0
    %2352 = vmatprep.subr.mxu0 0.0
    %2353 = vmatpush1.msra.mxu0 0.0
    %2354 = vmatprep.mubr.f32.mxu0 0.0
    %2355 = vmatmul.mubr.f32.gmra.mrb[0].mxu0 %v2204
    %v2356 = vpop.f32.mrb[0].mxu0
    %v2357 = vadd.f32 0.0, %v2356
    %v2358 = vpop.f32.mrb[0].mxu0
    %2359 = vmatprep.mubr.f32.mxu0 0.0
    %2360 = vmatmul.mubr.f32.gmra.mrb[0].mxu0 %v2205
    %v2361 = vpop.f32.mrb[0].mxu0
    %v2362 = vadd.f32 0.0, %v2361
    %v2363 = vpop.f32.mrb[0].mxu0
    %2364 = vmatprep.mubr.f32.mxu0 0.0
    %2365 = vmatmul.mubr.f32.gmra.mrb[0].mxu0 %v2206
    %v2366 = vpop.f32.mrb[0].mxu0
    %v2367 = vadd.f32 0.0, %v2366
    %v2368 = vpop.f32.mrb[0].mxu0
    %2369 = vdwg.mxu0
    %v2370 = vlaneseq
    %v2371 = vshrl.u32 %v2370, 7
    %v2372 = vsub.s32 0, %v2371
    %v2373 = vrot.slane %v2049, %v2372
    %v2374 = vadd.f32 %v2274, %v2373
    %v2375 = vadd.f32 %v2280, %v2373
    %v2376 = vadd.f32 %v2286, %v2373
    %v2377 = vlaneseq
    %v2378 = vshrl.u32 %v2377, 7
    %v2379 = vsub.s32 0, %v2378
    %v2380 = vrot.slane %v2050, %v2379
    %v2381 = vadd.f32 %v2276, %v2380
    %v2382 = vadd.f32 %v2282, %v2380
    %v2383 = vadd.f32 %v2288, %v2380
    %v2384 = vlaneseq
    %v2385 = vshrl.u32 %v2384, 7
    %v2386 = vsub.s32 0, %v2385
    %v2387 = vrot.slane %v2051, %v2386
    %v2388 = vadd.f32 %v2357, %v2387
    %v2389 = vadd.f32 %v2362, %v2387
    %v2390 = vadd.f32 %v2367, %v2387
    %v2391 = vmul.f32 %v2374, %v2032
    %v2392 = vmul.f32 %v2375, %v2033
    %v2393 = vmul.f32 %v2376, %v2034
    %v2394 = vmul.f32 %v2374, %v2035
    %v2395 = vmul.f32 %v2375, %v2036
    %v2396 = vmul.f32 %v2376, %v2037
    %v2397 = vmul.f32 %v2374, %v2038
    %v2398 = vmul.f32 %v2375, %v2039
    %v2399 = vmul.f32 %v2376, %v2040
    %v2400 = vmul.f32 %v2374, %v2041
    %v2401 = vmul.f32 %v2375, %v2042
    %v2402 = vmul.f32 %v2376, %v2043
    %2403 = vmatprep.subr.mxu0 0.0
    %2404 = vmatpush1.xpose.msra.mxu0 %v2381
    %2405 = vmatprep.subr.mxu0 0.0
    %2406 = vmatpush1.xpose.msra.mxu0 %v2382
    %2407 = vmatprep.subr.mxu0 0.0
    %2408 = vmatpush1.xpose.msra.mxu0 %v2383
    %2409 = vmatprep.subr.mxu0 0.0
    %2410 = vmatpush1.xpose.msra.mxu0 0.0
    %2411 = vmatprep.subr.mxu0 0.0
    %2412 = vmatpush1.xpose.msra.mxu0 0.0
    %2413 = vmatprep.subr.mxu0 0.0
    %2414 = vmatpush1.xpose.msra.mxu0 0.0
    %2415 = vmatprep.subr.mxu0 0.0
    %2416 = vmatpush1.xpose.msra.mxu0 0.0
    %2417 = vmatprep.subr.mxu0 0.0
    %2418 = vmatpush1.xpose.msra.mxu0 0.0
    %2419 = vmatprep.subr.mxu0 0.0
    %2420 = vmatpush1.xpose.msra.mxu0 0.0
    %2421 = vmatprep.subr.mxu0 0.0
    %2422 = vmatpush1.xpose.msra.mxu0 0.0
    %2423 = vmatprep.subr.mxu0 0.0
    %2424 = vmatpush1.xpose.msra.mxu0 0.0
    %2425 = vmatprep.subr.mxu0 0.0
    %2426 = vmatpush1.xpose.msra.mxu0 0.0
    %2427 = vmatprep.subr.mxu0 0.0
    %2428 = vmatpush1.xpose.msra.mxu0 0.0
    %2429 = vmatprep.subr.mxu0 0.0
    %2430 = vmatpush1.xpose.msra.mxu0 0.0
    %2431 = vmatprep.subr.mxu0 0.0
    %2432 = vmatpush1.xpose.msra.mxu0 0.0
    %2433 = vmatprep.subr.mxu0 0.0
    %2434 = vmatpush1.xpose.msra.mxu0 0.0
    %2435 = vmatprep.subr.mxu0 0.0
    %2436 = vmatpush1.xpose.msra.mxu0 0.0
    %2437 = vmatprep.subr.mxu0 0.0
    %2438 = vmatpush1.xpose.msra.mxu0 0.0
    %2439 = vmatprep.subr.mxu0 0.0
    %2440 = vmatpush1.xpose.msra.mxu0 0.0
    %2441 = vmatprep.subr.mxu0 0.0
    %2442 = vmatpush1.xpose.msra.mxu0 0.0
    %2443 = vmatprep.subr.mxu0 0.0
    %2444 = vmatpush1.xpose.msra.mxu0 0.0
    %2445 = vmatprep.subr.mxu0 0.0
    %2446 = vmatpush1.xpose.msra.mxu0 0.0
    %2447 = vmatprep.subr.mxu0 0.0
    %2448 = vmatpush1.xpose.msra.mxu0 0.0
    %2449 = vmatprep.subr.mxu0 0.0
    %2450 = vmatpush1.xpose.msra.mxu0 0.0
    %2451 = vmatprep.subr.mxu0 0.0
    %2452 = vmatpush1.xpose.msra.mxu0 0.0
    %2453 = vmatprep.subr.mxu0 0.0
    %2454 = vmatpush1.xpose.msra.mxu0 0.0
    %2455 = vmatprep.subr.mxu0 0.0
    %2456 = vmatpush1.xpose.msra.mxu0 0.0
    %2457 = vmatprep.subr.mxu0 0.0
    %2458 = vmatpush1.xpose.msra.mxu0 0.0
    %2459 = vmatprep.subr.mxu0 0.0
    %2460 = vmatpush1.xpose.msra.mxu0 0.0
    %2461 = vmatprep.subr.mxu0 0.0
    %2462 = vmatpush1.xpose.msra.mxu0 0.0
    %2463 = vmatprep.subr.mxu0 0.0
    %2464 = vmatpush1.xpose.msra.mxu0 0.0
    %2465 = vmatprep.subr.mxu0 0.0
    %2466 = vmatpush1.xpose.msra.mxu0 0.0
    %2467 = vmatprep.mubr.f32.mxu0 0.0
    %2468 = vmatmul.mubr.f32.gmra.mrb[0].mxu0 %v2391
    %v2469 = vpop.f32.mrb[0].mxu0
    %v2470 = vadd.f32 %v2020, %v2469
    %v2471 = vpop.f32.mrb[0].mxu0
    %2472 = vmatprep.mubr.f32.mxu0 0.0
    %2473 = vmatmul.mubr.f32.gmra.mrb[0].mxu0 %v2392
    %v2474 = vpop.f32.mrb[0].mxu0
    %v2475 = vadd.f32 %v2021, %v2474
    %v2476 = vpop.f32.mrb[0].mxu0
    %2477 = vmatprep.mubr.f32.mxu0 0.0
    %2478 = vmatmul.mubr.f32.gmra.mrb[0].mxu0 %v2393
    %v2479 = vpop.f32.mrb[0].mxu0
    %v2480 = vadd.f32 %v2022, %v2479
    %v2481 = vpop.f32.mrb[0].mxu0
    %2482 = vmatprep.mubr.f32.mxu0 0.0
    %2483 = vmatmul.mubr.f32.gmra.mrb[0].mxu0 %v2394
    %v2484 = vpop.f32.mrb[0].mxu0
    %v2485 = vadd.f32 %v2023, %v2484
    %v2486 = vpop.f32.mrb[0].mxu0
    %2487 = vmatprep.mubr.f32.mxu0 0.0
    %2488 = vmatmul.mubr.f32.gmra.mrb[0].mxu0 %v2395
    %v2489 = vpop.f32.mrb[0].mxu0
    %v2490 = vadd.f32 %v2024, %v2489
    %v2491 = vpop.f32.mrb[0].mxu0
    %2492 = vmatprep.mubr.f32.mxu0 0.0
    %2493 = vmatmul.mubr.f32.gmra.mrb[0].mxu0 %v2396
    %v2494 = vpop.f32.mrb[0].mxu0
    %v2495 = vadd.f32 %v2025, %v2494
    %v2496 = vpop.f32.mrb[0].mxu0
    %2497 = vmatprep.mubr.f32.mxu0 0.0
    %2498 = vmatmul.mubr.f32.gmra.mrb[0].mxu0 %v2397
    %v2499 = vpop.f32.mrb[0].mxu0
    %v2500 = vadd.f32 %v2026, %v2499
    %v2501 = vpop.f32.mrb[0].mxu0
    %2502 = vmatprep.mubr.f32.mxu0 0.0
    %2503 = vmatmul.mubr.f32.gmra.mrb[0].mxu0 %v2398
    %v2504 = vpop.f32.mrb[0].mxu0
    %v2505 = vadd.f32 %v2027, %v2504
    %v2506 = vpop.f32.mrb[0].mxu0
    %2507 = vmatprep.mubr.f32.mxu0 0.0
    %2508 = vmatmul.mubr.f32.gmra.mrb[0].mxu0 %v2399
    %v2509 = vpop.f32.mrb[0].mxu0
    %v2510 = vadd.f32 %v2028, %v2509
    %v2511 = vpop.f32.mrb[0].mxu0
    %2512 = vmatprep.mubr.f32.mxu0 0.0
    %2513 = vmatmul.mubr.f32.gmra.mrb[0].mxu0 %v2400
    %v2514 = vpop.f32.mrb[0].mxu0
    %v2515 = vadd.f32 %v2029, %v2514
    %v2516 = vpop.f32.mrb[0].mxu0
    %2517 = vmatprep.mubr.f32.mxu0 0.0
    %2518 = vmatmul.mubr.f32.gmra.mrb[0].mxu0 %v2401
    %v2519 = vpop.f32.mrb[0].mxu0
    %v2520 = vadd.f32 %v2030, %v2519
    %v2521 = vpop.f32.mrb[0].mxu0
    %2522 = vmatprep.mubr.f32.mxu0 0.0
    %2523 = vmatmul.mubr.f32.gmra.mrb[0].mxu0 %v2402
    %v2524 = vpop.f32.mrb[0].mxu0
    %v2525 = vadd.f32 %v2031, %v2524
    %v2526 = vpop.f32.mrb[0].mxu0
    %2527 = vdwg.mxu0
    %vm2528 = vcmask 195584
    %v2529 = vsel %vm2528, %v2470, -inf
    %2530 = vmax.xlane.f32.xlu0 %v2529
    %v2531 = vpop.xlane.xlu0 %2530
    %v2532 = vsel %vm2528, %v2475, -inf
    %2533 = vmax.xlane.f32.xlu0 %v2532
    %v2534 = vpop.xlane.xlu0 %2533
    %v2535 = vsel %vm2528, %v2480, -inf
    %2536 = vmax.xlane.f32.xlu0 %v2535
    %v2537 = vpop.xlane.xlu0 %2536
    %v2538 = vsel %vm2528, %v2485, -inf
    %2539 = vmax.xlane.f32.xlu0 %v2538
    %v2540 = vpop.xlane.xlu0 %2539
    %v2541 = vsel %vm2528, %v2490, -inf
    %2542 = vmax.xlane.f32.xlu0 %v2541
    %v2543 = vpop.xlane.xlu0 %2542
    %v2544 = vsel %vm2528, %v2495, -inf
    %2545 = vmax.xlane.f32.xlu0 %v2544
    %v2546 = vpop.xlane.xlu0 %2545
    %v2547 = vsel %vm2528, %v2500, -inf
    %2548 = vmax.xlane.f32.xlu0 %v2547
    %v2549 = vpop.xlane.xlu0 %2548
    %v2550 = vsel %vm2528, %v2505, -inf
    %2551 = vmax.xlane.f32.xlu0 %v2550
    %v2552 = vpop.xlane.xlu0 %2551
    %v2553 = vsel %vm2528, %v2510, -inf
    %2554 = vmax.xlane.f32.xlu0 %v2553
    %v2555 = vpop.xlane.xlu0 %2554
    %v2556 = vsel %vm2528, %v2515, -inf
    %2557 = vmax.xlane.f32.xlu0 %v2556
    %v2558 = vpop.xlane.xlu0 %2557
    %v2559 = vsel %vm2528, %v2520, -inf
    %2560 = vmax.xlane.f32.xlu0 %v2559
    %v2561 = vpop.xlane.xlu0 %2560
    %v2562 = vsel %vm2528, %v2525, -inf
    %2563 = vmax.xlane.f32.xlu0 %v2562
    %v2564 = vpop.xlane.xlu0 %2563
    %v2565 = vsub.f32 %v2470, %v2531
    %v2566 = vsub.f32 %v2475, %v2534
    %v2567 = vsub.f32 %v2480, %v2537
    %v2568 = vsub.f32 %v2485, %v2540
    %v2569 = vsub.f32 %v2490, %v2543
    %v2570 = vsub.f32 %v2495, %v2546
    %v2571 = vsub.f32 %v2500, %v2549
    %v2572 = vsub.f32 %v2505, %v2552
    %v2573 = vsub.f32 %v2510, %v2555
    %v2574 = vsub.f32 %v2515, %v2558
    %v2575 = vsub.f32 %v2520, %v2561
    %v2576 = vsub.f32 %v2525, %v2564
    %v2577 = vmul.f32 %v2565, 1.442695
    %v2578 = vpow.pop %v2577
    %v2579 = vmul.f32 %v2566, 1.442695
    %v2580 = vpow.pop %v2579
    %v2581 = vmul.f32 %v2567, 1.442695
    %v2582 = vpow.pop %v2581
    %v2583 = vmul.f32 %v2568, 1.442695
    %v2584 = vpow.pop %v2583
    %v2585 = vmul.f32 %v2569, 1.442695
    %v2586 = vpow.pop %v2585
    %v2587 = vmul.f32 %v2570, 1.442695
    %v2588 = vpow.pop %v2587
    %v2589 = vmul.f32 %v2571, 1.442695
    %v2590 = vpow.pop %v2589
    %v2591 = vmul.f32 %v2572, 1.442695
    %v2592 = vpow.pop %v2591
    %v2593 = vmul.f32 %v2573, 1.442695
    %v2594 = vpow.pop %v2593
    %v2595 = vmul.f32 %v2574, 1.442695
    %v2596 = vpow.pop %v2595
    %v2597 = vmul.f32 %v2575, 1.442695
    %v2598 = vpow.pop %v2597
    %v2599 = vmul.f32 %v2576, 1.442695
    %v2600 = vpow.pop %v2599
    %v2601 = vsel %vm2528, %v2578, 0.0
    %2602 = vadd.xlane.f32.xlu0 %v2601
    %v2603 = vpop.xlane.xlu0 %2602
    %v2604 = vsel %vm2528, %v2580, 0.0
    %2605 = vadd.xlane.f32.xlu0 %v2604
    %v2606 = vpop.xlane.xlu0 %2605
    %v2607 = vsel %vm2528, %v2582, 0.0
    %2608 = vadd.xlane.f32.xlu0 %v2607
    %v2609 = vpop.xlane.xlu0 %2608
    %v2610 = vsel %vm2528, %v2584, 0.0
    %2611 = vadd.xlane.f32.xlu0 %v2610
    %v2612 = vpop.xlane.xlu0 %2611
    %v2613 = vsel %vm2528, %v2586, 0.0
    %2614 = vadd.xlane.f32.xlu0 %v2613
    %v2615 = vpop.xlane.xlu0 %2614
    %v2616 = vsel %vm2528, %v2588, 0.0
    %2617 = vadd.xlane.f32.xlu0 %v2616
    %v2618 = vpop.xlane.xlu0 %2617
    %v2619 = vsel %vm2528, %v2590, 0.0
    %2620 = vadd.xlane.f32.xlu0 %v2619
    %v2621 = vpop.xlane.xlu0 %2620
    %v2622 = vsel %vm2528, %v2592, 0.0
    %2623 = vadd.xlane.f32.xlu0 %v2622
    %v2624 = vpop.xlane.xlu0 %2623
    %v2625 = vsel %vm2528, %v2594, 0.0
    %2626 = vadd.xlane.f32.xlu0 %v2625
    %v2627 = vpop.xlane.xlu0 %2626
    %v2628 = vsel %vm2528, %v2596, 0.0
    %2629 = vadd.xlane.f32.xlu0 %v2628
    %v2630 = vpop.xlane.xlu0 %2629
    %v2631 = vsel %vm2528, %v2598, 0.0
    %2632 = vadd.xlane.f32.xlu0 %v2631
    %v2633 = vpop.xlane.xlu0 %2632
    %v2634 = vsel %vm2528, %v2600, 0.0
    %2635 = vadd.xlane.f32.xlu0 %v2634
    %v2636 = vpop.xlane.xlu0 %2635
    %v2637 = vrcp.pop %v2603
    %v2638 = vmul.f32 %v2578, %v2637
    %v2639 = vrcp.pop %v2606
    %v2640 = vmul.f32 %v2580, %v2639
    %v2641 = vrcp.pop %v2609
    %v2642 = vmul.f32 %v2582, %v2641
    %v2643 = vrcp.pop %v2612
    %v2644 = vmul.f32 %v2584, %v2643
    %v2645 = vrcp.pop %v2615
    %v2646 = vmul.f32 %v2586, %v2645
    %v2647 = vrcp.pop %v2618
    %v2648 = vmul.f32 %v2588, %v2647
    %v2649 = vrcp.pop %v2621
    %v2650 = vmul.f32 %v2590, %v2649
    %v2651 = vrcp.pop %v2624
    %v2652 = vmul.f32 %v2592, %v2651
    %v2653 = vrcp.pop %v2627
    %v2654 = vmul.f32 %v2594, %v2653
    %v2655 = vrcp.pop %v2630
    %v2656 = vmul.f32 %v2596, %v2655
    %v2657 = vrcp.pop %v2633
    %v2658 = vmul.f32 %v2598, %v2657
    %v2659 = vrcp.pop %v2636
    %v2660 = vmul.f32 %v2600, %v2659
    %v2662 = vsel %vm2528, %v2638, 0
    %v2665 = vsel %vm2528, %v2640, 0
    %v2668 = vsel %vm2528, %v2642, 0
    %v2671 = vsel %vm2528, %v2644, 0
    %v2674 = vsel %vm2528, %v2646, 0
    %v2677 = vsel %vm2528, %v2648, 0
    %v2680 = vsel %vm2528, %v2650, 0
    %v2683 = vsel %vm2528, %v2652, 0
    %v2686 = vsel %vm2528, %v2654, 0
    %v2689 = vsel %vm2528, %v2656, 0
    %v2692 = vsel %vm2528, %v2658, 0
    %v2695 = vsel %vm2528, %v2660, 0
    %2697 = vmatprep.subr.mxu0 0.0
    %2698 = vmatpush1.msra.mxu0 %v2388
    %2699 = vmatprep.subr.mxu0 0.0
    %2700 = vmatpush1.msra.mxu0 %v2389
    %2701 = vmatprep.subr.mxu0 0.0
    %2702 = vmatpush1.msra.mxu0 %v2390
    %2703 = vmatprep.subr.mxu0 0.0
    %2704 = vmatpush1.msra.mxu0 0.0
    %2705 = vmatprep.subr.mxu0 0.0
    %2706 = vmatpush1.msra.mxu0 0.0
    %2707 = vmatprep.subr.mxu0 0.0
    %2708 = vmatpush1.msra.mxu0 0.0
    %2709 = vmatprep.subr.mxu0 0.0
    %2710 = vmatpush1.msra.mxu0 0.0
    %2711 = vmatprep.subr.mxu0 0.0
    %2712 = vmatpush1.msra.mxu0 0.0
    %2713 = vmatprep.subr.mxu0 0.0
    %2714 = vmatpush1.msra.mxu0 0.0
    %2715 = vmatprep.subr.mxu0 0.0
    %2716 = vmatpush1.msra.mxu0 0.0
    %2717 = vmatprep.subr.mxu0 0.0
    %2718 = vmatpush1.msra.mxu0 0.0
    %2719 = vmatprep.subr.mxu0 0.0
    %2720 = vmatpush1.msra.mxu0 0.0
    %2721 = vmatprep.subr.mxu0 0.0
    %2722 = vmatpush1.msra.mxu0 0.0
    %2723 = vmatprep.subr.mxu0 0.0
    %2724 = vmatpush1.msra.mxu0 0.0
    %2725 = vmatprep.subr.mxu0 0.0
    %2726 = vmatpush1.msra.mxu0 0.0
    %2727 = vmatprep.subr.mxu0 0.0
    %2728 = vmatpush1.msra.mxu0 0.0
    %2729 = vmatprep.subr.mxu0 0.0
    %2730 = vmatpush1.msra.mxu0 0.0
    %2731 = vmatprep.subr.mxu0 0.0
    %2732 = vmatpush1.msra.mxu0 0.0
    %2733 = vmatprep.subr.mxu0 0.0
    %2734 = vmatpush1.msra.mxu0 0.0
    %2735 = vmatprep.subr.mxu0 0.0
    %2736 = vmatpush1.msra.mxu0 0.0
    %2737 = vmatprep.subr.mxu0 0.0
    %2738 = vmatpush1.msra.mxu0 0.0
    %2739 = vmatprep.subr.mxu0 0.0
    %2740 = vmatpush1.msra.mxu0 0.0
    %2741 = vmatprep.subr.mxu0 0.0
    %2742 = vmatpush1.msra.mxu0 0.0
    %2743 = vmatprep.subr.mxu0 0.0
    %2744 = vmatpush1.msra.mxu0 0.0
    %2745 = vmatprep.subr.mxu0 0.0
    %2746 = vmatpush1.msra.mxu0 0.0
    %2747 = vmatprep.subr.mxu0 0.0
    %2748 = vmatpush1.msra.mxu0 0.0
    %2749 = vmatprep.subr.mxu0 0.0
    %2750 = vmatpush1.msra.mxu0 0.0
    %2751 = vmatprep.subr.mxu0 0.0
    %2752 = vmatpush1.msra.mxu0 0.0
    %2753 = vmatprep.subr.mxu0 0.0
    %2754 = vmatpush1.msra.mxu0 0.0
    %2755 = vmatprep.subr.mxu0 0.0
    %2756 = vmatpush1.msra.mxu0 0.0
    %2757 = vmatprep.subr.mxu0 0.0
    %2758 = vmatpush1.msra.mxu0 0.0
    %2759 = vmatprep.subr.mxu0 0.0
    %2760 = vmatpush1.msra.mxu0 0.0
    %2761 = vmatprep.mubr.f32.mxu0 0.0
    %2762 = vmatmul.mubr.f32.gmra.mrb[0].mxu0 %v2662
    %v2763 = vpop.f32.mrb[0].mxu0
    %v2764 = vadd.f32 0.0, %v2763
    %v2765 = vpop.f32.mrb[0].mxu0
    %2766 = vmatprep.mubr.f32.mxu0 0.0
    %2767 = vmatmul.mubr.f32.gmra.mrb[0].mxu0 %v2665
    %v2768 = vpop.f32.mrb[0].mxu0
    %v2769 = vadd.f32 0.0, %v2768
    %v2770 = vpop.f32.mrb[0].mxu0
    %2771 = vmatprep.mubr.f32.mxu0 0.0
    %2772 = vmatmul.mubr.f32.gmra.mrb[0].mxu0 %v2668
    %v2773 = vpop.f32.mrb[0].mxu0
    %v2774 = vadd.f32 0.0, %v2773
    %v2775 = vpop.f32.mrb[0].mxu0
    %2776 = vmatprep.mubr.f32.mxu0 0.0
    %2777 = vmatmul.mubr.f32.gmra.mrb[0].mxu0 %v2671
    %v2778 = vpop.f32.mrb[0].mxu0
    %v2779 = vadd.f32 0.0, %v2778
    %v2780 = vpop.f32.mrb[0].mxu0
    %2781 = vmatprep.mubr.f32.mxu0 0.0
    %2782 = vmatmul.mubr.f32.gmra.mrb[0].mxu0 %v2674
    %v2783 = vpop.f32.mrb[0].mxu0
    %v2784 = vadd.f32 0.0, %v2783
    %v2785 = vpop.f32.mrb[0].mxu0
    %2786 = vmatprep.mubr.f32.mxu0 0.0
    %2787 = vmatmul.mubr.f32.gmra.mrb[0].mxu0 %v2677
    %v2788 = vpop.f32.mrb[0].mxu0
    %v2789 = vadd.f32 0.0, %v2788
    %v2790 = vpop.f32.mrb[0].mxu0
    %2791 = vmatprep.mubr.f32.mxu0 0.0
    %2792 = vmatmul.mubr.f32.gmra.mrb[0].mxu0 %v2680
    %v2793 = vpop.f32.mrb[0].mxu0
    %v2794 = vadd.f32 0.0, %v2793
    %v2795 = vpop.f32.mrb[0].mxu0
    %2796 = vmatprep.mubr.f32.mxu0 0.0
    %2797 = vmatmul.mubr.f32.gmra.mrb[0].mxu0 %v2683
    %v2798 = vpop.f32.mrb[0].mxu0
    %v2799 = vadd.f32 0.0, %v2798
    %v2800 = vpop.f32.mrb[0].mxu0
    %2801 = vmatprep.mubr.f32.mxu0 0.0
    %2802 = vmatmul.mubr.f32.gmra.mrb[0].mxu0 %v2686
    %v2803 = vpop.f32.mrb[0].mxu0
    %v2804 = vadd.f32 0.0, %v2803
    %v2805 = vpop.f32.mrb[0].mxu0
    %2806 = vmatprep.mubr.f32.mxu0 0.0
    %2807 = vmatmul.mubr.f32.gmra.mrb[0].mxu0 %v2689
    %v2808 = vpop.f32.mrb[0].mxu0
    %v2809 = vadd.f32 0.0, %v2808
    %v2810 = vpop.f32.mrb[0].mxu0
    %2811 = vmatprep.mubr.f32.mxu0 0.0
    %2812 = vmatmul.mubr.f32.gmra.mrb[0].mxu0 %v2692
    %v2813 = vpop.f32.mrb[0].mxu0
    %v2814 = vadd.f32 0.0, %v2813
    %v2815 = vpop.f32.mrb[0].mxu0
    %2816 = vmatprep.mubr.f32.mxu0 0.0
    %2817 = vmatmul.mubr.f32.gmra.mrb[0].mxu0 %v2695
    %v2818 = vpop.f32.mrb[0].mxu0
    %v2819 = vadd.f32 0.0, %v2818
    %v2820 = vpop.f32.mrb[0].mxu0
    %2821 = vdwg.mxu0
    %v2822 = vmul.f32 %v2764, %v2032
    %v2823 = vmul.f32 %v2769, %v2033
    %v2824 = vmul.f32 %v2774, %v2034
    %v2825 = vmul.f32 %v2779, %v2035
    %v2826 = vmul.f32 %v2784, %v2036
    %v2827 = vmul.f32 %v2789, %v2037
    %v2828 = vmul.f32 %v2794, %v2038
    %v2829 = vmul.f32 %v2799, %v2039
    %v2830 = vmul.f32 %v2804, %v2040
    %v2831 = vmul.f32 %v2809, %v2041
    %v2832 = vmul.f32 %v2814, %v2042
    %v2833 = vmul.f32 %v2819, %v2043
    %vm2834 = vcmask 785408
    %v2836 = vsel %vm2834, %v2044, 0
    %v2839 = vsel %vm2834, %v2045, 0
    %v2842 = vsel %vm2834, %v2046, 0
    %2844 = vmatprep.subr.mxu0 0.0
    %2845 = vmatpush1.msra.mxu0 %v2822
    %2846 = vmatprep.subr.mxu0 0.0
    %2847 = vmatpush1.msra.mxu0 %v2823
    %2848 = vmatprep.subr.mxu0 0.0
    %2849 = vmatpush1.msra.mxu0 %v2824
    %2850 = vmatprep.subr.mxu0 0.0
    %2851 = vmatpush1.msra.mxu0 %v2825
    %2852 = vmatprep.subr.mxu0 0.0
    %2853 = vmatpush1.msra.mxu0 %v2826
    %2854 = vmatprep.subr.mxu0 0.0
    %2855 = vmatpush1.msra.mxu0 %v2827
    %2856 = vmatprep.subr.mxu0 0.0
    %2857 = vmatpush1.msra.mxu0 %v2828
    %2858 = vmatprep.subr.mxu0 0.0
    %2859 = vmatpush1.msra.mxu0 %v2829
    %2860 = vmatprep.subr.mxu0 0.0
    %2861 = vmatpush1.msra.mxu0 %v2830
    %2862 = vmatprep.subr.mxu0 0.0
    %2863 = vmatpush1.msra.mxu0 %v2831
    %2864 = vmatprep.subr.mxu0 0.0
    %2865 = vmatpush1.msra.mxu0 %v2832
    %2866 = vmatprep.subr.mxu0 0.0
    %2867 = vmatpush1.msra.mxu0 %v2833
    %2868 = vmatprep.subr.mxu0 0.0
    %2869 = vmatpush1.msra.mxu0 0.0
    %2870 = vmatprep.subr.mxu0 0.0
    %2871 = vmatpush1.msra.mxu0 0.0
    %2872 = vmatprep.subr.mxu0 0.0
    %2873 = vmatpush1.msra.mxu0 0.0
    %2874 = vmatprep.subr.mxu0 0.0
    %2875 = vmatpush1.msra.mxu0 0.0
    %2876 = vmatprep.subr.mxu0 0.0
    %2877 = vmatpush1.msra.mxu0 0.0
    %2878 = vmatprep.subr.mxu0 0.0
    %2879 = vmatpush1.msra.mxu0 0.0
    %2880 = vmatprep.subr.mxu0 0.0
    %2881 = vmatpush1.msra.mxu0 0.0
    %2882 = vmatprep.subr.mxu0 0.0
    %2883 = vmatpush1.msra.mxu0 0.0
    %2884 = vmatprep.subr.mxu0 0.0
    %2885 = vmatpush1.msra.mxu0 0.0
    %2886 = vmatprep.subr.mxu0 0.0
    %2887 = vmatpush1.msra.mxu0 0.0
    %2888 = vmatprep.subr.mxu0 0.0
    %2889 = vmatpush1.msra.mxu0 0.0
    %2890 = vmatprep.subr.mxu0 0.0
    %2891 = vmatpush1.msra.mxu0 0.0
    %2892 = vmatprep.subr.mxu0 0.0
    %2893 = vmatpush1.msra.mxu0 0.0
    %2894 = vmatprep.subr.mxu0 0.0
    %2895 = vmatpush1.msra.mxu0 0.0
    %2896 = vmatprep.subr.mxu0 0.0
    %2897 = vmatpush1.msra.mxu0 0.0
    %2898 = vmatprep.subr.mxu0 0.0
    %2899 = vmatpush1.msra.mxu0 0.0
    %2900 = vmatprep.subr.mxu0 0.0
    %2901 = vmatpush1.msra.mxu0 0.0
    %2902 = vmatprep.subr.mxu0 0.0
    %2903 = vmatpush1.msra.mxu0 0.0
    %2904 = vmatprep.subr.mxu0 0.0
    %2905 = vmatpush1.msra.mxu0 0.0
    %2906 = vmatprep.subr.mxu0 0.0
    %2907 = vmatpush1.msra.mxu0 0.0
    %2908 = vmatprep.mubr.f32.mxu0 0.0
    %2909 = vmatmul.mubr.f32.gmra.mrb[0].mxu0 %v2836
    %v2910 = vpop.f32.mrb[0].mxu0
    %v2911 = vadd.f32 0.0, %v2910
    %v2912 = vpop.f32.mrb[0].mxu0
    %2913 = vmatprep.mubr.f32.mxu0 0.0
    %2914 = vmatmul.mubr.f32.gmra.mrb[0].mxu0 %v2839
    %v2915 = vpop.f32.mrb[0].mxu0
    %v2916 = vadd.f32 0.0, %v2915
    %v2917 = vpop.f32.mrb[0].mxu0
    %2918 = vmatprep.mubr.f32.mxu0 0.0
    %2919 = vmatmul.mubr.f32.gmra.mrb[0].mxu0 %v2842
    %v2920 = vpop.f32.mrb[0].mxu0
    %v2921 = vadd.f32 0.0, %v2920
    %v2922 = vpop.f32.mrb[0].mxu0
    %2923 = vdwg.mxu0
    %2924 = vmatprep.subr.mxu0 0.0
    %2925 = vmatpush1.msra.mxu0 %v2105
    %2926 = vmatprep.subr.mxu0 0.0
    %2927 = vmatpush1.msra.mxu0 %v2106
    %2928 = vmatprep.subr.mxu0 0.0
    %2929 = vmatpush1.msra.mxu0 %v2107
    %2930 = vmatprep.subr.mxu0 0.0
    %2931 = vmatpush1.msra.mxu0 %v2108
    %2932 = vmatprep.subr.mxu0 0.0
    %2933 = vmatpush1.msra.mxu0 %v2109
    %2934 = vmatprep.subr.mxu0 0.0
    %2935 = vmatpush1.msra.mxu0 %v2110
    %2936 = vmatprep.subr.mxu0 0.0
    %2937 = vmatpush1.msra.mxu0 %v2111
    %2938 = vmatprep.subr.mxu0 0.0
    %2939 = vmatpush1.msra.mxu0 %v2112
    %2940 = vmatprep.subr.mxu0 0.0
    %2941 = vmatpush1.msra.mxu0 %v2113
    %2942 = vmatprep.subr.mxu0 0.0
    %2943 = vmatpush1.msra.mxu0 %v2114
    %2944 = vmatprep.subr.mxu0 0.0
    %2945 = vmatpush1.msra.mxu0 %v2115
    %2946 = vmatprep.subr.mxu0 0.0
    %2947 = vmatpush1.msra.mxu0 %v2116
    %2948 = vmatprep.subr.mxu0 0.0
    %2949 = vmatpush1.msra.mxu0 %v2117
    %2950 = vmatprep.subr.mxu0 0.0
    %2951 = vmatpush1.msra.mxu0 %v2118
    %2952 = vmatprep.subr.mxu0 0.0
    %2953 = vmatpush1.msra.mxu0 %v2119
    %2954 = vmatprep.subr.mxu0 0.0
    %2955 = vmatpush1.msra.mxu0 %v2120
    %2956 = vmatprep.subr.mxu0 0.0
    %2957 = vmatpush1.msra.mxu0 0.0
    %2958 = vmatprep.subr.mxu0 0.0
    %2959 = vmatpush1.msra.mxu0 0.0
    %2960 = vmatprep.subr.mxu0 0.0
    %2961 = vmatpush1.msra.mxu0 0.0
    %2962 = vmatprep.subr.mxu0 0.0
    %2963 = vmatpush1.msra.mxu0 0.0
    %2964 = vmatprep.subr.mxu0 0.0
    %2965 = vmatpush1.msra.mxu0 0.0
    %2966 = vmatprep.subr.mxu0 0.0
    %2967 = vmatpush1.msra.mxu0 0.0
    %2968 = vmatprep.subr.mxu0 0.0
    %2969 = vmatpush1.msra.mxu0 0.0
    %2970 = vmatprep.subr.mxu0 0.0
    %2971 = vmatpush1.msra.mxu0 0.0
    %2972 = vmatprep.subr.mxu0 0.0
    %2973 = vmatpush1.msra.mxu0 0.0
    %2974 = vmatprep.subr.mxu0 0.0
    %2975 = vmatpush1.msra.mxu0 0.0
    %2976 = vmatprep.subr.mxu0 0.0
    %2977 = vmatpush1.msra.mxu0 0.0
    %2978 = vmatprep.subr.mxu0 0.0
    %2979 = vmatpush1.msra.mxu0 0.0
    %2980 = vmatprep.subr.mxu0 0.0
    %2981 = vmatpush1.msra.mxu0 0.0
    %2982 = vmatprep.subr.mxu0 0.0
    %2983 = vmatpush1.msra.mxu0 0.0
    %2984 = vmatprep.subr.mxu0 0.0
    %2985 = vmatpush1.msra.mxu0 0.0
    %2986 = vmatprep.subr.mxu0 0.0
    %2987 = vmatpush1.msra.mxu0 0.0
    %2988 = vmatprep.mubr.f32.mxu0 0.0
    %2989 = vmatmul.mubr.f32.gmra.mrb[0].mxu0 %v2911
    %v2990 = vpop.f32.mrb[0].mxu0
    %v2991 = vadd.f32 0.0, %v2990
    %v2992 = vpop.f32.mrb[0].mxu0
    %2993 = vmatprep.mubr.f32.mxu0 0.0
    %2994 = vmatmul.mubr.f32.gmra.mrb[0].mxu0 %v2916
    %v2995 = vpop.f32.mrb[0].mxu0
    %v2996 = vadd.f32 0.0, %v2995
    %v2997 = vpop.f32.mrb[0].mxu0
    %2998 = vmatprep.mubr.f32.mxu0 0.0
    %2999 = vmatmul.mubr.f32.gmra.mrb[0].mxu0 %v2921
    %v3000 = vpop.f32.mrb[0].mxu0
    %v3001 = vadd.f32 0.0, %v3000
    %v3002 = vpop.f32.mrb[0].mxu0
    %3003 = vdwg.mxu0
    %v3004 = vadd.f32 %v2007, %v2991
    %v3005 = vadd.f32 %v2012, %v2996
    %v3006 = vadd.f32 %v2017, %v3001
    %v3007 = vlaneseq
    %v3008 = vshrl.u32 %v3007, 7
    %v3009 = vsub.s32 0, %v3008
    %v3010 = vrot.slane %v2052, %v3009
    %v3011 = vadd.f32 %v3004, %v3010
    %v3012 = vadd.f32 %v3005, %v3010
    %v3013 = vadd.f32 %v3006, %v3010
    %3014 = vadd.xlane.f32.xlu0 %v3011
    %v3015 = vpop.xlane.xlu0 %3014
    %3016 = vadd.xlane.f32.xlu0 %v3012
    %v3017 = vpop.xlane.xlu0 %3016
    %3018 = vadd.xlane.f32.xlu0 %v3013
    %v3019 = vpop.xlane.xlu0 %3018
    %v3020 = vmul.f32 %v3015, 0.0625
    %v3021 = vmul.f32 %v3017, 0.0625
    %v3022 = vmul.f32 %v3019, 0.0625
    %v3023 = vsub.f32 %v3011, %v3020
    %v3024 = vsub.f32 %v3012, %v3021
    %v3025 = vsub.f32 %v3013, %v3022
    %v3026 = vmul.f32 %v3023, %v2168
    %v3027 = vmul.f32 %v3024, %v2168
    %v3028 = vmul.f32 %v3025, %v2168
    %v3029 = vmul.f32 %v3026, %v3026
    %v3030 = vmul.f32 %v3027, %v3027
    %v3031 = vmul.f32 %v3028, %v3028
    %3032 = vadd.xlane.f32.xlu0 %v3029
    %v3033 = vpop.xlane.xlu0 %3032
    %3034 = vadd.xlane.f32.xlu0 %v3030
    %v3035 = vpop.xlane.xlu0 %3034
    %3036 = vadd.xlane.f32.xlu0 %v3031
    %v3037 = vpop.xlane.xlu0 %3036
    %v3038 = vmul.f32 %v3033, 0.0625
    %v3039 = vmul.f32 %v3035, 0.0625
    %v3040 = vmul.f32 %v3037, 0.0625
    %v3041 = vadd.f32 %v3038, 1e-06
    %v3042 = vadd.f32 %v3039, 1e-06
    %v3043 = vadd.f32 %v3040, 1e-06
    %v3044 = vrsqrt.pop %v3041
    %v3045 = vrsqrt.pop %v3042
    %v3046 = vrsqrt.pop %v3043
    %v3047 = vmul.f32 %v3026, %v3044
    %v3048 = vmul.f32 %v3027, %v3045
    %v3049 = vmul.f32 %v3028, %v3046
    %v3050 = vlaneseq
    %v3051 = vshrl.u32 %v3050, 7
    %v3052 = vsub.s32 0, %v3051
    %v3053 = vrot.slane %v2053, %v3052
    %v3054 = vmul.f32 %v3047, %v3053
    %v3055 = vmul.f32 %v3048, %v3053
    %v3056 = vmul.f32 %v3049, %v3053
    %v3057 = vlaneseq
    %v3058 = vshrl.u32 %v3057, 7
    %v3059 = vsub.s32 0, %v3058
    %v3060 = vrot.slane %v2054, %v3059
    %v3061 = vadd.f32 %v3054, %v3060
    %v3062 = vadd.f32 %v3055, %v3060
    %v3063 = vadd.f32 %v3056, %v3060
    %v3064 = vlaneseq
    %v3065 = vshrl.u32 %v3064, 7
    %v3066 = vsub.s32 0, %v3065
    %v3067 = vrot.slane %v2055, %v3066
    %3068 = vmatprep.subr.mxu0 0.0
    %3069 = vmatpush1.msra.mxu0 %v2121
    %3070 = vmatprep.subr.mxu0 0.0
    %3071 = vmatpush1.msra.mxu0 %v2122
    %3072 = vmatprep.subr.mxu0 0.0
    %3073 = vmatpush1.msra.mxu0 %v2123
    %3074 = vmatprep.subr.mxu0 0.0
    %3075 = vmatpush1.msra.mxu0 %v2124
    %3076 = vmatprep.subr.mxu0 0.0
    %3077 = vmatpush1.msra.mxu0 %v2125
    %3078 = vmatprep.subr.mxu0 0.0
    %3079 = vmatpush1.msra.mxu0 %v2126
    %3080 = vmatprep.subr.mxu0 0.0
    %3081 = vmatpush1.msra.mxu0 %v2127
    %3082 = vmatprep.subr.mxu0 0.0
    %3083 = vmatpush1.msra.mxu0 %v2128
    %3084 = vmatprep.subr.mxu0 0.0
    %3085 = vmatpush1.msra.mxu0 %v2129
    %3086 = vmatprep.subr.mxu0 0.0
    %3087 = vmatpush1.msra.mxu0 %v2130
    %3088 = vmatprep.subr.mxu0 0.0
    %3089 = vmatpush1.msra.mxu0 %v2131
    %3090 = vmatprep.subr.mxu0 0.0
    %3091 = vmatpush1.msra.mxu0 %v2132
    %3092 = vmatprep.subr.mxu0 0.0
    %3093 = vmatpush1.msra.mxu0 %v2133
    %3094 = vmatprep.subr.mxu0 0.0
    %3095 = vmatpush1.msra.mxu0 %v2134
    %3096 = vmatprep.subr.mxu0 0.0
    %3097 = vmatpush1.msra.mxu0 %v2135
    %3098 = vmatprep.subr.mxu0 0.0
    %3099 = vmatpush1.msra.mxu0 %v2136
    %3100 = vmatprep.subr.mxu0 0.0
    %3101 = vmatpush1.msra.mxu0 0.0
    %3102 = vmatprep.subr.mxu0 0.0
    %3103 = vmatpush1.msra.mxu0 0.0
    %3104 = vmatprep.subr.mxu0 0.0
    %3105 = vmatpush1.msra.mxu0 0.0
    %3106 = vmatprep.subr.mxu0 0.0
    %3107 = vmatpush1.msra.mxu0 0.0
    %3108 = vmatprep.subr.mxu0 0.0
    %3109 = vmatpush1.msra.mxu0 0.0
    %3110 = vmatprep.subr.mxu0 0.0
    %3111 = vmatpush1.msra.mxu0 0.0
    %3112 = vmatprep.subr.mxu0 0.0
    %3113 = vmatpush1.msra.mxu0 0.0
    %3114 = vmatprep.subr.mxu0 0.0
    %3115 = vmatpush1.msra.mxu0 0.0
    %3116 = vmatprep.subr.mxu0 0.0
    %3117 = vmatpush1.msra.mxu0 0.0
    %3118 = vmatprep.subr.mxu0 0.0
    %3119 = vmatpush1.msra.mxu0 0.0
    %3120 = vmatprep.subr.mxu0 0.0
    %3121 = vmatpush1.msra.mxu0 0.0
    %3122 = vmatprep.subr.mxu0 0.0
    %3123 = vmatpush1.msra.mxu0 0.0
    %3124 = vmatprep.subr.mxu0 0.0
    %3125 = vmatpush1.msra.mxu0 0.0
    %3126 = vmatprep.subr.mxu0 0.0
    %3127 = vmatpush1.msra.mxu0 0.0
    %3128 = vmatprep.subr.mxu0 0.0
    %3129 = vmatpush1.msra.mxu0 0.0
    %3130 = vmatprep.subr.mxu0 0.0
    %3131 = vmatpush1.msra.mxu0 0.0
    %3132 = vmatprep.mubr.f32.mxu0 0.0
    %3133 = vmatmul.mubr.f32.gmra.mrb[0].mxu0 %v3061
    %v3134 = vpop.f32.mrb[0].mxu0
    %v3135 = vadd.f32 %v3067, %v3134
    %v3136 = vpop.f32.mrb[0].mxu0
    %3137 = vmatprep.mubr.f32.mxu0 0.0
    %3138 = vmatmul.mubr.f32.gmra.mrb[0].mxu0 %v3062
    %v3139 = vpop.f32.mrb[0].mxu0
    %v3140 = vadd.f32 %v3067, %v3139
    %v3141 = vpop.f32.mrb[0].mxu0
    %3142 = vmatprep.mubr.f32.mxu0 0.0
    %3143 = vmatmul.mubr.f32.gmra.mrb[0].mxu0 %v3063
    %v3144 = vpop.f32.mrb[0].mxu0
    %v3145 = vadd.f32 %v3067, %v3144
    %v3146 = vpop.f32.mrb[0].mxu0
    %3147 = vdwg.mxu0
    %v3148 = vmul.f32 %v3135, 0.5
    %v3149 = vmul.f32 %v3140, 0.5
    %v3150 = vmul.f32 %v3145, 0.5
    %v3151 = vmul.f32 %v3135, 0.70710677
    %v3152 = vmul.f32 %v3140, 0.70710677
    %v3153 = vmul.f32 %v3145, 0.70710677
    %v3154 = verf.f32.pop %v3151
    %v3155 = verf.f32.pop %v3152
    %v3156 = verf.f32.pop %v3153
    %v3157 = vadd.f32 %v3154, 1.0
    %v3158 = vadd.f32 %v3155, 1.0
    %v3159 = vadd.f32 %v3156, 1.0
    %v3160 = vmul.f32 %v3148, %v3157
    %v3161 = vmul.f32 %v3149, %v3158
    %v3162 = vmul.f32 %v3150, %v3159
    %3163 = vmatprep.subr.mxu0 0.0
    %3164 = vmatpush1.msra.mxu0 %v2137
    %3165 = vmatprep.subr.mxu0 0.0
    %3166 = vmatpush1.msra.mxu0 %v2138
    %3167 = vmatprep.subr.mxu0 0.0
    %3168 = vmatpush1.msra.mxu0 %v2139
    %3169 = vmatprep.subr.mxu0 0.0
    %3170 = vmatpush1.msra.mxu0 %v2140
    %3171 = vmatprep.subr.mxu0 0.0
    %3172 = vmatpush1.msra.mxu0 %v2141
    %3173 = vmatprep.subr.mxu0 0.0
    %3174 = vmatpush1.msra.mxu0 %v2142
    %3175 = vmatprep.subr.mxu0 0.0
    %3176 = vmatpush1.msra.mxu0 %v2143
    %3177 = vmatprep.subr.mxu0 0.0
    %3178 = vmatpush1.msra.mxu0 %v2144
    %3179 = vmatprep.subr.mxu0 0.0
    %3180 = vmatpush1.msra.mxu0 %v2145
    %3181 = vmatprep.subr.mxu0 0.0
    %3182 = vmatpush1.msra.mxu0 %v2146
    %3183 = vmatprep.subr.mxu0 0.0
    %3184 = vmatpush1.msra.mxu0 %v2147
    %3185 = vmatprep.subr.mxu0 0.0
    %3186 = vmatpush1.msra.mxu0 %v2148
    %3187 = vmatprep.subr.mxu0 0.0
    %3188 = vmatpush1.msra.mxu0 %v2149
    %3189 = vmatprep.subr.mxu0 0.0
    %3190 = vmatpush1.msra.mxu0 %v2150
    %3191 = vmatprep.subr.mxu0 0.0
    %3192 = vmatpush1.msra.mxu0 %v2151
    %3193 = vmatprep.subr.mxu0 0.0
    %3194 = vmatpush1.msra.mxu0 %v2152
    %3195 = vmatprep.subr.mxu0 0.0
    %3196 = vmatpush1.msra.mxu0 0.0
    %3197 = vmatprep.subr.mxu0 0.0
    %3198 = vmatpush1.msra.mxu0 0.0
    %3199 = vmatprep.subr.mxu0 0.0
    %3200 = vmatpush1.msra.mxu0 0.0
    %3201 = vmatprep.subr.mxu0 0.0
    %3202 = vmatpush1.msra.mxu0 0.0
    %3203 = vmatprep.subr.mxu0 0.0
    %3204 = vmatpush1.msra.mxu0 0.0
    %3205 = vmatprep.subr.mxu0 0.0
    %3206 = vmatpush1.msra.mxu0 0.0
    %3207 = vmatprep.subr.mxu0 0.0
    %3208 = vmatpush1.msra.mxu0 0.0
    %3209 = vmatprep.subr.mxu0 0.0
    %3210 = vmatpush1.msra.mxu0 0.0
    %3211 = vmatprep.subr.mxu0 0.0
    %3212 = vmatpush1.msra.mxu0 0.0
    %3213 = vmatprep.subr.mxu0 0.0
    %3214 = vmatpush1.msra.mxu0 0.0
    %3215 = vmatprep.subr.mxu0 0.0
    %3216 = vmatpush1.msra.mxu0 0.0
    %3217 = vmatprep.subr.mxu0 0.0
    %3218 = vmatpush1.msra.mxu0 0.0
    %3219 = vmatprep.subr.mxu0 0.0
    %3220 = vmatpush1.msra.mxu0 0.0
    %3221 = vmatprep.subr.mxu0 0.0
    %3222 = vmatpush1.msra.mxu0 0.0
    %3223 = vmatprep.subr.mxu0 0.0
    %3224 = vmatpush1.msra.mxu0 0.0
    %3225 = vmatprep.subr.mxu0 0.0
    %3226 = vmatpush1.msra.mxu0 0.0
    %3227 = vmatprep.mubr.f32.mxu0 0.0
    %3228 = vmatmul.mubr.f32.gmra.mrb[0].mxu0 %v3160
    %v3229 = vpop.f32.mrb[0].mxu0
    %v3230 = vadd.f32 0.0, %v3229
    %v3231 = vpop.f32.mrb[0].mxu0
    %3232 = vmatprep.mubr.f32.mxu0 0.0
    %3233 = vmatmul.mubr.f32.gmra.mrb[0].mxu0 %v3161
    %v3234 = vpop.f32.mrb[0].mxu0
    %v3235 = vadd.f32 0.0, %v3234
    %v3236 = vpop.f32.mrb[0].mxu0
    %3237 = vmatprep.mubr.f32.mxu0 0.0
    %3238 = vmatmul.mubr.f32.gmra.mrb[0].mxu0 %v3162
    %v3239 = vpop.f32.mrb[0].mxu0
    %v3240 = vadd.f32 0.0, %v3239
    %v3241 = vpop.f32.mrb[0].mxu0
    %3242 = vdwg.mxu0
    %v3243 = vadd.f32 %v3011, %v3230
    %v3244 = vadd.f32 %v3012, %v3235
    %v3245 = vadd.f32 %v3013, %v3240
    %v3246 = vlaneseq
    %v3247 = vshrl.u32 %v3246, 7
    %v3248 = vsub.s32 0, %v3247
    %v3249 = vrot.slane %v2056, %v3248
    %v3250 = vadd.f32 %v3243, %v3249
    %v3251 = vadd.f32 %v3244, %v3249
    %v3252 = vadd.f32 %v3245, %v3249
    %v3253 = vld [vmem:[%s2 + $0x21] sm:$0x1]
    %v3254 = vld [vmem:[%s2 + $0x22] sm:$0x1]
    %3255 = vadd.xlane.f32.xlu0 %v3250
    %v3256 = vpop.xlane.xlu0 %3255
    %3257 = vadd.xlane.f32.xlu0 %v3251
    %v3258 = vpop.xlane.xlu0 %3257
    %3259 = vadd.xlane.f32.xlu0 %v3252
    %v3260 = vpop.xlane.xlu0 %3259
    %v3261 = vmul.f32 %v3256, 0.0625
    %v3262 = vmul.f32 %v3258, 0.0625
    %v3263 = vmul.f32 %v3260, 0.0625
    %v3264 = vsub.f32 %v3250, %v3261
    %v3265 = vsub.f32 %v3251, %v3262
    %v3266 = vsub.f32 %v3252, %v3263
    %v3267 = vmul.f32 %v3264, %v2168
    %v3268 = vmul.f32 %v3265, %v2168
    %v3269 = vmul.f32 %v3266, %v2168
    %v3270 = vmul.f32 %v3267, %v3267
    %v3271 = vmul.f32 %v3268, %v3268
    %v3272 = vmul.f32 %v3269, %v3269
    %3273 = vadd.xlane.f32.xlu0 %v3270
    %v3274 = vpop.xlane.xlu0 %3273
    %3275 = vadd.xlane.f32.xlu0 %v3271
    %v3276 = vpop.xlane.xlu0 %3275
    %3277 = vadd.xlane.f32.xlu0 %v3272
    %v3278 = vpop.xlane.xlu0 %3277
    %v3279 = vmul.f32 %v3274, 0.0625
    %v3280 = vmul.f32 %v3276, 0.0625
    %v3281 = vmul.f32 %v3278, 0.0625
    %v3282 = vadd.f32 %v3279, 1e-06
    %v3283 = vadd.f32 %v3280, 1e-06
    %v3284 = vadd.f32 %v3281, 1e-06
    %v3285 = vrsqrt.pop %v3282
    %v3286 = vrsqrt.pop %v3283
    %v3287 = vrsqrt.pop %v3284
    %v3288 = vmul.f32 %v3267, %v3285
    %v3289 = vmul.f32 %v3268, %v3286
    %v3290 = vmul.f32 %v3269, %v3287
    %v3291 = vlaneseq
    %v3292 = vshrl.u32 %v3291, 7
    %v3293 = vsub.s32 0, %v3292
    %v3294 = vrot.slane %v3253, %v3293
    %v3295 = vmul.f32 %v3288, %v3294
    %v3296 = vmul.f32 %v3289, %v3294
    %v3297 = vmul.f32 %v3290, %v3294
    %v3298 = vlaneseq
    %v3299 = vshrl.u32 %v3298, 7
    %v3300 = vsub.s32 0, %v3299
    %v3301 = vrot.slane %v3254, %v3300
    %v3302 = vadd.f32 %v3295, %v3301
    %v3303 = vadd.f32 %v3296, %v3301
    %v3304 = vadd.f32 %v3297, %v3301
    %v3305 = vld [vmem:[%s1 + $0x580] sm:$0xff]
    %v3306 = vld [vmem:[%s1 + $0x588] sm:$0xff]
    %v3307 = vld [vmem:[%s1 + $0x590] sm:$0xff]
    %v3308 = vld [vmem:[%s1 + $0x598] sm:$0xff]
    %v3309 = vld [vmem:[%s1 + $0x5a0] sm:$0xff]
    %v3310 = vld [vmem:[%s1 + $0x5a8] sm:$0xff]
    %v3311 = vld [vmem:[%s1 + $0x5b0] sm:$0xff]
    %v3312 = vld [vmem:[%s1 + $0x5b8] sm:$0xff]
    %v3313 = vld [vmem:[%s1 + $0x5c0] sm:$0xff]
    %v3314 = vld [vmem:[%s1 + $0x5c8] sm:$0xff]
    %v3315 = vld [vmem:[%s1 + $0x5d0] sm:$0xff]
    %v3316 = vld [vmem:[%s1 + $0x5d8] sm:$0xff]
    %v3317 = vld [vmem:[%s1 + $0x5e0] sm:$0xff]
    %v3318 = vld [vmem:[%s1 + $0x5e8] sm:$0xff]
    %v3319 = vld [vmem:[%s1 + $0x5f0] sm:$0xff]
    %v3320 = vld [vmem:[%s1 + $0x5f8] sm:$0xff]
    %v3321 = vld [vmem:[%s2 + $0x23] sm:$0x1]
    %v3322 = vlaneseq
    %v3323 = vshrl.u32 %v3322, 7
    %v3324 = vsub.s32 0, %v3323
    %v3325 = vrot.slane %v3321, %v3324
    %3326 = vmatprep.subr.mxu0 0.0
    %3327 = vmatpush1.msra.mxu0 %v3305
    %3328 = vmatprep.subr.mxu0 0.0
    %3329 = vmatpush1.msra.mxu0 %v3306
    %3330 = vmatprep.subr.mxu0 0.0
    %3331 = vmatpush1.msra.mxu0 %v3307
    %3332 = vmatprep.subr.mxu0 0.0
    %3333 = vmatpush1.msra.mxu0 %v3308
    %3334 = vmatprep.subr.mxu0 0.0
    %3335 = vmatpush1.msra.mxu0 %v3309
    %3336 = vmatprep.subr.mxu0 0.0
    %3337 = vmatpush1.msra.mxu0 %v3310
    %3338 = vmatprep.subr.mxu0 0.0
    %3339 = vmatpush1.msra.mxu0 %v3311
    %3340 = vmatprep.subr.mxu0 0.0
    %3341 = vmatpush1.msra.mxu0 %v3312
    %3342 = vmatprep.subr.mxu0 0.0
    %3343 = vmatpush1.msra.mxu0 %v3313
    %3344 = vmatprep.subr.mxu0 0.0
    %3345 = vmatpush1.msra.mxu0 %v3314
    %3346 = vmatprep.subr.mxu0 0.0
    %3347 = vmatpush1.msra.mxu0 %v3315
    %3348 = vmatprep.subr.mxu0 0.0
    %3349 = vmatpush1.msra.mxu0 %v3316
    %3350 = vmatprep.subr.mxu0 0.0
    %3351 = vmatpush1.msra.mxu0 %v3317
    %3352 = vmatprep.subr.mxu0 0.0
    %3353 = vmatpush1.msra.mxu0 %v3318
    %3354 = vmatprep.subr.mxu0 0.0
    %3355 = vmatpush1.msra.mxu0 %v3319
    %3356 = vmatprep.subr.mxu0 0.0
    %3357 = vmatpush1.msra.mxu0 %v3320
    %3358 = vmatprep.subr.mxu0 0.0
    %3359 = vmatpush1.msra.mxu0 0.0
    %3360 = vmatprep.subr.mxu0 0.0
    %3361 = vmatpush1.msra.mxu0 0.0
    %3362 = vmatprep.subr.mxu0 0.0
    %3363 = vmatpush1.msra.mxu0 0.0
    %3364 = vmatprep.subr.mxu0 0.0
    %3365 = vmatpush1.msra.mxu0 0.0
    %3366 = vmatprep.subr.mxu0 0.0
    %3367 = vmatpush1.msra.mxu0 0.0
    %3368 = vmatprep.subr.mxu0 0.0
    %3369 = vmatpush1.msra.mxu0 0.0
    %3370 = vmatprep.subr.mxu0 0.0
    %3371 = vmatpush1.msra.mxu0 0.0
    %3372 = vmatprep.subr.mxu0 0.0
    %3373 = vmatpush1.msra.mxu0 0.0
    %3374 = vmatprep.subr.mxu0 0.0
    %3375 = vmatpush1.msra.mxu0 0.0
    %3376 = vmatprep.subr.mxu0 0.0
    %3377 = vmatpush1.msra.mxu0 0.0
    %3378 = vmatprep.subr.mxu0 0.0
    %3379 = vmatpush1.msra.mxu0 0.0
    %3380 = vmatprep.subr.mxu0 0.0
    %3381 = vmatpush1.msra.mxu0 0.0
    %3382 = vmatprep.subr.mxu0 0.0
    %3383 = vmatpush1.msra.mxu0 0.0
    %3384 = vmatprep.subr.mxu0 0.0
    %3385 = vmatpush1.msra.mxu0 0.0
    %3386 = vmatprep.subr.mxu0 0.0
    %3387 = vmatpush1.msra.mxu0 0.0
    %3388 = vmatprep.subr.mxu0 0.0
    %3389 = vmatpush1.msra.mxu0 0.0
    %3390 = vmatprep.mubr.f32.mxu0 0.0
    %3391 = vmatmul.mubr.f32.gmra.mrb[0].mxu0 %v3302
    %v3392 = vpop.f32.mrb[0].mxu0
    %v3393 = vadd.f32 %v3325, %v3392
    %v3394 = vpop.f32.mrb[0].mxu0
    %3395 = vmatprep.mubr.f32.mxu0 0.0
    %3396 = vmatmul.mubr.f32.gmra.mrb[0].mxu0 %v3303
    %v3397 = vpop.f32.mrb[0].mxu0
    %v3398 = vadd.f32 %v3325, %v3397
    %v3399 = vpop.f32.mrb[0].mxu0
    %3400 = vmatprep.mubr.f32.mxu0 0.0
    %3401 = vmatmul.mubr.f32.gmra.mrb[0].mxu0 %v3304
    %v3402 = vpop.f32.mrb[0].mxu0
    %v3403 = vadd.f32 %v3325, %v3402
    %v3404 = vpop.f32.mrb[0].mxu0
    %3405 = vdwg.mxu0
    %v3406 = vmul.f32 %v3393, 0.5
    %v3407 = vmul.f32 %v3398, 0.5
    %v3408 = vmul.f32 %v3403, 0.5
    %v3409 = vmul.f32 %v3393, 0.70710677
    %v3410 = vmul.f32 %v3398, 0.70710677
    %v3411 = vmul.f32 %v3403, 0.70710677
    %v3412 = verf.f32.pop %v3409
    %v3413 = verf.f32.pop %v3410
    %v3414 = verf.f32.pop %v3411
    %v3415 = vadd.f32 %v3412, 1.0
    %v3416 = vadd.f32 %v3413, 1.0
    %v3417 = vadd.f32 %v3414, 1.0
    %v3418 = vmul.f32 %v3406, %v3415
    %v3419 = vmul.f32 %v3407, %v3416
    %v3420 = vmul.f32 %v3408, %v3417
    %v3421 = vld [vmem:[%s1 + $0x600] sm:$0xff]
    %v3422 = vld [vmem:[%s1 + $0x608] sm:$0xff]
    %v3423 = vld [vmem:[%s1 + $0x610] sm:$0xff]
    %v3424 = vld [vmem:[%s1 + $0x618] sm:$0xff]
    %v3425 = vld [vmem:[%s1 + $0x620] sm:$0xff]
    %v3426 = vld [vmem:[%s1 + $0x628] sm:$0xff]
    %v3427 = vld [vmem:[%s1 + $0x630] sm:$0xff]
    %v3428 = vld [vmem:[%s1 + $0x638] sm:$0xff]
    %v3429 = vld [vmem:[%s1 + $0x640] sm:$0xff]
    %v3430 = vld [vmem:[%s1 + $0x648] sm:$0xff]
    %v3431 = vld [vmem:[%s1 + $0x650] sm:$0xff]
    %v3432 = vld [vmem:[%s1 + $0x658] sm:$0xff]
    %v3433 = vld [vmem:[%s1 + $0x660] sm:$0xff]
    %v3434 = vld [vmem:[%s1 + $0x668] sm:$0xff]
    %v3435 = vld [vmem:[%s1 + $0x670] sm:$0xff]
    %v3436 = vld [vmem:[%s1 + $0x678] sm:$0xff]
    %v3437 = vld [vmem:[%s2 + $0x24] sm:$0x1]
    %v3438 = vlaneseq
    %v3439 = vshrl.u32 %v3438, 7
    %v3440 = vsub.s32 0, %v3439
    %v3441 = vrot.slane %v3437, %v3440
    %3442 = vmatprep.subr.mxu0 0.0
    %3443 = vmatpush1.msra.mxu0 %v3421
    %3444 = vmatprep.subr.mxu0 0.0
    %3445 = vmatpush1.msra.mxu0 %v3422
    %3446 = vmatprep.subr.mxu0 0.0
    %3447 = vmatpush1.msra.mxu0 %v3423
    %3448 = vmatprep.subr.mxu0 0.0
    %3449 = vmatpush1.msra.mxu0 %v3424
    %3450 = vmatprep.subr.mxu0 0.0
    %3451 = vmatpush1.msra.mxu0 %v3425
    %3452 = vmatprep.subr.mxu0 0.0
    %3453 = vmatpush1.msra.mxu0 %v3426
    %3454 = vmatprep.subr.mxu0 0.0
    %3455 = vmatpush1.msra.mxu0 %v3427
    %3456 = vmatprep.subr.mxu0 0.0
    %3457 = vmatpush1.msra.mxu0 %v3428
    %3458 = vmatprep.subr.mxu0 0.0
    %3459 = vmatpush1.msra.mxu0 %v3429
    %3460 = vmatprep.subr.mxu0 0.0
    %3461 = vmatpush1.msra.mxu0 %v3430
    %3462 = vmatprep.subr.mxu0 0.0
    %3463 = vmatpush1.msra.mxu0 %v3431
    %3464 = vmatprep.subr.mxu0 0.0
    %3465 = vmatpush1.msra.mxu0 %v3432
    %3466 = vmatprep.subr.mxu0 0.0
    %3467 = vmatpush1.msra.mxu0 %v3433
    %3468 = vmatprep.subr.mxu0 0.0
    %3469 = vmatpush1.msra.mxu0 %v3434
    %3470 = vmatprep.subr.mxu0 0.0
    %3471 = vmatpush1.msra.mxu0 %v3435
    %3472 = vmatprep.subr.mxu0 0.0
    %3473 = vmatpush1.msra.mxu0 %v3436
    %3474 = vmatprep.subr.mxu0 0.0
    %3475 = vmatpush1.msra.mxu0 0.0
    %3476 = vmatprep.subr.mxu0 0.0
    %3477 = vmatpush1.msra.mxu0 0.0
    %3478 = vmatprep.subr.mxu0 0.0
    %3479 = vmatpush1.msra.mxu0 0.0
    %3480 = vmatprep.subr.mxu0 0.0
    %3481 = vmatpush1.msra.mxu0 0.0
    %3482 = vmatprep.subr.mxu0 0.0
    %3483 = vmatpush1.msra.mxu0 0.0
    %3484 = vmatprep.subr.mxu0 0.0
    %3485 = vmatpush1.msra.mxu0 0.0
    %3486 = vmatprep.subr.mxu0 0.0
    %3487 = vmatpush1.msra.mxu0 0.0
    %3488 = vmatprep.subr.mxu0 0.0
    %3489 = vmatpush1.msra.mxu0 0.0
    %3490 = vmatprep.subr.mxu0 0.0
    %3491 = vmatpush1.msra.mxu0 0.0
    %3492 = vmatprep.subr.mxu0 0.0
    %3493 = vmatpush1.msra.mxu0 0.0
    %3494 = vmatprep.subr.mxu0 0.0
    %3495 = vmatpush1.msra.mxu0 0.0
    %3496 = vmatprep.subr.mxu0 0.0
    %3497 = vmatpush1.msra.mxu0 0.0
    %3498 = vmatprep.subr.mxu0 0.0
    %3499 = vmatpush1.msra.mxu0 0.0
    %3500 = vmatprep.subr.mxu0 0.0
    %3501 = vmatpush1.msra.mxu0 0.0
    %3502 = vmatprep.subr.mxu0 0.0
    %3503 = vmatpush1.msra.mxu0 0.0
    %3504 = vmatprep.subr.mxu0 0.0
    %3505 = vmatpush1.msra.mxu0 0.0
    %3506 = vmatprep.mubr.f32.mxu0 0.0
    %3507 = vmatmul.mubr.f32.gmra.mrb[0].mxu0 %v3418
    %v3508 = vpop.f32.mrb[0].mxu0
    %v3509 = vadd.f32 %v3441, %v3508
    %v3510 = vpop.f32.mrb[0].mxu0
    %3511 = vmatprep.mubr.f32.mxu0 0.0
    %3512 = vmatmul.mubr.f32.gmra.mrb[0].mxu0 %v3419
    %v3513 = vpop.f32.mrb[0].mxu0
    %v3514 = vadd.f32 %v3441, %v3513
    %v3515 = vpop.f32.mrb[0].mxu0
    %3516 = vmatprep.mubr.f32.mxu0 0.0
    %3517 = vmatmul.mubr.f32.gmra.mrb[0].mxu0 %v3420
    %v3518 = vpop.f32.mrb[0].mxu0
    %v3519 = vadd.f32 %v3441, %v3518
    %v3520 = vpop.f32.mrb[0].mxu0
    %3521 = vdwg.mxu0
    %3522 = vst [vmem:[%s5] sm:$0xff] %v3509
    %3523 = vst [vmem:[%s5 + $0x8] sm:$0xff] %v3514
    %3524 = vst [vmem:[%s5 + $0x10] sm:$0xff] %v3519
    %v3525 = vld [vmem:[%s3 + $0x160] sm:$0xff]
    %v3526 = vld [vmem:[%s3 + $0x168] sm:$0xff]
    %v3527 = vld [vmem:[%s3 + $0x170] sm:$0xff]
    %v3528 = vsub.f32 %v3509, %v3525
    %v3529 = vsub.f32 %v3514, %v3526
    %v3530 = vsub.f32 %v3519, %v3527
    %v3531 = vmul.f32 %v3528, %v3528
    %v3532 = vmul.f32 %v3529, %v3529
    %v3533 = vmul.f32 %v3530, %v3530
    %3534 = vadd.xlane.f32.xlu0 %v3531
    %v3535 = vpop.xlane.xlu0 %3534
    %3536 = vadd.xlane.f32.xlu0 %v3532
    %v3537 = vpop.xlane.xlu0 %3536
    %3538 = vadd.xlane.f32.xlu0 %v3533
    %v3539 = vpop.xlane.xlu0 %3538
    %v3540 = vmul.f32 %v3535, 0.03125
    %v3541 = vmul.f32 %v3537, 0.03125
    %v3542 = vmul.f32 %v3539, 0.03125
    %v3543 = vld [vmem:[%s3 + $0x178] sm:$0xff]
    %v3544 = vld [vmem:[%s3 + $0x180] sm:$0xff]
    %v3545 = vld [vmem:[%s3 + $0x188] sm:$0xff]
    %v3546 = vmul.f32 %v3540, %v3543
    %v3547 = vmul.f32 %v3541, %v3544
    %v3548 = vmul.f32 %v3542, %v3545
    %vm3549 = vcmask 7168
    %v3550 = vsel %vm3549, %v3546, 0.0
    %v3551 = vsel %vm3549, %v3547, 0.0
    %v3552 = vadd.f32 %v3550, %v3551
    %v3553 = vsel %vm3549, %v3548, 0.0
    %v3554 = vadd.f32 %v3552, %v3553
    %v3555 = vrot.slane %v3554, 4
    %v3556 = vadd.f32 %v3554, %v3555
    %v3557 = vrot.slane %v3556, 2
    %v3558 = vadd.f32 %v3556, %v3557
    %v3559 = vrot.slane %v3558, 1
    %v3560 = vadd.f32 %v3558, %v3559
    %vm3561 = vcmask 0
    %3562 = vst.msk [vmem:[#allocation2] sm:$0x1] %vm3561, %v3560
    // Predicated region
    $region18: #{mae_forward.1} parent=1 // pred_check
      _
    $region19: #{mae_forward.1} parent=1 // pred_check_branch
      %3564 = sbr.rel (0) target = $region21
    $region20: #{mae_forward.1} parent=1 // pred_region
      %s3566 = ssub.s32 16, 16
      %3567 = vsyncadd [#allocation3], %s3566
      %s3569 = sshll.u32 [#allocation2], 4
      %s3570 = int_to_ptr.vmem [resolvable:$true] %s3569
      %3572 = dma.vmem_to_hbm [thread:$0]  %s3570, 16, %s4, [#allocation3]
    $region21: #{mae_forward.1} parent=1 // pred_fallthru
      _
    // Predicated region
    $region22: #{mae_forward.1} parent=1 // pred_check
      _
    $region23: #{mae_forward.1} parent=1 // pred_check_branch
      %3574 = sbr.rel (0) target = $region25
    $region24: #{mae_forward.1} parent=1 // pred_region
      _
    $region25: #{mae_forward.1} parent=1 // pred_fallthru
      _
    // Predicated region
    $region26: #{mae_forward.1} parent=1 // pred_check
      _
    $region27: #{mae_forward.1} parent=1 // pred_check_branch
      %3576 = sbr.rel (0) target = $region29
    $region28: #{mae_forward.1} parent=1 // pred_region
      %3577 = dma.done [#allocation3], 16
    $region29: #{mae_forward.1} parent=1 // pred_fallthru
      _
    // Predicated region
    $region30: #{mae_forward.1} parent=1 // pred_check
      _
    $region31: #{mae_forward.1} parent=1 // pred_check_branch
      %3579 = sbr.rel (0) target = $region33
    $region32: #{mae_forward.1} parent=1 // pred_region
      _
    $region33: #{mae_forward.1} parent=1 // pred_fallthru
      _
    %3580 = vsyncpa [#allocation3], 1

</llo_original>
